<compile_context>
chip_gen: v7x
topology: tpu7x:2x2x1
jax: 0.10.0
libtpu: 0.0.40
codegen_flags: <defaults>
</compile_context>

<pallas_src>
import math
import functools

import jax
import jax.numpy as jnp
from jax.experimental import pallas as pl
from jax.experimental.pallas import tpu as pltpu

_LN_EPS = 1e-5
_MASK_VALUE = -1e10      # matches torch masked_fill(-1e10); keep masking in f32


def _layernorm(x, g, b):
    mu = jnp.mean(x, axis=-1, keepdims=True)
    var = jnp.mean((x - mu) ** 2, axis=-1, keepdims=True)
    return (x - mu) * jax.lax.rsqrt(var + _LN_EPS) * g + b


# ---------------------------------------------------------------------------
# Kernel 1:  x1 = x + Proj(CausalMHSA(LN1(x)))           grid = (B,)
# ---------------------------------------------------------------------------
def attn_block_kernel(x_ref,
                      ln1g_ref, ln1b_ref,
                      wq_ref, bq_ref, wk_ref, bk_ref, wv_ref, bv_ref,
                      wp_ref, bp_ref,
                      out_ref, *, n_head):
    x = x_ref[0]                                  # (T, C) f32
    T, C = x.shape
    D = C // n_head
    scale = 1.0 / math.sqrt(D)
    bf16 = jnp.bfloat16

    # LayerNorm in f32 (VPU); bf16 operands into the MXU, f32 accumulation.
    h = _layernorm(x, ln1g_ref[0], ln1b_ref[0]).astype(bf16)

    q = jnp.dot(h, wq_ref[...], preferred_element_type=jnp.float32) + bq_ref[0]
    k = jnp.dot(h, wk_ref[...], preferred_element_type=jnp.float32) + bk_ref[0]
    v = jnp.dot(h, wv_ref[...], preferred_element_type=jnp.float32) + bv_ref[0]

    # Split heads -> (n_head, T, D) so the attention contractions are a single
    # head-batched dot_general each (instead of n_head tiny matmuls + concat).
    def split_heads(t):
        return jnp.stack(
            [t[:, i * D:(i + 1) * D] for i in range(n_head)], axis=0
        ).astype(bf16)

    q3 = split_heads(q)                           # (H, T, D) bf16
    k3 = split_heads(k)
    v3 = split_heads(v)

    # Scores: contract on D of both operands (no explicit k.T).
    att = jnp.einsum('hqd,hkd->hqk', q3, k3,
                     preferred_element_type=jnp.float32) * scale      # f32

    row = jax.lax.broadcasted_iota(jnp.int32, (T, T), 0)
    col = jax.lax.broadcasted_iota(jnp.int32, (T, T), 1)
    causal = (row >= col)[None, :, :]
    att = jnp.where(causal, att, jnp.float32(_MASK_VALUE))

    # Softmax in f32; reciprocal runs on the (otherwise idle) EUP slot.
    m = jnp.max(att, axis=-1, keepdims=True)
    e = jnp.exp(att - m)
    s = jnp.sum(e, axis=-1, keepdims=True)
    p = e * pl.reciprocal(s, approx=True)         # attn_drop = identity (eval)

    y = jnp.einsum('hqk,hkd->hqd', p.astype(bf16), v3,
                   preferred_element_type=jnp.float32)                # (H,T,D)

    # Merge heads back to a lane-dense (T, C) slab, then a single K=C proj.
    y = jnp.concatenate([y[i] for i in range(n_head)], axis=-1)       # (T, C)
    y = jnp.dot(y.astype(bf16), wp_ref[...],
                preferred_element_type=jnp.float32) + bp_ref[0]

    out_ref[0] = x + y                            # resid_drop = identity (eval)


# ---------------------------------------------------------------------------
# Kernel 2:  out = x1 + MLP(LN2(x1))        row-parallel, grid = (rows // tq,)
# ---------------------------------------------------------------------------
def mlp_block_kernel(x_ref,
                     ln2g_ref, ln2b_ref,
                     w1_ref, b1_ref, w2_ref, b2_ref,
                     out_ref):
    x = x_ref[...]                                # (tq, C) f32
    h = _layernorm(x, ln2g_ref[0], ln2b_ref[0]).astype(jnp.bfloat16)
    m = jnp.dot(h, w1_ref[...], preferred_element_type=jnp.float32) + b1_ref[0]
    m = jax.nn.gelu(m, approximate=False)         # torch nn.GELU() = exact erf
    m = jnp.dot(m.astype(jnp.bfloat16), w2_ref[...],
                preferred_element_type=jnp.float32) + b2_ref[0]
    out_ref[...] = x + m                          # Dropout = identity (eval)


# ---------------------------------------------------------------------------
# Wrapper
# ---------------------------------------------------------------------------
def _const_spec(shape):
    """BlockSpec for a grid-invariant (weight/bias) input."""
    nd = len(shape)
    return pl.BlockSpec(shape, lambda *args, _nd=nd: (0,) * _nd)


def transformer_block(x, params, *, n_head, row_tile=256):
    """x: (B, T, C) float32."""
    B, T, C = x.shape
    H = 4 * C
    bf16 = jnp.bfloat16

    # bf16 matmul operands at the call boundary; biases / LN params stay f32.
    wq = params["wq"].astype(bf16)
    wk = params["wk"].astype(bf16)
    wv = params["wv"].astype(bf16)
    wp = params["wp"].astype(bf16)
    w1 = params["w1"].astype(bf16)
    w2 = params["w2"].astype(bf16)

    # ---- attention + first residual -------------------------------------
    attn_in_specs = [
        pl.BlockSpec((1, T, C), lambda b: (b, 0, 0)),   # x
        _const_spec((1, C)), _const_spec((1, C)),       # ln1 gamma/beta
        _const_spec((C, C)), _const_spec((1, C)),       # Wq, bq
        _const_spec((C, C)), _const_spec((1, C)),       # Wk, bk
        _const_spec((C, C)), _const_spec((1, C)),       # Wv, bv
        _const_spec((C, C)), _const_spec((1, C)),       # Wproj, bproj
    ]
    x1 = pl.pallas_call(
        functools.partial(attn_block_kernel, n_head=n_head),
        out_shape=jax.ShapeDtypeStruct((B, T, C), jnp.float32),
        grid_spec=pltpu.PrefetchScalarGridSpec(
            num_scalar_prefetch=0,
            grid=(B,),
            in_specs=attn_in_specs,
            out_specs=pl.BlockSpec((1, T, C), lambda b: (b, 0, 0)),
        ),
        compiler_params=pltpu.CompilerParams(
            dimension_semantics=("parallel",)),
    )(x, params["ln1_g"], params["ln1_b"],
      wq, params["bq"], wk, params["bk"], wv, params["bv"],
      wp, params["bp"])

    # ---- MLP + second residual (row-parallel over flattened B*T rows) ----
    rows = B * T
    tq = math.gcd(rows, row_tile)
    if tq % 8 != 0:          # keep the sublane dim a multiple of 8 (or full)
        tq = rows
    x1_2d = x1.reshape(rows, C)

    mlp_in_specs = [
        pl.BlockSpec((tq, C), lambda r: (r, 0)),        # x1 rows
        _const_spec((1, C)), _const_spec((1, C)),       # ln2 gamma/beta
        _const_spec((C, H)), _const_spec((1, H)),       # W1, b1
        _const_spec((H, C)), _const_spec((1, C)),       # W2, b2
    ]
    out2d = pl.pallas_call(
        mlp_block_kernel,
        out_shape=jax.ShapeDtypeStruct((rows, C), jnp.float32),
        grid_spec=pltpu.PrefetchScalarGridSpec(
            num_scalar_prefetch=0,
            grid=(rows // tq,),
            in_specs=mlp_in_specs,
            out_specs=pl.BlockSpec((tq, C), lambda r: (r, 0)),
        ),
        compiler_params=pltpu.CompilerParams(
            dimension_semantics=("parallel",)),
    )(x1_2d, params["ln2_g"], params["ln2_b"],
      w1, params["b1"], w2, params["b2"])

    return out2d.reshape(B, T, C)


# ---------------------------------------------------------------------------
# Parameters + pure-JAX reference (f32) for a correctness check
# ---------------------------------------------------------------------------
def init_params(key, C):
    H = 4 * C
    keys = jax.random.split(key, 6)
    std = 0.02

    def lin(k, shape):
        return std * jax.random.normal(k, shape, jnp.float32)

    return {
        "ln1_g": jnp.ones((1, C), jnp.float32),
        "ln1_b": jnp.zeros((1, C), jnp.float32),
        "wq": lin(keys[0], (C, C)), "bq": jnp.zeros((1, C), jnp.float32),
        "wk": lin(keys[1], (C, C)), "bk": jnp.zeros((1, C), jnp.float32),
        "wv": lin(keys[2], (C, C)), "bv": jnp.zeros((1, C), jnp.float32),
        "wp": lin(keys[3], (C, C)), "bp": jnp.zeros((1, C), jnp.float32),
        "ln2_g": jnp.ones((1, C), jnp.float32),
        "ln2_b": jnp.zeros((1, C), jnp.float32),
        "w1": lin(keys[4], (C, H)), "b1": jnp.zeros((1, H), jnp.float32),
        "w2": lin(keys[5], (H, C)), "b2": jnp.zeros((1, C), jnp.float32),
    }


def block_reference(x, params, *, n_head):
    B, T, C = x.shape
    D = C // n_head

    def ln(v, g, b):
        mu = v.mean(-1, keepdims=True)
        var = ((v - mu) ** 2).mean(-1, keepdims=True)
        return (v - mu) * jax.lax.rsqrt(var + _LN_EPS) * g + b

    h = ln(x, params["ln1_g"][0], params["ln1_b"][0])
    q = h @ params["wq"] + params["bq"]
    k = h @ params["wk"] + params["bk"]
    v = h @ params["wv"] + params["bv"]
    q = q.reshape(B, T, n_head, D).transpose(0, 2, 1, 3)
    k = k.reshape(B, T, n_head, D).transpose(0, 2, 1, 3)
    v = v.reshape(B, T, n_head, D).transpose(0, 2, 1, 3)
    att = (q @ jnp.swapaxes(k, -1, -2)) * (1.0 / math.sqrt(D))
    mask = jnp.tril(jnp.ones((T, T), bool))
    att = jnp.where(mask, att, _MASK_VALUE)
    att = jax.nn.softmax(att, axis=-1)
    y = (att @ v).transpose(0, 2, 1, 3).reshape(B, T, C)
    y = y @ params["wp"] + params["bp"]
    x1 = x + y
    h2 = ln(x1, params["ln2_g"][0], params["ln2_b"][0])
    m = jax.nn.gelu(h2 @ params["w1"] + params["b1"], approximate=False)
    m = m @ params["w2"] + params["b2"]
    return x1 + m


if __name__ == "__main__":
    # Small but lane-dense demo config (C multiple of 128).
    B, T, C, n_head = 2, 128, 128, 4
    key = jax.random.PRNGKey(0)
    kx, kp = jax.random.split(key)
    x = jax.random.normal(kx, (B, T, C), jnp.float32)
    params = init_params(kp, C)

    out = transformer_block(x, params, n_head=n_head)
    jax.block_until_ready(out)
    assert out.shape == (B, T, C)

    ref = block_reference(x, params, n_head=n_head)
    err = float(jnp.max(jnp.abs(out - ref)))
    assert err < 5e-2, f"max abs error too large: {err}"
    print("KERNEL_OK")
</pallas_src>

<mosaic_0001>
module attributes {stable_mosaic.version = 11 : i64} {
  func.func @attn_block_kernel(%arg0: i32, %arg1: memref<1x128x128xf32, #tpu.memory_space<vmem>>, %arg2: memref<1x128xf32, #tpu.memory_space<vmem>>, %arg3: memref<1x128xf32, #tpu.memory_space<vmem>>, %arg4: memref<128x128xbf16, #tpu.memory_space<vmem>>, %arg5: memref<1x128xf32, #tpu.memory_space<vmem>>, %arg6: memref<128x128xbf16, #tpu.memory_space<vmem>>, %arg7: memref<1x128xf32, #tpu.memory_space<vmem>>, %arg8: memref<128x128xbf16, #tpu.memory_space<vmem>>, %arg9: memref<1x128xf32, #tpu.memory_space<vmem>>, %arg10: memref<128x128xbf16, #tpu.memory_space<vmem>>, %arg11: memref<1x128xf32, #tpu.memory_space<vmem>>, %arg12: memref<1x128x128xf32, #tpu.memory_space<vmem>>) attributes {dimension_semantics = [#tpu.dimension_semantics<parallel>], iteration_bounds = array<i64: 2>, scalar_prefetch = 0 : i64, scratch_operands = 0 : i64, tpu.core_type = #tpu.core_type<tc>, window_params = [{transform_indices = @transform_0, window_bounds = array<i64: 1, 128, 128>}, {pipeline_mode = #tpu.pipeline_mode<synchronous>, transform_indices = @transform_1, window_bounds = array<i64: 1, 128>}, {pipeline_mode = #tpu.pipeline_mode<synchronous>, transform_indices = @transform_2, window_bounds = array<i64: 1, 128>}, {pipeline_mode = #tpu.pipeline_mode<synchronous>, transform_indices = @transform_3, window_bounds = array<i64: 128, 128>}, {pipeline_mode = #tpu.pipeline_mode<synchronous>, transform_indices = @transform_4, window_bounds = array<i64: 1, 128>}, {pipeline_mode = #tpu.pipeline_mode<synchronous>, transform_indices = @transform_5, window_bounds = array<i64: 128, 128>}, {pipeline_mode = #tpu.pipeline_mode<synchronous>, transform_indices = @transform_6, window_bounds = array<i64: 1, 128>}, {pipeline_mode = #tpu.pipeline_mode<synchronous>, transform_indices = @transform_7, window_bounds = array<i64: 128, 128>}, {pipeline_mode = #tpu.pipeline_mode<synchronous>, transform_indices = @transform_8, window_bounds = array<i64: 1, 128>}, {pipeline_mode = #tpu.pipeline_mode<synchronous>, transform_indices = @transform_9, window_bounds = array<i64: 128, 128>}, {pipeline_mode = #tpu.pipeline_mode<synchronous>, transform_indices = @transform_10, window_bounds = array<i64: 1, 128>}, {transform_indices = @transform_11, window_bounds = array<i64: 1, 128, 128>}]} {
    %c0 = arith.constant 0 : index
    %c0_0 = arith.constant 0 : index
    %c0_1 = arith.constant 0 : index
    %0 = vector.load %arg1[%c0, %c0_0, %c0_1] : memref<1x128x128xf32, #tpu.memory_space<vmem>>, vector<1x128x128xf32>
    %1 = vector.shape_cast %0 : vector<1x128x128xf32> to vector<128x128xf32>
    %c0_2 = arith.constant 0 : index
    %c0_3 = arith.constant 0 : index
    %2 = vector.load %arg2[%c0_2, %c0_3] : memref<1x128xf32, #tpu.memory_space<vmem>>, vector<1x128xf32>
    %3 = vector.shape_cast %2 : vector<1x128xf32> to vector<128xf32>
    %c0_4 = arith.constant 0 : index
    %c0_5 = arith.constant 0 : index
    %4 = vector.load %arg3[%c0_4, %c0_5] : memref<1x128xf32, #tpu.memory_space<vmem>>, vector<1x128xf32>
    %5 = vector.shape_cast %4 : vector<1x128xf32> to vector<128xf32>
    %cst = arith.constant dense<0.000000e+00> : vector<128xf32>
    %6 = vector.multi_reduction <add>, %1, %cst [1] : vector<128x128xf32> to vector<128xf32>
    %7 = vector.shape_cast %6 : vector<128xf32> to vector<128x1xf32>
    %cst_6 = arith.constant 1.280000e+02 : f32
    %8 = vector.broadcast %cst_6 : f32 to vector<128x1xf32>
    %9 = arith.divf %7, %8 : vector<128x1xf32>
    %10 = vector.broadcast %9 : vector<128x1xf32> to vector<128x128xf32>
    %11 = arith.subf %1, %10 : vector<128x128xf32>
    %12 = arith.mulf %11, %11 : vector<128x128xf32>
    %cst_7 = arith.constant dense<0.000000e+00> : vector<128xf32>
    %13 = vector.multi_reduction <add>, %12, %cst_7 [1] : vector<128x128xf32> to vector<128xf32>
    %14 = vector.shape_cast %13 : vector<128xf32> to vector<128x1xf32>
    %cst_8 = arith.constant 1.280000e+02 : f32
    %15 = vector.broadcast %cst_8 : f32 to vector<128x1xf32>
    %16 = arith.divf %14, %15 : vector<128x1xf32>
    %17 = vector.broadcast %9 : vector<128x1xf32> to vector<128x128xf32>
    %18 = arith.subf %1, %17 : vector<128x128xf32>
    %cst_9 = arith.constant 9.99999974E-6 : f32
    %19 = vector.broadcast %cst_9 : f32 to vector<128x1xf32>
    %20 = arith.addf %16, %19 : vector<128x1xf32>
    %21 = math.rsqrt %20 : vector<128x1xf32>
    %22 = vector.broadcast %21 : vector<128x1xf32> to vector<128x128xf32>
    %23 = arith.mulf %18, %22 : vector<128x128xf32>
    %24 = vector.shape_cast %3 : vector<128xf32> to vector<1x128xf32>
    %25 = vector.broadcast %24 : vector<1x128xf32> to vector<128x128xf32>
    %26 = arith.mulf %23, %25 : vector<128x128xf32>
    %27 = vector.shape_cast %5 : vector<128xf32> to vector<1x128xf32>
    %28 = vector.broadcast %27 : vector<1x128xf32> to vector<128x128xf32>
    %29 = arith.addf %26, %28 : vector<128x128xf32>
    %30 = arith.truncf %29 : vector<128x128xf32> to vector<128x128xbf16>
    %c0_10 = arith.constant 0 : index
    %c0_11 = arith.constant 0 : index
    %31 = vector.load %arg4[%c0_10, %c0_11] : memref<128x128xbf16, #tpu.memory_space<vmem>>, vector<128x128xbf16>
    %cst_12 = arith.constant dense<0.000000e+00> : vector<128x128xf32>
    %32 = tpu.matmul %30, %31, %cst_12 {dimension_numbers = #tpu.dot_dimension_numbers<[1], [0], [0], [1], [0, 0, 1, 1], [], []>} : vector<128x128xbf16>, vector<128x128xbf16>, vector<128x128xf32> -> vector<128x128xf32>
    %c0_13 = arith.constant 0 : index
    %c0_14 = arith.constant 0 : index
    %33 = vector.load %arg5[%c0_13, %c0_14] : memref<1x128xf32, #tpu.memory_space<vmem>>, vector<1x128xf32>
    %34 = vector.shape_cast %33 : vector<1x128xf32> to vector<128xf32>
    %35 = vector.shape_cast %34 : vector<128xf32> to vector<1x128xf32>
    %36 = vector.broadcast %35 : vector<1x128xf32> to vector<128x128xf32>
    %37 = arith.addf %32, %36 : vector<128x128xf32>
    %c0_15 = arith.constant 0 : index
    %c0_16 = arith.constant 0 : index
    %38 = vector.load %arg6[%c0_15, %c0_16] : memref<128x128xbf16, #tpu.memory_space<vmem>>, vector<128x128xbf16>
    %cst_17 = arith.constant dense<0.000000e+00> : vector<128x128xf32>
    %39 = tpu.matmul %30, %38, %cst_17 {dimension_numbers = #tpu.dot_dimension_numbers<[1], [0], [0], [1], [0, 0, 1, 1], [], []>} : vector<128x128xbf16>, vector<128x128xbf16>, vector<128x128xf32> -> vector<128x128xf32>
    %c0_18 = arith.constant 0 : index
    %c0_19 = arith.constant 0 : index
    %40 = vector.load %arg7[%c0_18, %c0_19] : memref<1x128xf32, #tpu.memory_space<vmem>>, vector<1x128xf32>
    %41 = vector.shape_cast %40 : vector<1x128xf32> to vector<128xf32>
    %42 = vector.shape_cast %41 : vector<128xf32> to vector<1x128xf32>
    %43 = vector.broadcast %42 : vector<1x128xf32> to vector<128x128xf32>
    %44 = arith.addf %39, %43 : vector<128x128xf32>
    %c0_20 = arith.constant 0 : index
    %c0_21 = arith.constant 0 : index
    %45 = vector.load %arg8[%c0_20, %c0_21] : memref<128x128xbf16, #tpu.memory_space<vmem>>, vector<128x128xbf16>
    %cst_22 = arith.constant dense<0.000000e+00> : vector<128x128xf32>
    %46 = tpu.matmul %30, %45, %cst_22 {dimension_numbers = #tpu.dot_dimension_numbers<[1], [0], [0], [1], [0, 0, 1, 1], [], []>} : vector<128x128xbf16>, vector<128x128xbf16>, vector<128x128xf32> -> vector<128x128xf32>
    %c0_23 = arith.constant 0 : index
    %c0_24 = arith.constant 0 : index
    %47 = vector.load %arg9[%c0_23, %c0_24] : memref<1x128xf32, #tpu.memory_space<vmem>>, vector<1x128xf32>
    %48 = vector.shape_cast %47 : vector<1x128xf32> to vector<128xf32>
    %49 = vector.shape_cast %48 : vector<128xf32> to vector<1x128xf32>
    %50 = vector.broadcast %49 : vector<1x128xf32> to vector<128x128xf32>
    %51 = arith.addf %46, %50 : vector<128x128xf32>
    %52 = vector.extract_strided_slice %37 {offsets = [0, 0], sizes = [128, 32], strides = [1, 1]} : vector<128x128xf32> to vector<128x32xf32>
    %53 = vector.extract_strided_slice %37 {offsets = [0, 32], sizes = [128, 32], strides = [1, 1]} : vector<128x128xf32> to vector<128x32xf32>
    %54 = vector.extract_strided_slice %37 {offsets = [0, 64], sizes = [128, 32], strides = [1, 1]} : vector<128x128xf32> to vector<128x32xf32>
    %55 = vector.extract_strided_slice %37 {offsets = [0, 96], sizes = [128, 32], strides = [1, 1]} : vector<128x128xf32> to vector<128x32xf32>
    %56 = vector.shape_cast %52 : vector<128x32xf32> to vector<1x128x32xf32>
    %57 = vector.shape_cast %53 : vector<128x32xf32> to vector<1x128x32xf32>
    %58 = vector.shape_cast %54 : vector<128x32xf32> to vector<1x128x32xf32>
    %59 = vector.shape_cast %55 : vector<128x32xf32> to vector<1x128x32xf32>
    %60 = tpu.concatenate %56, %57, %58, %59 in 0 : vector<1x128x32xf32>, vector<1x128x32xf32>, vector<1x128x32xf32>, vector<1x128x32xf32> -> vector<4x128x32xf32>
    %61 = arith.truncf %60 : vector<4x128x32xf32> to vector<4x128x32xbf16>
    %62 = vector.extract_strided_slice %44 {offsets = [0, 0], sizes = [128, 32], strides = [1, 1]} : vector<128x128xf32> to vector<128x32xf32>
    %63 = vector.extract_strided_slice %44 {offsets = [0, 32], sizes = [128, 32], strides = [1, 1]} : vector<128x128xf32> to vector<128x32xf32>
    %64 = vector.extract_strided_slice %44 {offsets = [0, 64], sizes = [128, 32], strides = [1, 1]} : vector<128x128xf32> to vector<128x32xf32>
    %65 = vector.extract_strided_slice %44 {offsets = [0, 96], sizes = [128, 32], strides = [1, 1]} : vector<128x128xf32> to vector<128x32xf32>
    %66 = vector.shape_cast %62 : vector<128x32xf32> to vector<1x128x32xf32>
    %67 = vector.shape_cast %63 : vector<128x32xf32> to vector<1x128x32xf32>
    %68 = vector.shape_cast %64 : vector<128x32xf32> to vector<1x128x32xf32>
    %69 = vector.shape_cast %65 : vector<128x32xf32> to vector<1x128x32xf32>
    %70 = tpu.concatenate %66, %67, %68, %69 in 0 : vector<1x128x32xf32>, vector<1x128x32xf32>, vector<1x128x32xf32>, vector<1x128x32xf32> -> vector<4x128x32xf32>
    %71 = arith.truncf %70 : vector<4x128x32xf32> to vector<4x128x32xbf16>
    %72 = vector.extract_strided_slice %51 {offsets = [0, 0], sizes = [128, 32], strides = [1, 1]} : vector<128x128xf32> to vector<128x32xf32>
    %73 = vector.extract_strided_slice %51 {offsets = [0, 32], sizes = [128, 32], strides = [1, 1]} : vector<128x128xf32> to vector<128x32xf32>
    %74 = vector.extract_strided_slice %51 {offsets = [0, 64], sizes = [128, 32], strides = [1, 1]} : vector<128x128xf32> to vector<128x32xf32>
    %75 = vector.extract_strided_slice %51 {offsets = [0, 96], sizes = [128, 32], strides = [1, 1]} : vector<128x128xf32> to vector<128x32xf32>
    %76 = vector.shape_cast %72 : vector<128x32xf32> to vector<1x128x32xf32>
    %77 = vector.shape_cast %73 : vector<128x32xf32> to vector<1x128x32xf32>
    %78 = vector.shape_cast %74 : vector<128x32xf32> to vector<1x128x32xf32>
    %79 = vector.shape_cast %75 : vector<128x32xf32> to vector<1x128x32xf32>
    %80 = tpu.concatenate %76, %77, %78, %79 in 0 : vector<1x128x32xf32>, vector<1x128x32xf32>, vector<1x128x32xf32>, vector<1x128x32xf32> -> vector<4x128x32xf32>
    %81 = arith.truncf %80 : vector<4x128x32xf32> to vector<4x128x32xbf16>
    "tpu.trace_start"() <{level = 10 : i32, message = "hqd,hkd->hqk"}> : () -> ()
    %cst_25 = arith.constant dense<0.000000e+00> : vector<4x128x128xf32>
    %82 = tpu.matmul %61, %71, %cst_25 {dimension_numbers = #tpu.dot_dimension_numbers<[2], [2], [1], [1], [0, 0, 0, 1, 1, 1], [0], [0]>} : vector<4x128x32xbf16>, vector<4x128x32xbf16>, vector<4x128x128xf32> -> vector<4x128x128xf32>
    "tpu.trace_stop"() : () -> ()
    %cst_26 = arith.constant 0.176776692 : f32
    %83 = vector.broadcast %cst_26 : f32 to vector<4x128x128xf32>
    %84 = arith.mulf %82, %83 : vector<4x128x128xf32>
    %85 = tpu.iota {dimensions = array<i32: 0>} : vector<128x128xi32>
    %86 = tpu.iota {dimensions = array<i32: 1>} : vector<128x128xi32>
    %87 = arith.cmpi sge, %85, %86 : vector<128x128xi32>
    %88 = vector.shape_cast %87 : vector<128x128xi1> to vector<1x128x128xi1>
    %cst_27 = arith.constant -1.000000e+10 : f32
    %89 = vector.shape_cast %88 : vector<1x128x128xi1> to vector<1x128x128xi1>
    %90 = vector.broadcast %89 : vector<1x128x128xi1> to vector<4x128x128xi1>
    %91 = vector.broadcast %cst_27 : f32 to vector<4x128x128xf32>
    %92 = arith.select %90, %84, %91 : vector<4x128x128xi1>, vector<4x128x128xf32>
    %cst_28 = arith.constant dense<0xFF800000> : vector<4x128xf32>
    %93 = vector.multi_reduction <maximumf>, %92, %cst_28 [2] : vector<4x128x128xf32> to vector<4x128xf32>
    %94 = vector.shape_cast %93 : vector<4x128xf32> to vector<4x128x1xf32>
    %95 = vector.broadcast %94 : vector<4x128x1xf32> to vector<4x128x128xf32>
    %96 = arith.subf %92, %95 : vector<4x128x128xf32>
    %97 = math.exp %96 : vector<4x128x128xf32>
    %cst_29 = arith.constant dense<0.000000e+00> : vector<4x128xf32>
    %98 = vector.multi_reduction <add>, %97, %cst_29 [2] : vector<4x128x128xf32> to vector<4x128xf32>
    %99 = vector.shape_cast %98 : vector<4x128xf32> to vector<4x128x1xf32>
    %100 = tpu.reciprocal %99 {approx = true} : vector<4x128x1xf32> -> vector<4x128x1xf32>
    %101 = vector.broadcast %100 : vector<4x128x1xf32> to vector<4x128x128xf32>
    %102 = arith.mulf %97, %101 : vector<4x128x128xf32>
    %103 = arith.truncf %102 : vector<4x128x128xf32> to vector<4x128x128xbf16>
    "tpu.trace_start"() <{level = 10 : i32, message = "hqk,hkd->hqd"}> : () -> ()
    %cst_30 = arith.constant dense<0.000000e+00> : vector<4x128x32xf32>
    %104 = tpu.matmul %103, %81, %cst_30 {dimension_numbers = #tpu.dot_dimension_numbers<[2], [1], [1], [2], [0, 0, 0, 1, 1, 2], [0], [0]>} : vector<4x128x128xbf16>, vector<4x128x32xbf16>, vector<4x128x32xf32> -> vector<4x128x32xf32>
    "tpu.trace_stop"() : () -> ()
    %105 = vector.extract_strided_slice %104 {offsets = [0, 0, 0], sizes = [1, 128, 32], strides = [1, 1, 1]} : vector<4x128x32xf32> to vector<1x128x32xf32>
    %106 = vector.shape_cast %105 : vector<1x128x32xf32> to vector<128x32xf32>
    %107 = vector.extract_strided_slice %104 {offsets = [1, 0, 0], sizes = [1, 128, 32], strides = [1, 1, 1]} : vector<4x128x32xf32> to vector<1x128x32xf32>
    %108 = vector.shape_cast %107 : vector<1x128x32xf32> to vector<128x32xf32>
    %109 = vector.extract_strided_slice %104 {offsets = [2, 0, 0], sizes = [1, 128, 32], strides = [1, 1, 1]} : vector<4x128x32xf32> to vector<1x128x32xf32>
    %110 = vector.shape_cast %109 : vector<1x128x32xf32> to vector<128x32xf32>
    %111 = vector.extract_strided_slice %104 {offsets = [3, 0, 0], sizes = [1, 128, 32], strides = [1, 1, 1]} : vector<4x128x32xf32> to vector<1x128x32xf32>
    %112 = vector.shape_cast %111 : vector<1x128x32xf32> to vector<128x32xf32>
    %113 = tpu.concatenate %106, %108, %110, %112 in 1 : vector<128x32xf32>, vector<128x32xf32>, vector<128x32xf32>, vector<128x32xf32> -> vector<128x128xf32>
    %114 = arith.truncf %113 : vector<128x128xf32> to vector<128x128xbf16>
    %c0_31 = arith.constant 0 : index
    %c0_32 = arith.constant 0 : index
    %115 = vector.load %arg10[%c0_31, %c0_32] : memref<128x128xbf16, #tpu.memory_space<vmem>>, vector<128x128xbf16>
    %cst_33 = arith.constant dense<0.000000e+00> : vector<128x128xf32>
    %116 = tpu.matmul %114, %115, %cst_33 {dimension_numbers = #tpu.dot_dimension_numbers<[1], [0], [0], [1], [0, 0, 1, 1], [], []>} : vector<128x128xbf16>, vector<128x128xbf16>, vector<128x128xf32> -> vector<128x128xf32>
    %c0_34 = arith.constant 0 : index
    %c0_35 = arith.constant 0 : index
    %117 = vector.load %arg11[%c0_34, %c0_35] : memref<1x128xf32, #tpu.memory_space<vmem>>, vector<1x128xf32>
    %118 = vector.shape_cast %117 : vector<1x128xf32> to vector<128xf32>
    %119 = vector.shape_cast %118 : vector<128xf32> to vector<1x128xf32>
    %120 = vector.broadcast %119 : vector<1x128xf32> to vector<128x128xf32>
    %121 = arith.addf %116, %120 : vector<128x128xf32>
    %122 = arith.addf %1, %121 : vector<128x128xf32>
    %c0_36 = arith.constant 0 : index
    %c0_37 = arith.constant 0 : index
    %c0_38 = arith.constant 0 : index
    %123 = vector.load %arg12[%c0_36, %c0_37, %c0_38] : memref<1x128x128xf32, #tpu.memory_space<vmem>>, vector<1x128x128xf32>
    %124 = vector.shape_cast %123 : vector<1x128x128xf32> to vector<128x128xf32>
    %125 = vector.shape_cast %122 : vector<128x128xf32> to vector<1x128x128xf32>
    tpu.vector_store %arg12[%c0_36, %c0_37, %c0_38], %125 {strides = array<i32>} : memref<1x128x128xf32, #tpu.memory_space<vmem>>, vector<1x128x128xf32>,
    return
  }
  func.func @transform_0(%arg0: i32) -> (i32, i32, i32) {
    %c0_i32 = arith.constant 0 : i32
    %c0_i32_0 = arith.constant 0 : i32
    %c0_i32_1 = arith.constant 0 : i32
    return %arg0, %c0_i32, %c0_i32_0 : i32, i32, i32
  }
  func.func @transform_1(%arg0: i32) -> (i32, i32) {
    %c0_i32 = arith.constant 0 : i32
    %c0_i32_0 = arith.constant 0 : i32
    %c0_i32_1 = arith.constant 0 : i32
    return %c0_i32, %c0_i32_0 : i32, i32
  }
  func.func @transform_2(%arg0: i32) -> (i32, i32) {
    %c0_i32 = arith.constant 0 : i32
    %c0_i32_0 = arith.constant 0 : i32
    %c0_i32_1 = arith.constant 0 : i32
    return %c0_i32, %c0_i32_0 : i32, i32
  }
  func.func @transform_3(%arg0: i32) -> (i32, i32) {
    %c0_i32 = arith.constant 0 : i32
    %c0_i32_0 = arith.constant 0 : i32
    %c0_i32_1 = arith.constant 0 : i32
    return %c0_i32, %c0_i32_0 : i32, i32
  }
  func.func @transform_4(%arg0: i32) -> (i32, i32) {
    %c0_i32 = arith.constant 0 : i32
    %c0_i32_0 = arith.constant 0 : i32
    %c0_i32_1 = arith.constant 0 : i32
    return %c0_i32, %c0_i32_0 : i32, i32
  }
  func.func @transform_5(%arg0: i32) -> (i32, i32) {
    %c0_i32 = arith.constant 0 : i32
    %c0_i32_0 = arith.constant 0 : i32
    %c0_i32_1 = arith.constant 0 : i32
    return %c0_i32, %c0_i32_0 : i32, i32
  }
  func.func @transform_6(%arg0: i32) -> (i32, i32) {
    %c0_i32 = arith.constant 0 : i32
    %c0_i32_0 = arith.constant 0 : i32
    %c0_i32_1 = arith.constant 0 : i32
    return %c0_i32, %c0_i32_0 : i32, i32
  }
  func.func @transform_7(%arg0: i32) -> (i32, i32) {
    %c0_i32 = arith.constant 0 : i32
    %c0_i32_0 = arith.constant 0 : i32
    %c0_i32_1 = arith.constant 0 : i32
    return %c0_i32, %c0_i32_0 : i32, i32
  }
  func.func @transform_8(%arg0: i32) -> (i32, i32) {
    %c0_i32 = arith.constant 0 : i32
    %c0_i32_0 = arith.constant 0 : i32
    %c0_i32_1 = arith.constant 0 : i32
    return %c0_i32, %c0_i32_0 : i32, i32
  }
  func.func @transform_9(%arg0: i32) -> (i32, i32) {
    %c0_i32 = arith.constant 0 : i32
    %c0_i32_0 = arith.constant 0 : i32
    %c0_i32_1 = arith.constant 0 : i32
    return %c0_i32, %c0_i32_0 : i32, i32
  }
  func.func @transform_10(%arg0: i32) -> (i32, i32) {
    %c0_i32 = arith.constant 0 : i32
    %c0_i32_0 = arith.constant 0 : i32
    %c0_i32_1 = arith.constant 0 : i32
    return %c0_i32, %c0_i32_0 : i32, i32
  }
  func.func @transform_11(%arg0: i32) -> (i32, i32, i32) {
    %c0_i32 = arith.constant 0 : i32
    %c0_i32_0 = arith.constant 0 : i32
    %c0_i32_1 = arith.constant 0 : i32
    return %arg0, %c0_i32, %c0_i32_0 : i32, i32, i32
  }
}

</mosaic_0001>

<llo_original>
// kernel: tpu_custom_call.1
$region0: #{tpu_custom_call.1}
  #allocation0 [shape = 'u32[]', space=smem, size = 0x4, offset = 0x4, fixed_abs, tag = 'smem constant byte address 0x4 - core index']
  #allocation1 [shape = 'u32[144,128]{1,0:T(1,128)}', space=vmem, size = 0x12000, scoped, tag = 'internal scratch']
  %s0 = inlined_call_operand.hbm [shape: f32[2,128,128], index: 0, kind: input, shape index: {}]
  %s1 = inlined_call_operand.vmem [shape: f32[1,128], index: 1, kind: input, shape index: {}]
  %s2 = inlined_call_operand.vmem [shape: f32[1,128], index: 2, kind: input, shape index: {}]
  %s3 = inlined_call_operand.hbm [shape: bf16[128,128], index: 3, kind: input, shape index: {}]
  %s4 = inlined_call_operand.vmem [shape: f32[1,128], index: 4, kind: input, shape index: {}]
  %s5 = inlined_call_operand.hbm [shape: bf16[128,128], index: 5, kind: input, shape index: {}]
  %s6 = inlined_call_operand.vmem [shape: f32[1,128], index: 6, kind: input, shape index: {}]
  %s7 = inlined_call_operand.hbm [shape: bf16[128,128], index: 7, kind: input, shape index: {}]
  %s8 = inlined_call_operand.vmem [shape: f32[1,128], index: 8, kind: input, shape index: {}]
  %s9 = inlined_call_operand.hbm [shape: bf16[128,128], index: 9, kind: input, shape index: {}]
  %s10 = inlined_call_operand.vmem [shape: f32[1,128], index: 10, kind: input, shape index: {}]
  %s11 = inlined_call_operand.hbm [shape: f32[2,128,128], index: 11, kind: output, shape index: {}]
  %s12 = sld [smem:[#allocation0]]
  $region97: #{tpu_custom_call.1} parent=0
    _
  %s14 = ssub.s32 1, %s12
  %s15 = scalar_select 0, %s14, %s12
  $region1: #{tpu_custom_call.1} parent=0
    #allocation2 [shape = 'u8[131072]{0}', space=vmem, size = 0x20000, scoped, tag = 'input window, operand 0']
    #allocation3 [shape = 's32[2]{0}', space=sflag, size = 0x8, scoped, tag = 'scoped memory for tpu_custom_call.1']
    #allocation4 [shape = 's32[2]{0}', space=sflag, size = 0x8, scoped, tag = 'scoped memory for tpu_custom_call.1']
    #allocation5 [shape = 'u8[32768]{0}', space=vmem, size = 0x8000, scoped, tag = 'input window, operand 3, single buffered']
    #allocation6 [shape = 's32[1]{0}', space=sflag, size = 0x4, scoped, tag = 'scoped memory for tpu_custom_call.1']
    #allocation7 [shape = 'u8[32768]{0}', space=vmem, size = 0x8000, scoped, tag = 'input window, operand 5, single buffered']
    #allocation8 [shape = 'u8[32768]{0}', space=vmem, size = 0x8000, scoped, tag = 'input window, operand 7, single buffered']
    #allocation9 [shape = 's32[1]{0}', space=sflag, size = 0x4, scoped, tag = 'scoped memory for tpu_custom_call.1']
    #allocation10 [shape = 'u8[32768]{0}', space=vmem, size = 0x8000, scoped, tag = 'input window, operand 9, single buffered']
    #allocation11 [shape = 'u8[131072]{0}', space=vmem, size = 0x20000, scoped, tag = 'output window, operand 0']
    %16 = vsyncpa [#allocation3], 0
    %s17 = scalar_lea.sflag [#allocation3], 1
    %18 = vsyncpa %s17, 0
    %19 = vsyncpa [#allocation6], 0
    %20 = vsyncpa [#allocation9], 0
    %21 = vsyncpa [#allocation4], 0
    %s22 = scalar_lea.sflag [#allocation4], 1
    %23 = vsyncpa %s22, 0
    loop: start=0, step=1, limit=4
    $region2: #{tpu_custom_call.1} parent=1 // loop_pre_header
      _
    $region3: #{tpu_custom_call.1} parent=1 // loop_header
      %s25 = sphi 0, %s29
      %p26 = scmp.ge.s32.totalorder %s25, 4
      %s35 = sphi 0, %s37
      %s38 = sphi 0, %s35
      %s39 = sphi 0, %s38
      %s55 = sphi 0, %s39
      %s59 = sphi 0, %s59
      %s61 = sphi 0, %s59
      %s62 = sphi 0, %s61
      %s76 = sphi 0, %s62
      %s80 = sphi 0, %s80
      %s82 = sphi 0, %s80
      %s83 = sphi 0, %s82
      %s97 = sphi 0, %s83
      %s101 = sphi 0, %s101
      %s103 = sphi 0, %s101
      %s104 = sphi 0, %s103
      %s118 = sphi 0, %s104
      %s122 = sphi 0, %s122
      %s124 = sphi 0, %s122
      %s125 = sphi 0, %s124
      %s139 = sphi 0, %s125
      %s143 = sphi 0, %s143
      %s145 = sphi 0, %s143
      %s146 = sphi 0, %s145
      %s160 = sphi 0, %s146
      %s164 = sphi 0, %s164
      %s166 = sphi 0, %s164
      %s167 = sphi 0, %s166
      %s181 = sphi 0, %s167
      %s185 = sphi 0, %s185
      %s187 = sphi 0, %s185
      %s188 = sphi 0, %s187
      %s202 = sphi 0, %s188
      %s206 = sphi 0, %s206
      %s208 = sphi 0, %s206
      %s209 = sphi 0, %s208
      %s223 = sphi 0, %s209
      %s227 = sphi 0, %s227
      %s229 = sphi 0, %s227
      %s230 = sphi 0, %s229
      %s244 = sphi 0, %s230
      %s248 = sphi 0, %s248
      %s250 = sphi 0, %s248
      %s251 = sphi 0, %s250
      %s265 = sphi 0, %s251
      %s271 = sphi 0, %s273
      %s274 = sphi 0, %s271
      %s275 = sphi 0, %s274
      %s291 = sphi 0, %s275
    $region4: #{tpu_custom_call.1} parent=1 // loop_header_branch
      %28 = sbr.rel (%p26) target = $region8
    $region5: #{tpu_custom_call.1} parent=1 // loop_body
      %s30 = ssub.s32 %s25, 1
      %s31 = ssub.s32 %s25, 2
      %s32 = sadd.s32 %s25, 1
      %s33 = ssub.s32 %s25, %s32
      %p34 = scmp.eq.s32.totalorder %s33, 0
      %s36 = sadd.s32 %s35, 1
      %s37 = scalar_select %p34, %s35, %s36
      %p40 = pneg %p34
      %p41 = scmp.eq.s32.totalorder %s25, 1
      %p42 = por %p40, %p41
      %p43 = scmp.ne.s32.totalorder %s35, %s38
      %p44 = scmp.eq.s32.totalorder %s25, 0
      %p45 = por %p43, %p44
      %p46 = scmp.ne.s32.totalorder %s35, %s38
      %p47 = scmp.eq.s32.totalorder %s30, 1
      %p48 = por %p46, %p47
      %p49 = scmp.ne.s32.totalorder %s38, %s39
      %p50 = scmp.eq.s32.totalorder %s30, 0
      %p51 = por %p49, %p50
      %p52 = scmp.ne.s32.totalorder %s38, %s39
      %p53 = scmp.eq.s32.totalorder %s31, 1
      %p54 = por %p52, %p53
      %p56 = scmp.ne.s32.totalorder %s39, %s55
      %p57 = scmp.eq.s32.totalorder %s31, 0
      %p58 = por %p56, %p57
      %s60 = sadd.s32 %s59, 1
      %p63 = scmp.eq.s32.totalorder %s25, 1
      %p64 = scmp.ne.s32.totalorder %s59, %s61
      %p65 = scmp.eq.s32.totalorder %s25, 0
      %p66 = por %p64, %p65
      %p67 = scmp.ne.s32.totalorder %s59, %s61
      %p68 = scmp.eq.s32.totalorder %s30, 1
      %p69 = por %p67, %p68
      %p70 = scmp.ne.s32.totalorder %s61, %s62
      %p71 = scmp.eq.s32.totalorder %s30, 0
      %p72 = por %p70, %p71
      %p73 = scmp.ne.s32.totalorder %s61, %s62
      %p74 = scmp.eq.s32.totalorder %s31, 1
      %p75 = por %p73, %p74
      %p77 = scmp.ne.s32.totalorder %s62, %s76
      %p78 = scmp.eq.s32.totalorder %s31, 0
      %p79 = por %p77, %p78
      %s81 = sadd.s32 %s80, 1
      %p84 = scmp.eq.s32.totalorder %s25, 1
      %p85 = scmp.ne.s32.totalorder %s80, %s82
      %p86 = scmp.eq.s32.totalorder %s25, 0
      %p87 = por %p85, %p86
      %p88 = scmp.ne.s32.totalorder %s80, %s82
      %p89 = scmp.eq.s32.totalorder %s30, 1
      %p90 = por %p88, %p89
      %p91 = scmp.ne.s32.totalorder %s82, %s83
      %p92 = scmp.eq.s32.totalorder %s30, 0
      %p93 = por %p91, %p92
      %p94 = scmp.ne.s32.totalorder %s82, %s83
      %p95 = scmp.eq.s32.totalorder %s31, 1
      %p96 = por %p94, %p95
      %p98 = scmp.ne.s32.totalorder %s83, %s97
      %p99 = scmp.eq.s32.totalorder %s31, 0
      %p100 = por %p98, %p99
      %s102 = sadd.s32 %s101, 1
      %p105 = scmp.eq.s32.totalorder %s25, 1
      %p106 = scmp.ne.s32.totalorder %s101, %s103
      %p107 = scmp.eq.s32.totalorder %s25, 0
      %p108 = por %p106, %p107
      %p109 = scmp.ne.s32.totalorder %s101, %s103
      %p110 = scmp.eq.s32.totalorder %s30, 1
      %p111 = por %p109, %p110
      %p112 = scmp.ne.s32.totalorder %s103, %s104
      %p113 = scmp.eq.s32.totalorder %s30, 0
      %p114 = por %p112, %p113
      %p115 = scmp.ne.s32.totalorder %s103, %s104
      %p116 = scmp.eq.s32.totalorder %s31, 1
      %p117 = por %p115, %p116
      %p119 = scmp.ne.s32.totalorder %s104, %s118
      %p120 = scmp.eq.s32.totalorder %s31, 0
      %p121 = por %p119, %p120
      %s123 = sadd.s32 %s122, 1
      %p126 = scmp.eq.s32.totalorder %s25, 1
      %p127 = scmp.ne.s32.totalorder %s122, %s124
      %p128 = scmp.eq.s32.totalorder %s25, 0
      %p129 = por %p127, %p128
      %p130 = scmp.ne.s32.totalorder %s122, %s124
      %p131 = scmp.eq.s32.totalorder %s30, 1
      %p132 = por %p130, %p131
      %p133 = scmp.ne.s32.totalorder %s124, %s125
      %p134 = scmp.eq.s32.totalorder %s30, 0
      %p135 = por %p133, %p134
      %p136 = scmp.ne.s32.totalorder %s124, %s125
      %p137 = scmp.eq.s32.totalorder %s31, 1
      %p138 = por %p136, %p137
      %p140 = scmp.ne.s32.totalorder %s125, %s139
      %p141 = scmp.eq.s32.totalorder %s31, 0
      %p142 = por %p140, %p141
      %s144 = sadd.s32 %s143, 1
      %p147 = scmp.eq.s32.totalorder %s25, 1
      %p148 = scmp.ne.s32.totalorder %s143, %s145
      %p149 = scmp.eq.s32.totalorder %s25, 0
      %p150 = por %p148, %p149
      %p151 = scmp.ne.s32.totalorder %s143, %s145
      %p152 = scmp.eq.s32.totalorder %s30, 1
      %p153 = por %p151, %p152
      %p154 = scmp.ne.s32.totalorder %s145, %s146
      %p155 = scmp.eq.s32.totalorder %s30, 0
      %p156 = por %p154, %p155
      %p157 = scmp.ne.s32.totalorder %s145, %s146
      %p158 = scmp.eq.s32.totalorder %s31, 1
      %p159 = por %p157, %p158
      %p161 = scmp.ne.s32.totalorder %s146, %s160
      %p162 = scmp.eq.s32.totalorder %s31, 0
      %p163 = por %p161, %p162
      %s165 = sadd.s32 %s164, 1
      %p168 = scmp.eq.s32.totalorder %s25, 1
      %p169 = scmp.ne.s32.totalorder %s164, %s166
      %p170 = scmp.eq.s32.totalorder %s25, 0
      %p171 = por %p169, %p170
      %p172 = scmp.ne.s32.totalorder %s164, %s166
      %p173 = scmp.eq.s32.totalorder %s30, 1
      %p174 = por %p172, %p173
      %p175 = scmp.ne.s32.totalorder %s166, %s167
      %p176 = scmp.eq.s32.totalorder %s30, 0
      %p177 = por %p175, %p176
      %p178 = scmp.ne.s32.totalorder %s166, %s167
      %p179 = scmp.eq.s32.totalorder %s31, 1
      %p180 = por %p178, %p179
      %p182 = scmp.ne.s32.totalorder %s167, %s181
      %p183 = scmp.eq.s32.totalorder %s31, 0
      %p184 = por %p182, %p183
      %s186 = sadd.s32 %s185, 1
      %p189 = scmp.eq.s32.totalorder %s25, 1
      %p190 = scmp.ne.s32.totalorder %s185, %s187
      %p191 = scmp.eq.s32.totalorder %s25, 0
      %p192 = por %p190, %p191
      %p193 = scmp.ne.s32.totalorder %s185, %s187
      %p194 = scmp.eq.s32.totalorder %s30, 1
      %p195 = por %p193, %p194
      %p196 = scmp.ne.s32.totalorder %s187, %s188
      %p197 = scmp.eq.s32.totalorder %s30, 0
      %p198 = por %p196, %p197
      %p199 = scmp.ne.s32.totalorder %s187, %s188
      %p200 = scmp.eq.s32.totalorder %s31, 1
      %p201 = por %p199, %p200
      %p203 = scmp.ne.s32.totalorder %s188, %s202
      %p204 = scmp.eq.s32.totalorder %s31, 0
      %p205 = por %p203, %p204
      %s207 = sadd.s32 %s206, 1
      %p210 = scmp.eq.s32.totalorder %s25, 1
      %p211 = scmp.ne.s32.totalorder %s206, %s208
      %p212 = scmp.eq.s32.totalorder %s25, 0
      %p213 = por %p211, %p212
      %p214 = scmp.ne.s32.totalorder %s206, %s208
      %p215 = scmp.eq.s32.totalorder %s30, 1
      %p216 = por %p214, %p215
      %p217 = scmp.ne.s32.totalorder %s208, %s209
      %p218 = scmp.eq.s32.totalorder %s30, 0
      %p219 = por %p217, %p218
      %p220 = scmp.ne.s32.totalorder %s208, %s209
      %p221 = scmp.eq.s32.totalorder %s31, 1
      %p222 = por %p220, %p221
      %p224 = scmp.ne.s32.totalorder %s209, %s223
      %p225 = scmp.eq.s32.totalorder %s31, 0
      %p226 = por %p224, %p225
      %s228 = sadd.s32 %s227, 1
      %p231 = scmp.eq.s32.totalorder %s25, 1
      %p232 = scmp.ne.s32.totalorder %s227, %s229
      %p233 = scmp.eq.s32.totalorder %s25, 0
      %p234 = por %p232, %p233
      %p235 = scmp.ne.s32.totalorder %s227, %s229
      %p236 = scmp.eq.s32.totalorder %s30, 1
      %p237 = por %p235, %p236
      %p238 = scmp.ne.s32.totalorder %s229, %s230
      %p239 = scmp.eq.s32.totalorder %s30, 0
      %p240 = por %p238, %p239
      %p241 = scmp.ne.s32.totalorder %s229, %s230
      %p242 = scmp.eq.s32.totalorder %s31, 1
      %p243 = por %p241, %p242
      %p245 = scmp.ne.s32.totalorder %s230, %s244
      %p246 = scmp.eq.s32.totalorder %s31, 0
      %p247 = por %p245, %p246
      %s249 = sadd.s32 %s248, 1
      %p252 = scmp.eq.s32.totalorder %s25, 1
      %p253 = scmp.ne.s32.totalorder %s248, %s250
      %p254 = scmp.eq.s32.totalorder %s25, 0
      %p255 = por %p253, %p254
      %p256 = scmp.ne.s32.totalorder %s248, %s250
      %p257 = scmp.eq.s32.totalorder %s30, 1
      %p258 = por %p256, %p257
      %p259 = scmp.ne.s32.totalorder %s250, %s251
      %p260 = scmp.eq.s32.totalorder %s30, 0
      %p261 = por %p259, %p260
      %p262 = scmp.ne.s32.totalorder %s250, %s251
      %p263 = scmp.eq.s32.totalorder %s31, 1
      %p264 = por %p262, %p263
      %p266 = scmp.ne.s32.totalorder %s251, %s265
      %p267 = scmp.eq.s32.totalorder %s31, 0
      %p268 = por %p266, %p267
      %s269 = ssub.s32 %s25, %s32
      %p270 = scmp.eq.s32.totalorder %s269, 0
      %s272 = sadd.s32 %s271, 1
      %s273 = scalar_select %p270, %s271, %s272
      %p276 = pneg %p270
      %p277 = scmp.eq.s32.totalorder %s25, 1
      %p278 = por %p276, %p277
      %p279 = scmp.ne.s32.totalorder %s271, %s274
      %p280 = scmp.eq.s32.totalorder %s25, 0
      %p281 = por %p279, %p280
      %p282 = scmp.ne.s32.totalorder %s271, %s274
      %p283 = scmp.eq.s32.totalorder %s30, 1
      %p284 = por %p282, %p283
      %p285 = scmp.ne.s32.totalorder %s274, %s275
      %p286 = scmp.eq.s32.totalorder %s30, 0
      %p287 = por %p285, %p286
      %p288 = scmp.ne.s32.totalorder %s274, %s275
      %p289 = scmp.eq.s32.totalorder %s31, 1
      %p290 = por %p288, %p289
      %p292 = scmp.ne.s32.totalorder %s275, %s291
      %p293 = scmp.eq.s32.totalorder %s31, 0
      %p294 = por %p292, %p293
      %p295 = scmp.le.s32.totalorder 1, %s25
      %p296 = scmp.lt.s32.totalorder %s25, 3
      %p297 = pnand %p295, %p296
      %p298 = pneg %p297
      // Predicated region
      $region9: #{tpu_custom_call.1} parent=5 // pred_check
        _
      $region10: #{tpu_custom_call.1} parent=5 // pred_check_branch
        %300 = sbr.rel (%p297) target = $region12
      $region11: #{tpu_custom_call.1} parent=5 // pred_region
        %s301 = ssub.s32 %s25, 1
        // Predicated region
        $region13: #{tpu_custom_call.1} parent=11 // pred_check
          %p302 = pneg %p72
        $region14: #{tpu_custom_call.1} parent=11 // pred_check_branch
          %304 = sbr.rel (%p302) target = $region16
        $region15: #{tpu_custom_call.1} parent=11 // pred_region
          _
        $region16: #{tpu_custom_call.1} parent=11 // pred_fallthru
          _
        // Predicated region
        $region17: #{tpu_custom_call.1} parent=11 // pred_check
          %p305 = pneg %p93
        $region18: #{tpu_custom_call.1} parent=11 // pred_check_branch
          %307 = sbr.rel (%p305) target = $region20
        $region19: #{tpu_custom_call.1} parent=11 // pred_region
          _
        $region20: #{tpu_custom_call.1} parent=11 // pred_fallthru
          _
        // Predicated region
        $region21: #{tpu_custom_call.1} parent=11 // pred_check
          %p308 = pneg %p114
        $region22: #{tpu_custom_call.1} parent=11 // pred_check_branch
          %310 = sbr.rel (%p308) target = $region24
        $region23: #{tpu_custom_call.1} parent=11 // pred_region
          %s312 = ssub.s32 1024, 1024
          %313 = vsyncadd [#allocation6], %s312
          %s314 = sshll.u32 [#allocation5], 4
          %s315 = int_to_ptr.vmem [resolvable:$true] %s314
          %320 = dma.hbm_to_vmem [thread:$0]  %s3, 1024, %s315, [#allocation6], 64, 64, 4
        $region24: #{tpu_custom_call.1} parent=11 // pred_fallthru
          _
        // Predicated region
        $region25: #{tpu_custom_call.1} parent=11 // pred_check
          %p321 = pneg %p135
        $region26: #{tpu_custom_call.1} parent=11 // pred_check_branch
          %323 = sbr.rel (%p321) target = $region28
        $region27: #{tpu_custom_call.1} parent=11 // pred_region
          _
        $region28: #{tpu_custom_call.1} parent=11 // pred_fallthru
          _
        // Predicated region
        $region29: #{tpu_custom_call.1} parent=11 // pred_check
          %p324 = pneg %p156
        $region30: #{tpu_custom_call.1} parent=11 // pred_check_branch
          %326 = sbr.rel (%p324) target = $region32
        $region31: #{tpu_custom_call.1} parent=11 // pred_region
          %s328 = ssub.s32 1024, 1024
          %329 = vsyncadd [#allocation6], %s328
          %s330 = sshll.u32 [#allocation7], 4
          %s331 = int_to_ptr.vmem [resolvable:$true] %s330
          %336 = dma.hbm_to_vmem [thread:$0]  %s5, 1024, %s331, [#allocation6], 64, 64, 4
        $region32: #{tpu_custom_call.1} parent=11 // pred_fallthru
          _
        // Predicated region
        $region33: #{tpu_custom_call.1} parent=11 // pred_check
          %p337 = pneg %p177
        $region34: #{tpu_custom_call.1} parent=11 // pred_check_branch
          %339 = sbr.rel (%p337) target = $region36
        $region35: #{tpu_custom_call.1} parent=11 // pred_region
          _
        $region36: #{tpu_custom_call.1} parent=11 // pred_fallthru
          _
        // Predicated region
        $region37: #{tpu_custom_call.1} parent=11 // pred_check
          %p340 = pneg %p198
        $region38: #{tpu_custom_call.1} parent=11 // pred_check_branch
          %342 = sbr.rel (%p340) target = $region40
        $region39: #{tpu_custom_call.1} parent=11 // pred_region
          %s344 = ssub.s32 1024, 1024
          %345 = vsyncadd [#allocation9], %s344
          %s346 = sshll.u32 [#allocation8], 4
          %s347 = int_to_ptr.vmem [resolvable:$true] %s346
          %352 = dma.hbm_to_vmem [thread:$0]  %s7, 1024, %s347, [#allocation9], 64, 64, 4
        $region40: #{tpu_custom_call.1} parent=11 // pred_fallthru
          _
        // Predicated region
        $region41: #{tpu_custom_call.1} parent=11 // pred_check
          %p353 = pneg %p219
        $region42: #{tpu_custom_call.1} parent=11 // pred_check_branch
          %355 = sbr.rel (%p353) target = $region44
        $region43: #{tpu_custom_call.1} parent=11 // pred_region
          _
        $region44: #{tpu_custom_call.1} parent=11 // pred_fallthru
          _
        // Predicated region
        $region45: #{tpu_custom_call.1} parent=11 // pred_check
          %p356 = pneg %p240
        $region46: #{tpu_custom_call.1} parent=11 // pred_check_branch
          %358 = sbr.rel (%p356) target = $region48
        $region47: #{tpu_custom_call.1} parent=11 // pred_region
          %s360 = ssub.s32 1024, 1024
          %361 = vsyncadd [#allocation9], %s360
          %s362 = sshll.u32 [#allocation10], 4
          %s363 = int_to_ptr.vmem [resolvable:$true] %s362
          %368 = dma.hbm_to_vmem [thread:$0]  %s9, 1024, %s363, [#allocation9], 64, 64, 4
        $region48: #{tpu_custom_call.1} parent=11 // pred_fallthru
          _
        // Predicated region
        $region49: #{tpu_custom_call.1} parent=11 // pred_check
          %p369 = pneg %p261
        $region50: #{tpu_custom_call.1} parent=11 // pred_check_branch
          %371 = sbr.rel (%p369) target = $region52
        $region51: #{tpu_custom_call.1} parent=11 // pred_region
          _
        $region52: #{tpu_custom_call.1} parent=11 // pred_fallthru
          _
      $region12: #{tpu_custom_call.1} parent=5 // pred_fallthru
        _
      %p372 = scmp.lt.s32.totalorder %s25, 2
      // Predicated region
      $region53: #{tpu_custom_call.1} parent=5 // pred_check
        %p373 = pneg %p372
      $region54: #{tpu_custom_call.1} parent=5 // pred_check_branch
        %375 = sbr.rel (%p373) target = $region56
      $region55: #{tpu_custom_call.1} parent=5 // pred_region
        // Predicated region
        $region57: #{tpu_custom_call.1} parent=55 // pred_check
          %p376 = pneg %p45
        $region58: #{tpu_custom_call.1} parent=55 // pred_check_branch
          %378 = sbr.rel (%p376) target = $region60
        $region59: #{tpu_custom_call.1} parent=55 // pred_region
          %s379 = sand.u32 %s35, 1
          %s380 = scalar_lea.sflag [#allocation3], %s379
          %s381 = sand.u32 %s35, 1
          %s382 = smul.addr %s381, 128
          %s383 = scalar_lea.vmem [#allocation2], %s382
          %s385 = ssub.s32 2048, 2048
          %386 = vsyncadd %s380, %s385
          %s387 = smul.addr %s25, 16
          %s388 = smul.addr %s387, 128
          %s389 = scalar_lea.hbm %s0, %s388
          %s390 = sshll.u32 %s383, 4
          %s391 = int_to_ptr.vmem [resolvable:$true] %s390
          %396 = dma.hbm_to_vmem [thread:$0]  %s389, 2048, %s391, %s380, 128, 128, 8
        $region60: #{tpu_custom_call.1} parent=55 // pred_fallthru
          _
      $region56: #{tpu_custom_call.1} parent=5 // pred_fallthru
        _
      %p397 = scmp.le.s32.totalorder 1, %s25
      %p398 = scmp.lt.s32.totalorder %s25, 3
      %p399 = pnand %p397, %p398
      %p400 = pneg %p399
      // Predicated region
      $region61: #{tpu_custom_call.1} parent=5 // pred_check
        _
      $region62: #{tpu_custom_call.1} parent=5 // pred_check_branch
        %402 = sbr.rel (%p399) target = $region64
      $region63: #{tpu_custom_call.1} parent=5 // pred_region
        %s403 = ssub.s32 %s25, 1
        %s404 = sand.u32 %s38, 1
        %s405 = scalar_lea.sflag [#allocation3], %s404
        %s406 = sand.u32 %s38, 1
        %s407 = smul.addr %s406, 128
        %s408 = scalar_lea.vmem [#allocation2], %s407
        // Predicated region
        $region65: #{tpu_custom_call.1} parent=63 // pred_check
          %p409 = pneg %p51
        $region66: #{tpu_custom_call.1} parent=63 // pred_check_branch
          %411 = sbr.rel (%p409) target = $region68
        $region67: #{tpu_custom_call.1} parent=63 // pred_region
          %412 = dma.done %s405, 2048
        $region68: #{tpu_custom_call.1} parent=63 // pred_fallthru
          _
        // Predicated region
        $region69: #{tpu_custom_call.1} parent=63 // pred_check
          %p413 = pneg %p114
        $region70: #{tpu_custom_call.1} parent=63 // pred_check_branch
          %415 = sbr.rel (%p413) target = $region72
        $region71: #{tpu_custom_call.1} parent=63 // pred_region
          %416 = dma.done [#allocation6], 1024
        $region72: #{tpu_custom_call.1} parent=63 // pred_fallthru
          _
        // Predicated region
        $region73: #{tpu_custom_call.1} parent=63 // pred_check
          %p417 = pneg %p156
        $region74: #{tpu_custom_call.1} parent=63 // pred_check_branch
          %419 = sbr.rel (%p417) target = $region76
        $region75: #{tpu_custom_call.1} parent=63 // pred_region
          %420 = dma.done [#allocation6], 1024
        $region76: #{tpu_custom_call.1} parent=63 // pred_fallthru
          _
        // Predicated region
        $region77: #{tpu_custom_call.1} parent=63 // pred_check
          %p421 = pneg %p198
        $region78: #{tpu_custom_call.1} parent=63 // pred_check_branch
          %423 = sbr.rel (%p421) target = $region80
        $region79: #{tpu_custom_call.1} parent=63 // pred_region
          %424 = dma.done [#allocation9], 1024
        $region80: #{tpu_custom_call.1} parent=63 // pred_fallthru
          _
        // Predicated region
        $region81: #{tpu_custom_call.1} parent=63 // pred_check
          %p425 = pneg %p240
        $region82: #{tpu_custom_call.1} parent=63 // pred_check_branch
          %427 = sbr.rel (%p425) target = $region84
        $region83: #{tpu_custom_call.1} parent=63 // pred_region
          %428 = dma.done [#allocation9], 1024
        $region84: #{tpu_custom_call.1} parent=63 // pred_fallthru
          _
        %s429 = sand.u32 %s38, 1
        %s430 = scalar_lea.sflag [#allocation3], %s429
        %s431 = sand.u32 %s38, 1
        %s432 = smul.addr %s431, 128
        %s433 = scalar_lea.vmem [#allocation2], %s432
        %p434 = pneg %p51
        %p435 = pneg %p48
        %p436 = pneg %p72
        %p437 = pneg %p69
        %p438 = pneg %p93
        %p439 = pneg %p90
        %p440 = pneg %p114
        %p441 = pneg %p111
        %p442 = pneg %p135
        %p443 = pneg %p132
        %p444 = pneg %p156
        %p445 = pneg %p153
        %p446 = pneg %p177
        %p447 = pneg %p174
        %p448 = pneg %p198
        %p449 = pneg %p195
        %p450 = pneg %p219
        %p451 = pneg %p216
        %p452 = pneg %p240
        %p453 = pneg %p237
        %p454 = pneg %p261
        %p455 = pneg %p258
        %p456 = pneg %p287
        %p457 = pneg %p284
        %s458 = sand.u32 %s274, 1
        %s459 = scalar_lea.sflag [#allocation4], %s458
        %s460 = sand.u32 %s274, 1
        %s461 = smul.addr %s460, 128
        %s462 = scalar_lea.vmem [#allocation11], %s461
        %v464 = vld [vmem:[%s408] sm:$0xff]
        %v465 = vld [vmem:[%s408 + $0x8] sm:$0xff]
        %v466 = vld [vmem:[%s408 + $0x10] sm:$0xff]
        %v467 = vld [vmem:[%s408 + $0x18] sm:$0xff]
        %v468 = vld [vmem:[%s408 + $0x20] sm:$0xff]
        %v469 = vld [vmem:[%s408 + $0x28] sm:$0xff]
        %v470 = vld [vmem:[%s408 + $0x30] sm:$0xff]
        %v471 = vld [vmem:[%s408 + $0x38] sm:$0xff]
        %v472 = vld [vmem:[%s408 + $0x40] sm:$0xff]
        %v473 = vld [vmem:[%s408 + $0x48] sm:$0xff]
        %v474 = vld [vmem:[%s408 + $0x50] sm:$0xff]
        %v475 = vld [vmem:[%s408 + $0x58] sm:$0xff]
        %v476 = vld [vmem:[%s408 + $0x60] sm:$0xff]
        %v477 = vld [vmem:[%s408 + $0x68] sm:$0xff]
        %v478 = vld [vmem:[%s408 + $0x70] sm:$0xff]
        %v479 = vld [vmem:[%s408 + $0x78] sm:$0xff]
        %v480 = vld [vmem:[%s1] sm:$0x1]
        %v481 = vld [vmem:[%s2] sm:$0x1]
        %482 = vadd.xlane.f32.xlu0 %v464
        %v483 = vpop.xlane.xlu0 %482
        %484 = vadd.xlane.f32.xlu0 %v465
        %v485 = vpop.xlane.xlu0 %484
        %486 = vadd.xlane.f32.xlu0 %v466
        %v487 = vpop.xlane.xlu0 %486
        %488 = vadd.xlane.f32.xlu0 %v467
        %v489 = vpop.xlane.xlu0 %488
        %490 = vadd.xlane.f32.xlu0 %v468
        %v491 = vpop.xlane.xlu0 %490
        %492 = vadd.xlane.f32.xlu0 %v469
        %v493 = vpop.xlane.xlu0 %492
        %494 = vadd.xlane.f32.xlu0 %v470
        %v495 = vpop.xlane.xlu0 %494
        %496 = vadd.xlane.f32.xlu0 %v471
        %v497 = vpop.xlane.xlu0 %496
        %498 = vadd.xlane.f32.xlu0 %v472
        %v499 = vpop.xlane.xlu0 %498
        %500 = vadd.xlane.f32.xlu0 %v473
        %v501 = vpop.xlane.xlu0 %500
        %502 = vadd.xlane.f32.xlu0 %v474
        %v503 = vpop.xlane.xlu0 %502
        %504 = vadd.xlane.f32.xlu0 %v475
        %v505 = vpop.xlane.xlu0 %504
        %506 = vadd.xlane.f32.xlu0 %v476
        %v507 = vpop.xlane.xlu0 %506
        %508 = vadd.xlane.f32.xlu0 %v477
        %v509 = vpop.xlane.xlu0 %508
        %510 = vadd.xlane.f32.xlu0 %v478
        %v511 = vpop.xlane.xlu0 %510
        %512 = vadd.xlane.f32.xlu0 %v479
        %v513 = vpop.xlane.xlu0 %512
        %v514 = vrcp.pop 128.0
        %v515 = vmul.f32 %v483, %v514
        %v516 = vmul.f32 %v485, %v514
        %v517 = vmul.f32 %v487, %v514
        %v518 = vmul.f32 %v489, %v514
        %v519 = vmul.f32 %v491, %v514
        %v520 = vmul.f32 %v493, %v514
        %v521 = vmul.f32 %v495, %v514
        %v522 = vmul.f32 %v497, %v514
        %v523 = vmul.f32 %v499, %v514
        %v524 = vmul.f32 %v501, %v514
        %v525 = vmul.f32 %v503, %v514
        %v526 = vmul.f32 %v505, %v514
        %v527 = vmul.f32 %v507, %v514
        %v528 = vmul.f32 %v509, %v514
        %v529 = vmul.f32 %v511, %v514
        %v530 = vmul.f32 %v513, %v514
        %v531 = vsub.f32 %v464, %v515
        %v532 = vsub.f32 %v465, %v516
        %v533 = vsub.f32 %v466, %v517
        %v534 = vsub.f32 %v467, %v518
        %v535 = vsub.f32 %v468, %v519
        %v536 = vsub.f32 %v469, %v520
        %v537 = vsub.f32 %v470, %v521
        %v538 = vsub.f32 %v471, %v522
        %v539 = vsub.f32 %v472, %v523
        %v540 = vsub.f32 %v473, %v524
        %v541 = vsub.f32 %v474, %v525
        %v542 = vsub.f32 %v475, %v526
        %v543 = vsub.f32 %v476, %v527
        %v544 = vsub.f32 %v477, %v528
        %v545 = vsub.f32 %v478, %v529
        %v546 = vsub.f32 %v479, %v530
        %v547 = vmul.f32 %v531, %v531
        %v548 = vmul.f32 %v532, %v532
        %v549 = vmul.f32 %v533, %v533
        %v550 = vmul.f32 %v534, %v534
        %v551 = vmul.f32 %v535, %v535
        %v552 = vmul.f32 %v536, %v536
        %v553 = vmul.f32 %v537, %v537
        %v554 = vmul.f32 %v538, %v538
        %v555 = vmul.f32 %v539, %v539
        %v556 = vmul.f32 %v540, %v540
        %v557 = vmul.f32 %v541, %v541
        %v558 = vmul.f32 %v542, %v542
        %v559 = vmul.f32 %v543, %v543
        %v560 = vmul.f32 %v544, %v544
        %v561 = vmul.f32 %v545, %v545
        %v562 = vmul.f32 %v546, %v546
        %563 = vadd.xlane.f32.xlu0 %v547
        %v564 = vpop.xlane.xlu0 %563
        %565 = vadd.xlane.f32.xlu0 %v548
        %v566 = vpop.xlane.xlu0 %565
        %567 = vadd.xlane.f32.xlu0 %v549
        %v568 = vpop.xlane.xlu0 %567
        %569 = vadd.xlane.f32.xlu0 %v550
        %v570 = vpop.xlane.xlu0 %569
        %571 = vadd.xlane.f32.xlu0 %v551
        %v572 = vpop.xlane.xlu0 %571
        %573 = vadd.xlane.f32.xlu0 %v552
        %v574 = vpop.xlane.xlu0 %573
        %575 = vadd.xlane.f32.xlu0 %v553
        %v576 = vpop.xlane.xlu0 %575
        %577 = vadd.xlane.f32.xlu0 %v554
        %v578 = vpop.xlane.xlu0 %577
        %579 = vadd.xlane.f32.xlu0 %v555
        %v580 = vpop.xlane.xlu0 %579
        %581 = vadd.xlane.f32.xlu0 %v556
        %v582 = vpop.xlane.xlu0 %581
        %583 = vadd.xlane.f32.xlu0 %v557
        %v584 = vpop.xlane.xlu0 %583
        %585 = vadd.xlane.f32.xlu0 %v558
        %v586 = vpop.xlane.xlu0 %585
        %587 = vadd.xlane.f32.xlu0 %v559
        %v588 = vpop.xlane.xlu0 %587
        %589 = vadd.xlane.f32.xlu0 %v560
        %v590 = vpop.xlane.xlu0 %589
        %591 = vadd.xlane.f32.xlu0 %v561
        %v592 = vpop.xlane.xlu0 %591
        %593 = vadd.xlane.f32.xlu0 %v562
        %v594 = vpop.xlane.xlu0 %593
        %v595 = vmul.f32 %v564, %v514
        %v596 = vmul.f32 %v566, %v514
        %v597 = vmul.f32 %v568, %v514
        %v598 = vmul.f32 %v570, %v514
        %v599 = vmul.f32 %v572, %v514
        %v600 = vmul.f32 %v574, %v514
        %v601 = vmul.f32 %v576, %v514
        %v602 = vmul.f32 %v578, %v514
        %v603 = vmul.f32 %v580, %v514
        %v604 = vmul.f32 %v582, %v514
        %v605 = vmul.f32 %v584, %v514
        %v606 = vmul.f32 %v586, %v514
        %v607 = vmul.f32 %v588, %v514
        %v608 = vmul.f32 %v590, %v514
        %v609 = vmul.f32 %v592, %v514
        %v610 = vmul.f32 %v594, %v514
        %v611 = vadd.f32 %v595, 1e-05
        %v612 = vadd.f32 %v596, 1e-05
        %v613 = vadd.f32 %v597, 1e-05
        %v614 = vadd.f32 %v598, 1e-05
        %v615 = vadd.f32 %v599, 1e-05
        %v616 = vadd.f32 %v600, 1e-05
        %v617 = vadd.f32 %v601, 1e-05
        %v618 = vadd.f32 %v602, 1e-05
        %v619 = vadd.f32 %v603, 1e-05
        %v620 = vadd.f32 %v604, 1e-05
        %v621 = vadd.f32 %v605, 1e-05
        %v622 = vadd.f32 %v606, 1e-05
        %v623 = vadd.f32 %v607, 1e-05
        %v624 = vadd.f32 %v608, 1e-05
        %v625 = vadd.f32 %v609, 1e-05
        %v626 = vadd.f32 %v610, 1e-05
        %v627 = vrsqrt.pop %v611
        %v628 = vrsqrt.pop %v612
        %v629 = vrsqrt.pop %v613
        %v630 = vrsqrt.pop %v614
        %v631 = vrsqrt.pop %v615
        %v632 = vrsqrt.pop %v616
        %v633 = vrsqrt.pop %v617
        %v634 = vrsqrt.pop %v618
        %v635 = vrsqrt.pop %v619
        %v636 = vrsqrt.pop %v620
        %v637 = vrsqrt.pop %v621
        %v638 = vrsqrt.pop %v622
        %v639 = vrsqrt.pop %v623
        %v640 = vrsqrt.pop %v624
        %v641 = vrsqrt.pop %v625
        %v642 = vrsqrt.pop %v626
        %v643 = vmul.f32 %v531, %v627
        %v644 = vmul.f32 %v532, %v628
        %v645 = vmul.f32 %v533, %v629
        %v646 = vmul.f32 %v534, %v630
        %v647 = vmul.f32 %v535, %v631
        %v648 = vmul.f32 %v536, %v632
        %v649 = vmul.f32 %v537, %v633
        %v650 = vmul.f32 %v538, %v634
        %v651 = vmul.f32 %v539, %v635
        %v652 = vmul.f32 %v540, %v636
        %v653 = vmul.f32 %v541, %v637
        %v654 = vmul.f32 %v542, %v638
        %v655 = vmul.f32 %v543, %v639
        %v656 = vmul.f32 %v544, %v640
        %v657 = vmul.f32 %v545, %v641
        %v658 = vmul.f32 %v546, %v642
        %v660 = vlaneseq
        %v661 = vshrl.u32 %v660, 7
        %v662 = vsub.s32 0, %v661
        %v663 = vrot.slane %v480, %v662
        %v665 = vmul.f32 %v643, %v663
        %v666 = vmul.f32 %v644, %v663
        %v667 = vmul.f32 %v645, %v663
        %v668 = vmul.f32 %v646, %v663
        %v669 = vmul.f32 %v647, %v663
        %v670 = vmul.f32 %v648, %v663
        %v671 = vmul.f32 %v649, %v663
        %v672 = vmul.f32 %v650, %v663
        %v673 = vmul.f32 %v651, %v663
        %v674 = vmul.f32 %v652, %v663
        %v675 = vmul.f32 %v653, %v663
        %v676 = vmul.f32 %v654, %v663
        %v677 = vmul.f32 %v655, %v663
        %v678 = vmul.f32 %v656, %v663
        %v679 = vmul.f32 %v657, %v663
        %v680 = vmul.f32 %v658, %v663
        %v682 = vlaneseq
        %v683 = vshrl.u32 %v682, 7
        %v684 = vsub.s32 0, %v683
        %v685 = vrot.slane %v481, %v684
        %v687 = vadd.f32 %v665, %v685
        %v688 = vadd.f32 %v666, %v685
        %v689 = vadd.f32 %v667, %v685
        %v690 = vadd.f32 %v668, %v685
        %v691 = vadd.f32 %v669, %v685
        %v692 = vadd.f32 %v670, %v685
        %v693 = vadd.f32 %v671, %v685
        %v694 = vadd.f32 %v672, %v685
        %v695 = vadd.f32 %v673, %v685
        %v696 = vadd.f32 %v674, %v685
        %v697 = vadd.f32 %v675, %v685
        %v698 = vadd.f32 %v676, %v685
        %v699 = vadd.f32 %v677, %v685
        %v700 = vadd.f32 %v678, %v685
        %v701 = vadd.f32 %v679, %v685
        %v702 = vadd.f32 %v680, %v685
        %v703 = vpack.c.bf16 %v688, %v687
        %v704 = vpack.c.bf16 %v690, %v689
        %v705 = vpack.c.bf16 %v692, %v691
        %v706 = vpack.c.bf16 %v694, %v693
        %v707 = vpack.c.bf16 %v696, %v695
        %v708 = vpack.c.bf16 %v698, %v697
        %v709 = vpack.c.bf16 %v700, %v699
        %v710 = vpack.c.bf16 %v702, %v701
        %v711 = vld [vmem:[#allocation5] sm:$0xf]
        %v712 = vld [vmem:[#allocation5 + $0x4] sm:$0xf]
        %v713 = vld [vmem:[#allocation5 + $0x8] sm:$0xf]
        %v714 = vld [vmem:[#allocation5 + $0xc] sm:$0xf]
        %v715 = vld [vmem:[#allocation5 + $0x10] sm:$0xf]
        %v716 = vld [vmem:[#allocation5 + $0x14] sm:$0xf]
        %v717 = vld [vmem:[#allocation5 + $0x18] sm:$0xf]
        %v718 = vld [vmem:[#allocation5 + $0x1c] sm:$0xf]
        %v719 = vld [vmem:[#allocation5 + $0x20] sm:$0xf]
        %v720 = vld [vmem:[#allocation5 + $0x24] sm:$0xf]
        %v721 = vld [vmem:[#allocation5 + $0x28] sm:$0xf]
        %v722 = vld [vmem:[#allocation5 + $0x2c] sm:$0xf]
        %v723 = vld [vmem:[#allocation5 + $0x30] sm:$0xf]
        %v724 = vld [vmem:[#allocation5 + $0x34] sm:$0xf]
        %v725 = vld [vmem:[#allocation5 + $0x38] sm:$0xf]
        %v726 = vld [vmem:[#allocation5 + $0x3c] sm:$0xf]
        %v727 = vld [vmem:[%s4] sm:$0x1]
        %v729 = vlaneseq
        %v730 = vshrl.u32 %v729, 7
        %v731 = vsub.s32 0, %v730
        %v732 = vrot.slane %v727, %v731
        %v750 = vunpack.c.l.b16 %v711
        %v751 = vunpack.c.l.b16 %v712
        %v752 = vunpack.c.l.b16 %v713
        %v753 = vunpack.c.l.b16 %v714
        %v754 = vunpack.c.l.b16 %v715
        %v755 = vunpack.c.l.b16 %v716
        %v756 = vunpack.c.l.b16 %v717
        %v757 = vunpack.c.l.b16 %v718
        %v758 = vunpack.c.l.b16 %v719
        %v759 = vunpack.c.l.b16 %v720
        %v760 = vunpack.c.l.b16 %v721
        %v761 = vunpack.c.l.b16 %v722
        %v762 = vunpack.c.l.b16 %v723
        %v763 = vunpack.c.l.b16 %v724
        %v764 = vunpack.c.l.b16 %v725
        %v765 = vunpack.c.l.b16 %v726
        %v766 = vpack.c.b16 %v751, %v750
        %v767 = vpack.c.b16 %v753, %v752
        %v768 = vpack.c.b16 %v755, %v754
        %v769 = vpack.c.b16 %v757, %v756
        %v770 = vpack.c.b16 %v759, %v758
        %v771 = vpack.c.b16 %v761, %v760
        %v772 = vpack.c.b16 %v763, %v762
        %v773 = vpack.c.b16 %v765, %v764
        %782 = vmatprep.subr.bf16.mxu0 0
        %783 = vmatpush1.bf16.msra.mxu0 %v766
        %784 = vmatprep.subr.bf16.mxu0 0
        %785 = vmatpush1.bf16.msra.mxu0 %v767
        %786 = vmatprep.subr.bf16.mxu0 0
        %787 = vmatpush1.bf16.msra.mxu0 %v768
        %788 = vmatprep.subr.bf16.mxu0 0
        %789 = vmatpush1.bf16.msra.mxu0 %v769
        %790 = vmatprep.subr.bf16.mxu0 0
        %791 = vmatpush1.bf16.msra.mxu0 %v770
        %792 = vmatprep.subr.bf16.mxu0 0
        %793 = vmatpush1.bf16.msra.mxu0 %v771
        %794 = vmatprep.subr.bf16.mxu0 0
        %795 = vmatpush1.bf16.msra.mxu0 %v772
        %796 = vmatprep.subr.bf16.mxu0 0
        %797 = vmatpush1.bf16.msra.mxu0 %v773
        %798 = vmatprep.subr.bf16.mxu0 0
        %799 = vmatpush1.bf16.msra.mxu0 0
        %800 = vmatprep.subr.bf16.mxu0 0
        %801 = vmatpush1.bf16.msra.mxu0 0
        %802 = vmatprep.subr.bf16.mxu0 0
        %803 = vmatpush1.bf16.msra.mxu0 0
        %804 = vmatprep.subr.bf16.mxu0 0
        %805 = vmatpush1.bf16.msra.mxu0 0
        %806 = vmatprep.subr.bf16.mxu0 0
        %807 = vmatpush1.bf16.msra.mxu0 0
        %808 = vmatprep.subr.bf16.mxu0 0
        %809 = vmatpush1.bf16.msra.mxu0 0
        %810 = vmatprep.subr.bf16.mxu0 0
        %811 = vmatpush1.bf16.msra.mxu0 0
        %812 = vmatprep.subr.bf16.mxu0 0
        %813 = vmatpush1.bf16.msra.mxu0 0
        %814 = vmatprep.mubr.bf16.mxu0 0
        %815 = vmatmul.mubr.bf16.gmra.mrb[0].mxu0 %v703
        %v816 = vpop.f32.mrb[0].mxu0
        %v817 = vadd.f32 %v732, %v816
        %v818 = vpop.f32.mrb[0].mxu0
        %v819 = vpop.f32.mrb[0].mxu0
        %v820 = vadd.f32 %v732, %v819
        %v821 = vpop.f32.mrb[0].mxu0
        %822 = vmatprep.mubr.bf16.mxu0 0
        %823 = vmatmul.mubr.bf16.gmra.mrb[0].mxu0 %v704
        %v824 = vpop.f32.mrb[0].mxu0
        %v825 = vadd.f32 %v732, %v824
        %v826 = vpop.f32.mrb[0].mxu0
        %v827 = vpop.f32.mrb[0].mxu0
        %v828 = vadd.f32 %v732, %v827
        %v829 = vpop.f32.mrb[0].mxu0
        %830 = vmatprep.mubr.bf16.mxu0 0
        %831 = vmatmul.mubr.bf16.gmra.mrb[0].mxu0 %v705
        %v832 = vpop.f32.mrb[0].mxu0
        %v833 = vadd.f32 %v732, %v832
        %v834 = vpop.f32.mrb[0].mxu0
        %v835 = vpop.f32.mrb[0].mxu0
        %v836 = vadd.f32 %v732, %v835
        %v837 = vpop.f32.mrb[0].mxu0
        %838 = vmatprep.mubr.bf16.mxu0 0
        %839 = vmatmul.mubr.bf16.gmra.mrb[0].mxu0 %v706
        %v840 = vpop.f32.mrb[0].mxu0
        %v841 = vadd.f32 %v732, %v840
        %v842 = vpop.f32.mrb[0].mxu0
        %v843 = vpop.f32.mrb[0].mxu0
        %v844 = vadd.f32 %v732, %v843
        %v845 = vpop.f32.mrb[0].mxu0
        %846 = vmatprep.mubr.bf16.mxu0 0
        %847 = vmatmul.mubr.bf16.gmra.mrb[0].mxu0 %v707
        %v848 = vpop.f32.mrb[0].mxu0
        %v849 = vadd.f32 %v732, %v848
        %v850 = vpop.f32.mrb[0].mxu0
        %v851 = vpop.f32.mrb[0].mxu0
        %v852 = vadd.f32 %v732, %v851
        %v853 = vpop.f32.mrb[0].mxu0
        %854 = vmatprep.mubr.bf16.mxu0 0
        %855 = vmatmul.mubr.bf16.gmra.mrb[0].mxu0 %v708
        %v856 = vpop.f32.mrb[0].mxu0
        %v857 = vadd.f32 %v732, %v856
        %v858 = vpop.f32.mrb[0].mxu0
        %v859 = vpop.f32.mrb[0].mxu0
        %v860 = vadd.f32 %v732, %v859
        %v861 = vpop.f32.mrb[0].mxu0
        %862 = vmatprep.mubr.bf16.mxu0 0
        %863 = vmatmul.mubr.bf16.gmra.mrb[0].mxu0 %v709
        %v864 = vpop.f32.mrb[0].mxu0
        %v865 = vadd.f32 %v732, %v864
        %v866 = vpop.f32.mrb[0].mxu0
        %v867 = vpop.f32.mrb[0].mxu0
        %v868 = vadd.f32 %v732, %v867
        %v869 = vpop.f32.mrb[0].mxu0
        %870 = vmatprep.mubr.bf16.mxu0 0
        %871 = vmatmul.mubr.bf16.gmra.mrb[0].mxu0 %v710
        %v872 = vpop.f32.mrb[0].mxu0
        %v873 = vadd.f32 %v732, %v872
        %v874 = vpop.f32.mrb[0].mxu0
        %v875 = vpop.f32.mrb[0].mxu0
        %v876 = vadd.f32 %v732, %v875
        %v877 = vpop.f32.mrb[0].mxu0
        %878 = vdwg.mxu0
        %v879 = vld [vmem:[#allocation7] sm:$0xf]
        %v880 = vld [vmem:[#allocation7 + $0x4] sm:$0xf]
        %v881 = vld [vmem:[#allocation7 + $0x8] sm:$0xf]
        %v882 = vld [vmem:[#allocation7 + $0xc] sm:$0xf]
        %v883 = vld [vmem:[#allocation7 + $0x10] sm:$0xf]
        %v884 = vld [vmem:[#allocation7 + $0x14] sm:$0xf]
        %v885 = vld [vmem:[#allocation7 + $0x18] sm:$0xf]
        %v886 = vld [vmem:[#allocation7 + $0x1c] sm:$0xf]
        %v887 = vld [vmem:[#allocation7 + $0x20] sm:$0xf]
        %v888 = vld [vmem:[#allocation7 + $0x24] sm:$0xf]
        %v889 = vld [vmem:[#allocation7 + $0x28] sm:$0xf]
        %v890 = vld [vmem:[#allocation7 + $0x2c] sm:$0xf]
        %v891 = vld [vmem:[#allocation7 + $0x30] sm:$0xf]
        %v892 = vld [vmem:[#allocation7 + $0x34] sm:$0xf]
        %v893 = vld [vmem:[#allocation7 + $0x38] sm:$0xf]
        %v894 = vld [vmem:[#allocation7 + $0x3c] sm:$0xf]
        %v895 = vld [vmem:[%s6] sm:$0x1]
        %v897 = vlaneseq
        %v898 = vshrl.u32 %v897, 7
        %v899 = vsub.s32 0, %v898
        %v900 = vrot.slane %v895, %v899
        %v918 = vunpack.c.l.b16 %v879
        %v919 = vunpack.c.l.b16 %v880
        %v920 = vunpack.c.l.b16 %v881
        %v921 = vunpack.c.l.b16 %v882
        %v922 = vunpack.c.l.b16 %v883
        %v923 = vunpack.c.l.b16 %v884
        %v924 = vunpack.c.l.b16 %v885
        %v925 = vunpack.c.l.b16 %v886
        %v926 = vunpack.c.l.b16 %v887
        %v927 = vunpack.c.l.b16 %v888
        %v928 = vunpack.c.l.b16 %v889
        %v929 = vunpack.c.l.b16 %v890
        %v930 = vunpack.c.l.b16 %v891
        %v931 = vunpack.c.l.b16 %v892
        %v932 = vunpack.c.l.b16 %v893
        %v933 = vunpack.c.l.b16 %v894
        %v934 = vpack.c.b16 %v919, %v918
        %v935 = vpack.c.b16 %v921, %v920
        %v936 = vpack.c.b16 %v923, %v922
        %v937 = vpack.c.b16 %v925, %v924
        %v938 = vpack.c.b16 %v927, %v926
        %v939 = vpack.c.b16 %v929, %v928
        %v940 = vpack.c.b16 %v931, %v930
        %v941 = vpack.c.b16 %v933, %v932
        %950 = vmatprep.subr.bf16.mxu0 0
        %951 = vmatpush1.bf16.msra.mxu0 %v934
        %952 = vmatprep.subr.bf16.mxu0 0
        %953 = vmatpush1.bf16.msra.mxu0 %v935
        %954 = vmatprep.subr.bf16.mxu0 0
        %955 = vmatpush1.bf16.msra.mxu0 %v936
        %956 = vmatprep.subr.bf16.mxu0 0
        %957 = vmatpush1.bf16.msra.mxu0 %v937
        %958 = vmatprep.subr.bf16.mxu0 0
        %959 = vmatpush1.bf16.msra.mxu0 %v938
        %960 = vmatprep.subr.bf16.mxu0 0
        %961 = vmatpush1.bf16.msra.mxu0 %v939
        %962 = vmatprep.subr.bf16.mxu0 0
        %963 = vmatpush1.bf16.msra.mxu0 %v940
        %964 = vmatprep.subr.bf16.mxu0 0
        %965 = vmatpush1.bf16.msra.mxu0 %v941
        %966 = vmatprep.subr.bf16.mxu0 0
        %967 = vmatpush1.bf16.msra.mxu0 0
        %968 = vmatprep.subr.bf16.mxu0 0
        %969 = vmatpush1.bf16.msra.mxu0 0
        %970 = vmatprep.subr.bf16.mxu0 0
        %971 = vmatpush1.bf16.msra.mxu0 0
        %972 = vmatprep.subr.bf16.mxu0 0
        %973 = vmatpush1.bf16.msra.mxu0 0
        %974 = vmatprep.subr.bf16.mxu0 0
        %975 = vmatpush1.bf16.msra.mxu0 0
        %976 = vmatprep.subr.bf16.mxu0 0
        %977 = vmatpush1.bf16.msra.mxu0 0
        %978 = vmatprep.subr.bf16.mxu0 0
        %979 = vmatpush1.bf16.msra.mxu0 0
        %980 = vmatprep.subr.bf16.mxu0 0
        %981 = vmatpush1.bf16.msra.mxu0 0
        %982 = vmatprep.mubr.bf16.mxu0 0
        %983 = vmatmul.mubr.bf16.gmra.mrb[0].mxu0 %v703
        %v984 = vpop.f32.mrb[0].mxu0
        %v985 = vadd.f32 %v900, %v984
        %v986 = vpop.f32.mrb[0].mxu0
        %v987 = vpop.f32.mrb[0].mxu0
        %v988 = vadd.f32 %v900, %v987
        %v989 = vpop.f32.mrb[0].mxu0
        %990 = vmatprep.mubr.bf16.mxu0 0
        %991 = vmatmul.mubr.bf16.gmra.mrb[0].mxu0 %v704
        %v992 = vpop.f32.mrb[0].mxu0
        %v993 = vadd.f32 %v900, %v992
        %v994 = vpop.f32.mrb[0].mxu0
        %v995 = vpop.f32.mrb[0].mxu0
        %v996 = vadd.f32 %v900, %v995
        %v997 = vpop.f32.mrb[0].mxu0
        %998 = vmatprep.mubr.bf16.mxu0 0
        %999 = vmatmul.mubr.bf16.gmra.mrb[0].mxu0 %v705
        %v1000 = vpop.f32.mrb[0].mxu0
        %v1001 = vadd.f32 %v900, %v1000
        %v1002 = vpop.f32.mrb[0].mxu0
        %v1003 = vpop.f32.mrb[0].mxu0
        %v1004 = vadd.f32 %v900, %v1003
        %v1005 = vpop.f32.mrb[0].mxu0
        %1006 = vmatprep.mubr.bf16.mxu0 0
        %1007 = vmatmul.mubr.bf16.gmra.mrb[0].mxu0 %v706
        %v1008 = vpop.f32.mrb[0].mxu0
        %v1009 = vadd.f32 %v900, %v1008
        %v1010 = vpop.f32.mrb[0].mxu0
        %v1011 = vpop.f32.mrb[0].mxu0
        %v1012 = vadd.f32 %v900, %v1011
        %v1013 = vpop.f32.mrb[0].mxu0
        %1014 = vmatprep.mubr.bf16.mxu0 0
        %1015 = vmatmul.mubr.bf16.gmra.mrb[0].mxu0 %v707
        %v1016 = vpop.f32.mrb[0].mxu0
        %v1017 = vadd.f32 %v900, %v1016
        %v1018 = vpop.f32.mrb[0].mxu0
        %v1019 = vpop.f32.mrb[0].mxu0
        %v1020 = vadd.f32 %v900, %v1019
        %v1021 = vpop.f32.mrb[0].mxu0
        %1022 = vmatprep.mubr.bf16.mxu0 0
        %1023 = vmatmul.mubr.bf16.gmra.mrb[0].mxu0 %v708
        %v1024 = vpop.f32.mrb[0].mxu0
        %v1025 = vadd.f32 %v900, %v1024
        %v1026 = vpop.f32.mrb[0].mxu0
        %v1027 = vpop.f32.mrb[0].mxu0
        %v1028 = vadd.f32 %v900, %v1027
        %v1029 = vpop.f32.mrb[0].mxu0
        %1030 = vmatprep.mubr.bf16.mxu0 0
        %1031 = vmatmul.mubr.bf16.gmra.mrb[0].mxu0 %v709
        %v1032 = vpop.f32.mrb[0].mxu0
        %v1033 = vadd.f32 %v900, %v1032
        %v1034 = vpop.f32.mrb[0].mxu0
        %v1035 = vpop.f32.mrb[0].mxu0
        %v1036 = vadd.f32 %v900, %v1035
        %v1037 = vpop.f32.mrb[0].mxu0
        %1038 = vmatprep.mubr.bf16.mxu0 0
        %1039 = vmatmul.mubr.bf16.gmra.mrb[0].mxu0 %v710
        %v1040 = vpop.f32.mrb[0].mxu0
        %v1041 = vadd.f32 %v900, %v1040
        %v1042 = vpop.f32.mrb[0].mxu0
        %v1043 = vpop.f32.mrb[0].mxu0
        %v1044 = vadd.f32 %v900, %v1043
        %v1045 = vpop.f32.mrb[0].mxu0
        %1046 = vdwg.mxu0
        %v1047 = vld [vmem:[#allocation8] sm:$0xf]
        %v1048 = vld [vmem:[#allocation8 + $0x4] sm:$0xf]
        %v1049 = vld [vmem:[#allocation8 + $0x8] sm:$0xf]
        %v1050 = vld [vmem:[#allocation8 + $0xc] sm:$0xf]
        %v1051 = vld [vmem:[#allocation8 + $0x10] sm:$0xf]
        %v1052 = vld [vmem:[#allocation8 + $0x14] sm:$0xf]
        %v1053 = vld [vmem:[#allocation8 + $0x18] sm:$0xf]
        %v1054 = vld [vmem:[#allocation8 + $0x1c] sm:$0xf]
        %v1055 = vld [vmem:[#allocation8 + $0x20] sm:$0xf]
        %v1056 = vld [vmem:[#allocation8 + $0x24] sm:$0xf]
        %v1057 = vld [vmem:[#allocation8 + $0x28] sm:$0xf]
        %v1058 = vld [vmem:[#allocation8 + $0x2c] sm:$0xf]
        %v1059 = vld [vmem:[#allocation8 + $0x30] sm:$0xf]
        %v1060 = vld [vmem:[#allocation8 + $0x34] sm:$0xf]
        %v1061 = vld [vmem:[#allocation8 + $0x38] sm:$0xf]
        %v1062 = vld [vmem:[#allocation8 + $0x3c] sm:$0xf]
        %v1063 = vld [vmem:[%s8] sm:$0x1]
        %v1065 = vlaneseq
        %v1066 = vshrl.u32 %v1065, 7
        %v1067 = vsub.s32 0, %v1066
        %v1068 = vrot.slane %v1063, %v1067
        %v1086 = vunpack.c.l.b16 %v1047
        %v1087 = vunpack.c.l.b16 %v1048
        %v1088 = vunpack.c.l.b16 %v1049
        %v1089 = vunpack.c.l.b16 %v1050
        %v1090 = vunpack.c.l.b16 %v1051
        %v1091 = vunpack.c.l.b16 %v1052
        %v1092 = vunpack.c.l.b16 %v1053
        %v1093 = vunpack.c.l.b16 %v1054
        %v1094 = vunpack.c.l.b16 %v1055
        %v1095 = vunpack.c.l.b16 %v1056
        %v1096 = vunpack.c.l.b16 %v1057
        %v1097 = vunpack.c.l.b16 %v1058
        %v1098 = vunpack.c.l.b16 %v1059
        %v1099 = vunpack.c.l.b16 %v1060
        %v1100 = vunpack.c.l.b16 %v1061
        %v1101 = vunpack.c.l.b16 %v1062
        %v1102 = vpack.c.b16 %v1087, %v1086
        %v1103 = vpack.c.b16 %v1089, %v1088
        %v1104 = vpack.c.b16 %v1091, %v1090
        %v1105 = vpack.c.b16 %v1093, %v1092
        %v1106 = vpack.c.b16 %v1095, %v1094
        %v1107 = vpack.c.b16 %v1097, %v1096
        %v1108 = vpack.c.b16 %v1099, %v1098
        %v1109 = vpack.c.b16 %v1101, %v1100
        %1118 = vmatprep.subr.bf16.mxu0 0
        %1119 = vmatpush1.bf16.msra.mxu0 %v1102
        %1120 = vmatprep.subr.bf16.mxu0 0
        %1121 = vmatpush1.bf16.msra.mxu0 %v1103
        %1122 = vmatprep.subr.bf16.mxu0 0
        %1123 = vmatpush1.bf16.msra.mxu0 %v1104
        %1124 = vmatprep.subr.bf16.mxu0 0
        %1125 = vmatpush1.bf16.msra.mxu0 %v1105
        %1126 = vmatprep.subr.bf16.mxu0 0
        %1127 = vmatpush1.bf16.msra.mxu0 %v1106
        %1128 = vmatprep.subr.bf16.mxu0 0
        %1129 = vmatpush1.bf16.msra.mxu0 %v1107
        %1130 = vmatprep.subr.bf16.mxu0 0
        %1131 = vmatpush1.bf16.msra.mxu0 %v1108
        %1132 = vmatprep.subr.bf16.mxu0 0
        %1133 = vmatpush1.bf16.msra.mxu0 %v1109
        %1134 = vmatprep.subr.bf16.mxu0 0
        %1135 = vmatpush1.bf16.msra.mxu0 0
        %1136 = vmatprep.subr.bf16.mxu0 0
        %1137 = vmatpush1.bf16.msra.mxu0 0
        %1138 = vmatprep.subr.bf16.mxu0 0
        %1139 = vmatpush1.bf16.msra.mxu0 0
        %1140 = vmatprep.subr.bf16.mxu0 0
        %1141 = vmatpush1.bf16.msra.mxu0 0
        %1142 = vmatprep.subr.bf16.mxu0 0
        %1143 = vmatpush1.bf16.msra.mxu0 0
        %1144 = vmatprep.subr.bf16.mxu0 0
        %1145 = vmatpush1.bf16.msra.mxu0 0
        %1146 = vmatprep.subr.bf16.mxu0 0
        %1147 = vmatpush1.bf16.msra.mxu0 0
        %1148 = vmatprep.subr.bf16.mxu0 0
        %1149 = vmatpush1.bf16.msra.mxu0 0
        %1150 = vmatprep.mubr.bf16.mxu0 0
        %1151 = vmatmul.mubr.bf16.gmra.mrb[0].mxu0 %v703
        %v1152 = vpop.f32.mrb[0].mxu0
        %v1153 = vadd.f32 %v1068, %v1152
        %v1154 = vpop.f32.mrb[0].mxu0
        %v1155 = vpop.f32.mrb[0].mxu0
        %v1156 = vadd.f32 %v1068, %v1155
        %v1157 = vpop.f32.mrb[0].mxu0
        %1158 = vmatprep.mubr.bf16.mxu0 0
        %1159 = vmatmul.mubr.bf16.gmra.mrb[0].mxu0 %v704
        %v1160 = vpop.f32.mrb[0].mxu0
        %v1161 = vadd.f32 %v1068, %v1160
        %v1162 = vpop.f32.mrb[0].mxu0
        %v1163 = vpop.f32.mrb[0].mxu0
        %v1164 = vadd.f32 %v1068, %v1163
        %v1165 = vpop.f32.mrb[0].mxu0
        %1166 = vmatprep.mubr.bf16.mxu0 0
        %1167 = vmatmul.mubr.bf16.gmra.mrb[0].mxu0 %v705
        %v1168 = vpop.f32.mrb[0].mxu0
        %v1169 = vadd.f32 %v1068, %v1168
        %v1170 = vpop.f32.mrb[0].mxu0
        %v1171 = vpop.f32.mrb[0].mxu0
        %v1172 = vadd.f32 %v1068, %v1171
        %v1173 = vpop.f32.mrb[0].mxu0
        %1174 = vmatprep.mubr.bf16.mxu0 0
        %1175 = vmatmul.mubr.bf16.gmra.mrb[0].mxu0 %v706
        %v1176 = vpop.f32.mrb[0].mxu0
        %v1177 = vadd.f32 %v1068, %v1176
        %v1178 = vpop.f32.mrb[0].mxu0
        %v1179 = vpop.f32.mrb[0].mxu0
        %v1180 = vadd.f32 %v1068, %v1179
        %v1181 = vpop.f32.mrb[0].mxu0
        %1182 = vmatprep.mubr.bf16.mxu0 0
        %1183 = vmatmul.mubr.bf16.gmra.mrb[0].mxu0 %v707
        %v1184 = vpop.f32.mrb[0].mxu0
        %v1185 = vadd.f32 %v1068, %v1184
        %v1186 = vpop.f32.mrb[0].mxu0
        %v1187 = vpop.f32.mrb[0].mxu0
        %v1188 = vadd.f32 %v1068, %v1187
        %v1189 = vpop.f32.mrb[0].mxu0
        %1190 = vmatprep.mubr.bf16.mxu0 0
        %1191 = vmatmul.mubr.bf16.gmra.mrb[0].mxu0 %v708
        %v1192 = vpop.f32.mrb[0].mxu0
        %v1193 = vadd.f32 %v1068, %v1192
        %v1194 = vpop.f32.mrb[0].mxu0
        %v1195 = vpop.f32.mrb[0].mxu0
        %v1196 = vadd.f32 %v1068, %v1195
        %v1197 = vpop.f32.mrb[0].mxu0
        %1198 = vmatprep.mubr.bf16.mxu0 0
        %1199 = vmatmul.mubr.bf16.gmra.mrb[0].mxu0 %v709
        %v1200 = vpop.f32.mrb[0].mxu0
        %v1201 = vadd.f32 %v1068, %v1200
        %v1202 = vpop.f32.mrb[0].mxu0
        %v1203 = vpop.f32.mrb[0].mxu0
        %v1204 = vadd.f32 %v1068, %v1203
        %v1205 = vpop.f32.mrb[0].mxu0
        %1206 = vmatprep.mubr.bf16.mxu0 0
        %1207 = vmatmul.mubr.bf16.gmra.mrb[0].mxu0 %v710
        %v1208 = vpop.f32.mrb[0].mxu0
        %v1209 = vadd.f32 %v1068, %v1208
        %v1210 = vpop.f32.mrb[0].mxu0
        %v1211 = vpop.f32.mrb[0].mxu0
        %v1212 = vadd.f32 %v1068, %v1211
        %v1213 = vpop.f32.mrb[0].mxu0
        %1214 = vdwg.mxu0
        %1231 = vrot.lane.b32.xlu0 %v817, 96
        %v1232 = vpop.permute.xlu0 %1231
        %1233 = vrot.lane.b32.xlu0 %v820, 96
        %v1234 = vpop.permute.xlu0 %1233
        %1235 = vrot.lane.b32.xlu0 %v825, 96
        %v1236 = vpop.permute.xlu0 %1235
        %1237 = vrot.lane.b32.xlu0 %v828, 96
        %v1238 = vpop.permute.xlu0 %1237
        %1239 = vrot.lane.b32.xlu0 %v833, 96
        %v1240 = vpop.permute.xlu0 %1239
        %1241 = vrot.lane.b32.xlu0 %v836, 96
        %v1242 = vpop.permute.xlu0 %1241
        %1243 = vrot.lane.b32.xlu0 %v841, 96
        %v1244 = vpop.permute.xlu0 %1243
        %1245 = vrot.lane.b32.xlu0 %v844, 96
        %v1246 = vpop.permute.xlu0 %1245
        %1247 = vrot.lane.b32.xlu0 %v849, 96
        %v1248 = vpop.permute.xlu0 %1247
        %1249 = vrot.lane.b32.xlu0 %v852, 96
        %v1250 = vpop.permute.xlu0 %1249
        %1251 = vrot.lane.b32.xlu0 %v857, 96
        %v1252 = vpop.permute.xlu0 %1251
        %1253 = vrot.lane.b32.xlu0 %v860, 96
        %v1254 = vpop.permute.xlu0 %1253
        %1255 = vrot.lane.b32.xlu0 %v865, 96
        %v1256 = vpop.permute.xlu0 %1255
        %1257 = vrot.lane.b32.xlu0 %v868, 96
        %v1258 = vpop.permute.xlu0 %1257
        %1259 = vrot.lane.b32.xlu0 %v873, 96
        %v1260 = vpop.permute.xlu0 %1259
        %1261 = vrot.lane.b32.xlu0 %v876, 96
        %v1262 = vpop.permute.xlu0 %1261
        %1279 = vrot.lane.b32.xlu0 %v817, 64
        %v1280 = vpop.permute.xlu0 %1279
        %1281 = vrot.lane.b32.xlu0 %v820, 64
        %v1282 = vpop.permute.xlu0 %1281
        %1283 = vrot.lane.b32.xlu0 %v825, 64
        %v1284 = vpop.permute.xlu0 %1283
        %1285 = vrot.lane.b32.xlu0 %v828, 64
        %v1286 = vpop.permute.xlu0 %1285
        %1287 = vrot.lane.b32.xlu0 %v833, 64
        %v1288 = vpop.permute.xlu0 %1287
        %1289 = vrot.lane.b32.xlu0 %v836, 64
        %v1290 = vpop.permute.xlu0 %1289
        %1291 = vrot.lane.b32.xlu0 %v841, 64
        %v1292 = vpop.permute.xlu0 %1291
        %1293 = vrot.lane.b32.xlu0 %v844, 64
        %v1294 = vpop.permute.xlu0 %1293
        %1295 = vrot.lane.b32.xlu0 %v849, 64
        %v1296 = vpop.permute.xlu0 %1295
        %1297 = vrot.lane.b32.xlu0 %v852, 64
        %v1298 = vpop.permute.xlu0 %1297
        %1299 = vrot.lane.b32.xlu0 %v857, 64
        %v1300 = vpop.permute.xlu0 %1299
        %1301 = vrot.lane.b32.xlu0 %v860, 64
        %v1302 = vpop.permute.xlu0 %1301
        %1303 = vrot.lane.b32.xlu0 %v865, 64
        %v1304 = vpop.permute.xlu0 %1303
        %1305 = vrot.lane.b32.xlu0 %v868, 64
        %v1306 = vpop.permute.xlu0 %1305
        %1307 = vrot.lane.b32.xlu0 %v873, 64
        %v1308 = vpop.permute.xlu0 %1307
        %1309 = vrot.lane.b32.xlu0 %v876, 64
        %v1310 = vpop.permute.xlu0 %1309
        %1327 = vrot.lane.b32.xlu0 %v817, 32
        %v1328 = vpop.permute.xlu0 %1327
        %1329 = vrot.lane.b32.xlu0 %v820, 32
        %v1330 = vpop.permute.xlu0 %1329
        %1331 = vrot.lane.b32.xlu0 %v825, 32
        %v1332 = vpop.permute.xlu0 %1331
        %1333 = vrot.lane.b32.xlu0 %v828, 32
        %v1334 = vpop.permute.xlu0 %1333
        %1335 = vrot.lane.b32.xlu0 %v833, 32
        %v1336 = vpop.permute.xlu0 %1335
        %1337 = vrot.lane.b32.xlu0 %v836, 32
        %v1338 = vpop.permute.xlu0 %1337
        %1339 = vrot.lane.b32.xlu0 %v841, 32
        %v1340 = vpop.permute.xlu0 %1339
        %1341 = vrot.lane.b32.xlu0 %v844, 32
        %v1342 = vpop.permute.xlu0 %1341
        %1343 = vrot.lane.b32.xlu0 %v849, 32
        %v1344 = vpop.permute.xlu0 %1343
        %1345 = vrot.lane.b32.xlu0 %v852, 32
        %v1346 = vpop.permute.xlu0 %1345
        %1347 = vrot.lane.b32.xlu0 %v857, 32
        %v1348 = vpop.permute.xlu0 %1347
        %1349 = vrot.lane.b32.xlu0 %v860, 32
        %v1350 = vpop.permute.xlu0 %1349
        %1351 = vrot.lane.b32.xlu0 %v865, 32
        %v1352 = vpop.permute.xlu0 %1351
        %1353 = vrot.lane.b32.xlu0 %v868, 32
        %v1354 = vpop.permute.xlu0 %1353
        %1355 = vrot.lane.b32.xlu0 %v873, 32
        %v1356 = vpop.permute.xlu0 %1355
        %1357 = vrot.lane.b32.xlu0 %v876, 32
        %v1358 = vpop.permute.xlu0 %1357
        %v1375 = vpack.c.bf16 %v820, %v817
        %v1376 = vpack.c.bf16 %v828, %v825
        %v1377 = vpack.c.bf16 %v836, %v833
        %v1378 = vpack.c.bf16 %v844, %v841
        %v1379 = vpack.c.bf16 %v852, %v849
        %v1380 = vpack.c.bf16 %v860, %v857
        %v1381 = vpack.c.bf16 %v868, %v865
        %v1382 = vpack.c.bf16 %v876, %v873
        %v1383 = vpack.c.bf16 %v1234, %v1232
        %v1384 = vpack.c.bf16 %v1238, %v1236
        %v1385 = vpack.c.bf16 %v1242, %v1240
        %v1386 = vpack.c.bf16 %v1246, %v1244
        %v1387 = vpack.c.bf16 %v1250, %v1248
        %v1388 = vpack.c.bf16 %v1254, %v1252
        %v1389 = vpack.c.bf16 %v1258, %v1256
        %v1390 = vpack.c.bf16 %v1262, %v1260
        %v1391 = vpack.c.bf16 %v1282, %v1280
        %v1392 = vpack.c.bf16 %v1286, %v1284
        %v1393 = vpack.c.bf16 %v1290, %v1288
        %v1394 = vpack.c.bf16 %v1294, %v1292
        %v1395 = vpack.c.bf16 %v1298, %v1296
        %v1396 = vpack.c.bf16 %v1302, %v1300
        %v1397 = vpack.c.bf16 %v1306, %v1304
        %v1398 = vpack.c.bf16 %v1310, %v1308
        %v1399 = vpack.c.bf16 %v1330, %v1328
        %v1400 = vpack.c.bf16 %v1334, %v1332
        %v1401 = vpack.c.bf16 %v1338, %v1336
        %v1402 = vpack.c.bf16 %v1342, %v1340
        %v1403 = vpack.c.bf16 %v1346, %v1344
        %v1404 = vpack.c.bf16 %v1350, %v1348
        %v1405 = vpack.c.bf16 %v1354, %v1352
        %v1406 = vpack.c.bf16 %v1358, %v1356
        %1423 = vrot.lane.b32.xlu0 %v985, 96
        %v1424 = vpop.permute.xlu0 %1423
        %1425 = vrot.lane.b32.xlu0 %v988, 96
        %v1426 = vpop.permute.xlu0 %1425
        %1427 = vrot.lane.b32.xlu0 %v993, 96
        %v1428 = vpop.permute.xlu0 %1427
        %1429 = vrot.lane.b32.xlu0 %v996, 96
        %v1430 = vpop.permute.xlu0 %1429
        %1431 = vrot.lane.b32.xlu0 %v1001, 96
        %v1432 = vpop.permute.xlu0 %1431
        %1433 = vrot.lane.b32.xlu0 %v1004, 96
        %v1434 = vpop.permute.xlu0 %1433
        %1435 = vrot.lane.b32.xlu0 %v1009, 96
        %v1436 = vpop.permute.xlu0 %1435
        %1437 = vrot.lane.b32.xlu0 %v1012, 96
        %v1438 = vpop.permute.xlu0 %1437
        %1439 = vrot.lane.b32.xlu0 %v1017, 96
        %v1440 = vpop.permute.xlu0 %1439
        %1441 = vrot.lane.b32.xlu0 %v1020, 96
        %v1442 = vpop.permute.xlu0 %1441
        %1443 = vrot.lane.b32.xlu0 %v1025, 96
        %v1444 = vpop.permute.xlu0 %1443
        %1445 = vrot.lane.b32.xlu0 %v1028, 96
        %v1446 = vpop.permute.xlu0 %1445
        %1447 = vrot.lane.b32.xlu0 %v1033, 96
        %v1448 = vpop.permute.xlu0 %1447
        %1449 = vrot.lane.b32.xlu0 %v1036, 96
        %v1450 = vpop.permute.xlu0 %1449
        %1451 = vrot.lane.b32.xlu0 %v1041, 96
        %v1452 = vpop.permute.xlu0 %1451
        %1453 = vrot.lane.b32.xlu0 %v1044, 96
        %v1454 = vpop.permute.xlu0 %1453
        %1471 = vrot.lane.b32.xlu0 %v985, 64
        %v1472 = vpop.permute.xlu0 %1471
        %1473 = vrot.lane.b32.xlu0 %v988, 64
        %v1474 = vpop.permute.xlu0 %1473
        %1475 = vrot.lane.b32.xlu0 %v993, 64
        %v1476 = vpop.permute.xlu0 %1475
        %1477 = vrot.lane.b32.xlu0 %v996, 64
        %v1478 = vpop.permute.xlu0 %1477
        %1479 = vrot.lane.b32.xlu0 %v1001, 64
        %v1480 = vpop.permute.xlu0 %1479
        %1481 = vrot.lane.b32.xlu0 %v1004, 64
        %v1482 = vpop.permute.xlu0 %1481
        %1483 = vrot.lane.b32.xlu0 %v1009, 64
        %v1484 = vpop.permute.xlu0 %1483
        %1485 = vrot.lane.b32.xlu0 %v1012, 64
        %v1486 = vpop.permute.xlu0 %1485
        %1487 = vrot.lane.b32.xlu0 %v1017, 64
        %v1488 = vpop.permute.xlu0 %1487
        %1489 = vrot.lane.b32.xlu0 %v1020, 64
        %v1490 = vpop.permute.xlu0 %1489
        %1491 = vrot.lane.b32.xlu0 %v1025, 64
        %v1492 = vpop.permute.xlu0 %1491
        %1493 = vrot.lane.b32.xlu0 %v1028, 64
        %v1494 = vpop.permute.xlu0 %1493
        %1495 = vrot.lane.b32.xlu0 %v1033, 64
        %v1496 = vpop.permute.xlu0 %1495
        %1497 = vrot.lane.b32.xlu0 %v1036, 64
        %v1498 = vpop.permute.xlu0 %1497
        %1499 = vrot.lane.b32.xlu0 %v1041, 64
        %v1500 = vpop.permute.xlu0 %1499
        %1501 = vrot.lane.b32.xlu0 %v1044, 64
        %v1502 = vpop.permute.xlu0 %1501
        %1519 = vrot.lane.b32.xlu0 %v985, 32
        %v1520 = vpop.permute.xlu0 %1519
        %1521 = vrot.lane.b32.xlu0 %v988, 32
        %v1522 = vpop.permute.xlu0 %1521
        %1523 = vrot.lane.b32.xlu0 %v993, 32
        %v1524 = vpop.permute.xlu0 %1523
        %1525 = vrot.lane.b32.xlu0 %v996, 32
        %v1526 = vpop.permute.xlu0 %1525
        %1527 = vrot.lane.b32.xlu0 %v1001, 32
        %v1528 = vpop.permute.xlu0 %1527
        %1529 = vrot.lane.b32.xlu0 %v1004, 32
        %v1530 = vpop.permute.xlu0 %1529
        %1531 = vrot.lane.b32.xlu0 %v1009, 32
        %v1532 = vpop.permute.xlu0 %1531
        %1533 = vrot.lane.b32.xlu0 %v1012, 32
        %v1534 = vpop.permute.xlu0 %1533
        %1535 = vrot.lane.b32.xlu0 %v1017, 32
        %v1536 = vpop.permute.xlu0 %1535
        %1537 = vrot.lane.b32.xlu0 %v1020, 32
        %v1538 = vpop.permute.xlu0 %1537
        %1539 = vrot.lane.b32.xlu0 %v1025, 32
        %v1540 = vpop.permute.xlu0 %1539
        %1541 = vrot.lane.b32.xlu0 %v1028, 32
        %v1542 = vpop.permute.xlu0 %1541
        %1543 = vrot.lane.b32.xlu0 %v1033, 32
        %v1544 = vpop.permute.xlu0 %1543
        %1545 = vrot.lane.b32.xlu0 %v1036, 32
        %v1546 = vpop.permute.xlu0 %1545
        %1547 = vrot.lane.b32.xlu0 %v1041, 32
        %v1548 = vpop.permute.xlu0 %1547
        %1549 = vrot.lane.b32.xlu0 %v1044, 32
        %v1550 = vpop.permute.xlu0 %1549
        %v1567 = vpack.c.bf16 %v988, %v985
        %v1568 = vpack.c.bf16 %v996, %v993
        %v1569 = vpack.c.bf16 %v1004, %v1001
        %v1570 = vpack.c.bf16 %v1012, %v1009
        %v1571 = vpack.c.bf16 %v1020, %v1017
        %v1572 = vpack.c.bf16 %v1028, %v1025
        %v1573 = vpack.c.bf16 %v1036, %v1033
        %v1574 = vpack.c.bf16 %v1044, %v1041
        %v1575 = vpack.c.bf16 %v1426, %v1424
        %v1576 = vpack.c.bf16 %v1430, %v1428
        %v1577 = vpack.c.bf16 %v1434, %v1432
        %v1578 = vpack.c.bf16 %v1438, %v1436
        %v1579 = vpack.c.bf16 %v1442, %v1440
        %v1580 = vpack.c.bf16 %v1446, %v1444
        %v1581 = vpack.c.bf16 %v1450, %v1448
        %v1582 = vpack.c.bf16 %v1454, %v1452
        %v1583 = vpack.c.bf16 %v1474, %v1472
        %v1584 = vpack.c.bf16 %v1478, %v1476
        %v1585 = vpack.c.bf16 %v1482, %v1480
        %v1586 = vpack.c.bf16 %v1486, %v1484
        %v1587 = vpack.c.bf16 %v1490, %v1488
        %v1588 = vpack.c.bf16 %v1494, %v1492
        %v1589 = vpack.c.bf16 %v1498, %v1496
        %v1590 = vpack.c.bf16 %v1502, %v1500
        %v1591 = vpack.c.bf16 %v1522, %v1520
        %v1592 = vpack.c.bf16 %v1526, %v1524
        %v1593 = vpack.c.bf16 %v1530, %v1528
        %v1594 = vpack.c.bf16 %v1534, %v1532
        %v1595 = vpack.c.bf16 %v1538, %v1536
        %v1596 = vpack.c.bf16 %v1542, %v1540
        %v1597 = vpack.c.bf16 %v1546, %v1544
        %v1598 = vpack.c.bf16 %v1550, %v1548
        %1615 = vrot.lane.b32.xlu0 %v1153, 96
        %v1616 = vpop.permute.xlu0 %1615
        %1617 = vrot.lane.b32.xlu0 %v1156, 96
        %v1618 = vpop.permute.xlu0 %1617
        %1619 = vrot.lane.b32.xlu0 %v1161, 96
        %v1620 = vpop.permute.xlu0 %1619
        %1621 = vrot.lane.b32.xlu0 %v1164, 96
        %v1622 = vpop.permute.xlu0 %1621
        %1623 = vrot.lane.b32.xlu0 %v1169, 96
        %v1624 = vpop.permute.xlu0 %1623
        %1625 = vrot.lane.b32.xlu0 %v1172, 96
        %v1626 = vpop.permute.xlu0 %1625
        %1627 = vrot.lane.b32.xlu0 %v1177, 96
        %v1628 = vpop.permute.xlu0 %1627
        %1629 = vrot.lane.b32.xlu0 %v1180, 96
        %v1630 = vpop.permute.xlu0 %1629
        %1631 = vrot.lane.b32.xlu0 %v1185, 96
        %v1632 = vpop.permute.xlu0 %1631
        %1633 = vrot.lane.b32.xlu0 %v1188, 96
        %v1634 = vpop.permute.xlu0 %1633
        %1635 = vrot.lane.b32.xlu0 %v1193, 96
        %v1636 = vpop.permute.xlu0 %1635
        %1637 = vrot.lane.b32.xlu0 %v1196, 96
        %v1638 = vpop.permute.xlu0 %1637
        %1639 = vrot.lane.b32.xlu0 %v1201, 96
        %v1640 = vpop.permute.xlu0 %1639
        %1641 = vrot.lane.b32.xlu0 %v1204, 96
        %v1642 = vpop.permute.xlu0 %1641
        %1643 = vrot.lane.b32.xlu0 %v1209, 96
        %v1644 = vpop.permute.xlu0 %1643
        %1645 = vrot.lane.b32.xlu0 %v1212, 96
        %v1646 = vpop.permute.xlu0 %1645
        %1663 = vrot.lane.b32.xlu0 %v1153, 64
        %v1664 = vpop.permute.xlu0 %1663
        %1665 = vrot.lane.b32.xlu0 %v1156, 64
        %v1666 = vpop.permute.xlu0 %1665
        %1667 = vrot.lane.b32.xlu0 %v1161, 64
        %v1668 = vpop.permute.xlu0 %1667
        %1669 = vrot.lane.b32.xlu0 %v1164, 64
        %v1670 = vpop.permute.xlu0 %1669
        %1671 = vrot.lane.b32.xlu0 %v1169, 64
        %v1672 = vpop.permute.xlu0 %1671
        %1673 = vrot.lane.b32.xlu0 %v1172, 64
        %v1674 = vpop.permute.xlu0 %1673
        %1675 = vrot.lane.b32.xlu0 %v1177, 64
        %v1676 = vpop.permute.xlu0 %1675
        %1677 = vrot.lane.b32.xlu0 %v1180, 64
        %v1678 = vpop.permute.xlu0 %1677
        %1679 = vrot.lane.b32.xlu0 %v1185, 64
        %v1680 = vpop.permute.xlu0 %1679
        %1681 = vrot.lane.b32.xlu0 %v1188, 64
        %v1682 = vpop.permute.xlu0 %1681
        %1683 = vrot.lane.b32.xlu0 %v1193, 64
        %v1684 = vpop.permute.xlu0 %1683
        %1685 = vrot.lane.b32.xlu0 %v1196, 64
        %v1686 = vpop.permute.xlu0 %1685
        %1687 = vrot.lane.b32.xlu0 %v1201, 64
        %v1688 = vpop.permute.xlu0 %1687
        %1689 = vrot.lane.b32.xlu0 %v1204, 64
        %v1690 = vpop.permute.xlu0 %1689
        %1691 = vrot.lane.b32.xlu0 %v1209, 64
        %v1692 = vpop.permute.xlu0 %1691
        %1693 = vrot.lane.b32.xlu0 %v1212, 64
        %v1694 = vpop.permute.xlu0 %1693
        %1711 = vrot.lane.b32.xlu0 %v1153, 32
        %v1712 = vpop.permute.xlu0 %1711
        %1713 = vrot.lane.b32.xlu0 %v1156, 32
        %v1714 = vpop.permute.xlu0 %1713
        %1715 = vrot.lane.b32.xlu0 %v1161, 32
        %v1716 = vpop.permute.xlu0 %1715
        %1717 = vrot.lane.b32.xlu0 %v1164, 32
        %v1718 = vpop.permute.xlu0 %1717
        %1719 = vrot.lane.b32.xlu0 %v1169, 32
        %v1720 = vpop.permute.xlu0 %1719
        %1721 = vrot.lane.b32.xlu0 %v1172, 32
        %v1722 = vpop.permute.xlu0 %1721
        %1723 = vrot.lane.b32.xlu0 %v1177, 32
        %v1724 = vpop.permute.xlu0 %1723
        %1725 = vrot.lane.b32.xlu0 %v1180, 32
        %v1726 = vpop.permute.xlu0 %1725
        %1727 = vrot.lane.b32.xlu0 %v1185, 32
        %v1728 = vpop.permute.xlu0 %1727
        %1729 = vrot.lane.b32.xlu0 %v1188, 32
        %v1730 = vpop.permute.xlu0 %1729
        %1731 = vrot.lane.b32.xlu0 %v1193, 32
        %v1732 = vpop.permute.xlu0 %1731
        %1733 = vrot.lane.b32.xlu0 %v1196, 32
        %v1734 = vpop.permute.xlu0 %1733
        %1735 = vrot.lane.b32.xlu0 %v1201, 32
        %v1736 = vpop.permute.xlu0 %1735
        %1737 = vrot.lane.b32.xlu0 %v1204, 32
        %v1738 = vpop.permute.xlu0 %1737
        %1739 = vrot.lane.b32.xlu0 %v1209, 32
        %v1740 = vpop.permute.xlu0 %1739
        %1741 = vrot.lane.b32.xlu0 %v1212, 32
        %v1742 = vpop.permute.xlu0 %1741
        %v1759 = vpack.c.bf16 %v1156, %v1153
        %v1760 = vpack.c.bf16 %v1164, %v1161
        %v1761 = vpack.c.bf16 %v1172, %v1169
        %v1762 = vpack.c.bf16 %v1180, %v1177
        %v1763 = vpack.c.bf16 %v1188, %v1185
        %v1764 = vpack.c.bf16 %v1196, %v1193
        %v1765 = vpack.c.bf16 %v1204, %v1201
        %v1766 = vpack.c.bf16 %v1212, %v1209
        %v1767 = vpack.c.bf16 %v1618, %v1616
        %v1768 = vpack.c.bf16 %v1622, %v1620
        %v1769 = vpack.c.bf16 %v1626, %v1624
        %v1770 = vpack.c.bf16 %v1630, %v1628
        %v1771 = vpack.c.bf16 %v1634, %v1632
        %v1772 = vpack.c.bf16 %v1638, %v1636
        %v1773 = vpack.c.bf16 %v1642, %v1640
        %v1774 = vpack.c.bf16 %v1646, %v1644
        %v1775 = vpack.c.bf16 %v1666, %v1664
        %v1776 = vpack.c.bf16 %v1670, %v1668
        %v1777 = vpack.c.bf16 %v1674, %v1672
        %v1778 = vpack.c.bf16 %v1678, %v1676
        %v1779 = vpack.c.bf16 %v1682, %v1680
        %v1780 = vpack.c.bf16 %v1686, %v1684
        %v1781 = vpack.c.bf16 %v1690, %v1688
        %v1782 = vpack.c.bf16 %v1694, %v1692
        %v1783 = vpack.c.bf16 %v1714, %v1712
        %v1784 = vpack.c.bf16 %v1718, %v1716
        %v1785 = vpack.c.bf16 %v1722, %v1720
        %v1786 = vpack.c.bf16 %v1726, %v1724
        %v1787 = vpack.c.bf16 %v1730, %v1728
        %v1788 = vpack.c.bf16 %v1734, %v1732
        %v1789 = vpack.c.bf16 %v1738, %v1736
        %v1790 = vpack.c.bf16 %v1742, %v1740
        %vm1791 = vcmask 261120
        %v1793 = vsel %vm1791, %v1375, 0
        %v1796 = vsel %vm1791, %v1376, 0
        %v1799 = vsel %vm1791, %v1377, 0
        %v1802 = vsel %vm1791, %v1378, 0
        %v1805 = vsel %vm1791, %v1379, 0
        %v1808 = vsel %vm1791, %v1380, 0
        %v1811 = vsel %vm1791, %v1381, 0
        %v1814 = vsel %vm1791, %v1382, 0
        %v1817 = vsel %vm1791, %v1567, 0
        %v1820 = vsel %vm1791, %v1568, 0
        %v1823 = vsel %vm1791, %v1569, 0
        %v1826 = vsel %vm1791, %v1570, 0
        %v1829 = vsel %vm1791, %v1571, 0
        %v1832 = vsel %vm1791, %v1572, 0
        %v1835 = vsel %vm1791, %v1573, 0
        %v1838 = vsel %vm1791, %v1574, 0
        %1840 = vmatprep.subr.bf16.mxu0 0
        %1841 = vmatpush1.bf16.xpose.msra.mxu0 %v1817
        %1842 = vmatprep.subr.bf16.mxu0 0
        %1843 = vmatpush1.bf16.xpose.msra.mxu0 %v1820
        %1844 = vmatprep.subr.bf16.mxu0 0
        %1845 = vmatpush1.bf16.xpose.msra.mxu0 %v1823
        %1846 = vmatprep.subr.bf16.mxu0 0
        %1847 = vmatpush1.bf16.xpose.msra.mxu0 %v1826
        %1848 = vmatprep.subr.bf16.mxu0 0
        %1849 = vmatpush1.bf16.xpose.msra.mxu0 %v1829
        %1850 = vmatprep.subr.bf16.mxu0 0
        %1851 = vmatpush1.bf16.xpose.msra.mxu0 %v1832
        %1852 = vmatprep.subr.bf16.mxu0 0
        %1853 = vmatpush1.bf16.xpose.msra.mxu0 %v1835
        %1854 = vmatprep.subr.bf16.mxu0 0
        %1855 = vmatpush1.bf16.xpose.msra.mxu0 %v1838
        %1856 = vmatprep.subr.bf16.mxu0 0
        %1857 = vmatpush1.bf16.xpose.msra.mxu0 0
        %1858 = vmatprep.subr.bf16.mxu0 0
        %1859 = vmatpush1.bf16.xpose.msra.mxu0 0
        %1860 = vmatprep.subr.bf16.mxu0 0
        %1861 = vmatpush1.bf16.xpose.msra.mxu0 0
        %1862 = vmatprep.subr.bf16.mxu0 0
        %1863 = vmatpush1.bf16.xpose.msra.mxu0 0
        %1864 = vmatprep.subr.bf16.mxu0 0
        %1865 = vmatpush1.bf16.xpose.msra.mxu0 0
        %1866 = vmatprep.subr.bf16.mxu0 0
        %1867 = vmatpush1.bf16.xpose.msra.mxu0 0
        %1868 = vmatprep.subr.bf16.mxu0 0
        %1869 = vmatpush1.bf16.xpose.msra.mxu0 0
        %1870 = vmatprep.subr.bf16.mxu0 0
        %1871 = vmatpush1.bf16.xpose.msra.mxu0 0
        %1872 = vmatprep.mubr.bf16.mxu0 0
        %1873 = vmatmul.mubr.bf16.gmra.mrb[0].mxu0 %v1793
        %v1874 = vpop.f32.mrb[0].mxu0
        %v1875 = vadd.f32 0.0, %v1874
        %v1876 = vpop.f32.mrb[0].mxu0
        %v1877 = vpop.f32.mrb[0].mxu0
        %v1878 = vadd.f32 0.0, %v1877
        %v1879 = vpop.f32.mrb[0].mxu0
        %1880 = vmatprep.mubr.bf16.mxu0 0
        %1881 = vmatmul.mubr.bf16.gmra.mrb[0].mxu0 %v1796
        %v1882 = vpop.f32.mrb[0].mxu0
        %v1883 = vadd.f32 0.0, %v1882
        %v1884 = vpop.f32.mrb[0].mxu0
        %v1885 = vpop.f32.mrb[0].mxu0
        %v1886 = vadd.f32 0.0, %v1885
        %v1887 = vpop.f32.mrb[0].mxu0
        %1888 = vmatprep.mubr.bf16.mxu0 0
        %1889 = vmatmul.mubr.bf16.gmra.mrb[0].mxu0 %v1799
        %v1890 = vpop.f32.mrb[0].mxu0
        %v1891 = vadd.f32 0.0, %v1890
        %v1892 = vpop.f32.mrb[0].mxu0
        %v1893 = vpop.f32.mrb[0].mxu0
        %v1894 = vadd.f32 0.0, %v1893
        %v1895 = vpop.f32.mrb[0].mxu0
        %1896 = vmatprep.mubr.bf16.mxu0 0
        %1897 = vmatmul.mubr.bf16.gmra.mrb[0].mxu0 %v1802
        %v1898 = vpop.f32.mrb[0].mxu0
        %v1899 = vadd.f32 0.0, %v1898
        %v1900 = vpop.f32.mrb[0].mxu0
        %v1901 = vpop.f32.mrb[0].mxu0
        %v1902 = vadd.f32 0.0, %v1901
        %v1903 = vpop.f32.mrb[0].mxu0
        %1904 = vmatprep.mubr.bf16.mxu0 0
        %1905 = vmatmul.mubr.bf16.gmra.mrb[0].mxu0 %v1805
        %v1906 = vpop.f32.mrb[0].mxu0
        %v1907 = vadd.f32 0.0, %v1906
        %v1908 = vpop.f32.mrb[0].mxu0
        %v1909 = vpop.f32.mrb[0].mxu0
        %v1910 = vadd.f32 0.0, %v1909
        %v1911 = vpop.f32.mrb[0].mxu0
        %1912 = vmatprep.mubr.bf16.mxu0 0
        %1913 = vmatmul.mubr.bf16.gmra.mrb[0].mxu0 %v1808
        %v1914 = vpop.f32.mrb[0].mxu0
        %v1915 = vadd.f32 0.0, %v1914
        %v1916 = vpop.f32.mrb[0].mxu0
        %v1917 = vpop.f32.mrb[0].mxu0
        %v1918 = vadd.f32 0.0, %v1917
        %v1919 = vpop.f32.mrb[0].mxu0
        %1920 = vmatprep.mubr.bf16.mxu0 0
        %1921 = vmatmul.mubr.bf16.gmra.mrb[0].mxu0 %v1811
        %v1922 = vpop.f32.mrb[0].mxu0
        %v1923 = vadd.f32 0.0, %v1922
        %v1924 = vpop.f32.mrb[0].mxu0
        %v1925 = vpop.f32.mrb[0].mxu0
        %v1926 = vadd.f32 0.0, %v1925
        %v1927 = vpop.f32.mrb[0].mxu0
        %1928 = vmatprep.mubr.bf16.mxu0 0
        %1929 = vmatmul.mubr.bf16.gmra.mrb[0].mxu0 %v1814
        %v1930 = vpop.f32.mrb[0].mxu0
        %v1931 = vadd.f32 0.0, %v1930
        %v1932 = vpop.f32.mrb[0].mxu0
        %v1933 = vpop.f32.mrb[0].mxu0
        %v1934 = vadd.f32 0.0, %v1933
        %v1935 = vpop.f32.mrb[0].mxu0
        %1936 = vdwg.mxu0
        %v1938 = vsel %vm1791, %v1383, 0
        %v1941 = vsel %vm1791, %v1384, 0
        %v1944 = vsel %vm1791, %v1385, 0
        %v1947 = vsel %vm1791, %v1386, 0
        %v1950 = vsel %vm1791, %v1387, 0
        %v1953 = vsel %vm1791, %v1388, 0
        %v1956 = vsel %vm1791, %v1389, 0
        %v1959 = vsel %vm1791, %v1390, 0
        %v1962 = vsel %vm1791, %v1575, 0
        %v1965 = vsel %vm1791, %v1576, 0
        %v1968 = vsel %vm1791, %v1577, 0
        %v1971 = vsel %vm1791, %v1578, 0
        %v1974 = vsel %vm1791, %v1579, 0
        %v1977 = vsel %vm1791, %v1580, 0
        %v1980 = vsel %vm1791, %v1581, 0
        %v1983 = vsel %vm1791, %v1582, 0
        %1985 = vmatprep.subr.bf16.mxu0 0
        %1986 = vmatpush1.bf16.xpose.msra.mxu0 %v1962
        %1987 = vmatprep.subr.bf16.mxu0 0
        %1988 = vmatpush1.bf16.xpose.msra.mxu0 %v1965
        %1989 = vmatprep.subr.bf16.mxu0 0
        %1990 = vmatpush1.bf16.xpose.msra.mxu0 %v1968
        %1991 = vmatprep.subr.bf16.mxu0 0
        %1992 = vmatpush1.bf16.xpose.msra.mxu0 %v1971
        %1993 = vmatprep.subr.bf16.mxu0 0
        %1994 = vmatpush1.bf16.xpose.msra.mxu0 %v1974
        %1995 = vmatprep.subr.bf16.mxu0 0
        %1996 = vmatpush1.bf16.xpose.msra.mxu0 %v1977
        %1997 = vmatprep.subr.bf16.mxu0 0
        %1998 = vmatpush1.bf16.xpose.msra.mxu0 %v1980
        %1999 = vmatprep.subr.bf16.mxu0 0
        %2000 = vmatpush1.bf16.xpose.msra.mxu0 %v1983
        %2001 = vmatprep.subr.bf16.mxu0 0
        %2002 = vmatpush1.bf16.xpose.msra.mxu0 0
        %2003 = vmatprep.subr.bf16.mxu0 0
        %2004 = vmatpush1.bf16.xpose.msra.mxu0 0
        %2005 = vmatprep.subr.bf16.mxu0 0
        %2006 = vmatpush1.bf16.xpose.msra.mxu0 0
        %2007 = vmatprep.subr.bf16.mxu0 0
        %2008 = vmatpush1.bf16.xpose.msra.mxu0 0
        %2009 = vmatprep.subr.bf16.mxu0 0
        %2010 = vmatpush1.bf16.xpose.msra.mxu0 0
        %2011 = vmatprep.subr.bf16.mxu0 0
        %2012 = vmatpush1.bf16.xpose.msra.mxu0 0
        %2013 = vmatprep.subr.bf16.mxu0 0
        %2014 = vmatpush1.bf16.xpose.msra.mxu0 0
        %2015 = vmatprep.subr.bf16.mxu0 0
        %2016 = vmatpush1.bf16.xpose.msra.mxu0 0
        %2017 = vmatprep.mubr.bf16.mxu0 0
        %2018 = vmatmul.mubr.bf16.gmra.mrb[0].mxu0 %v1938
        %v2019 = vpop.f32.mrb[0].mxu0
        %v2020 = vadd.f32 0.0, %v2019
        %v2021 = vpop.f32.mrb[0].mxu0
        %v2022 = vpop.f32.mrb[0].mxu0
        %v2023 = vadd.f32 0.0, %v2022
        %v2024 = vpop.f32.mrb[0].mxu0
        %2025 = vmatprep.mubr.bf16.mxu0 0
        %2026 = vmatmul.mubr.bf16.gmra.mrb[0].mxu0 %v1941
        %v2027 = vpop.f32.mrb[0].mxu0
        %v2028 = vadd.f32 0.0, %v2027
        %v2029 = vpop.f32.mrb[0].mxu0
        %v2030 = vpop.f32.mrb[0].mxu0
        %v2031 = vadd.f32 0.0, %v2030
        %v2032 = vpop.f32.mrb[0].mxu0
        %2033 = vmatprep.mubr.bf16.mxu0 0
        %2034 = vmatmul.mubr.bf16.gmra.mrb[0].mxu0 %v1944
        %v2035 = vpop.f32.mrb[0].mxu0
        %v2036 = vadd.f32 0.0, %v2035
        %v2037 = vpop.f32.mrb[0].mxu0
        %v2038 = vpop.f32.mrb[0].mxu0
        %v2039 = vadd.f32 0.0, %v2038
        %v2040 = vpop.f32.mrb[0].mxu0
        %2041 = vmatprep.mubr.bf16.mxu0 0
        %2042 = vmatmul.mubr.bf16.gmra.mrb[0].mxu0 %v1947
        %v2043 = vpop.f32.mrb[0].mxu0
        %v2044 = vadd.f32 0.0, %v2043
        %v2045 = vpop.f32.mrb[0].mxu0
        %v2046 = vpop.f32.mrb[0].mxu0
        %v2047 = vadd.f32 0.0, %v2046
        %v2048 = vpop.f32.mrb[0].mxu0
        %2049 = vmatprep.mubr.bf16.mxu0 0
        %2050 = vmatmul.mubr.bf16.gmra.mrb[0].mxu0 %v1950
        %v2051 = vpop.f32.mrb[0].mxu0
        %v2052 = vadd.f32 0.0, %v2051
        %v2053 = vpop.f32.mrb[0].mxu0
        %v2054 = vpop.f32.mrb[0].mxu0
        %v2055 = vadd.f32 0.0, %v2054
        %v2056 = vpop.f32.mrb[0].mxu0
        %2057 = vmatprep.mubr.bf16.mxu0 0
        %2058 = vmatmul.mubr.bf16.gmra.mrb[0].mxu0 %v1953
        %v2059 = vpop.f32.mrb[0].mxu0
        %v2060 = vadd.f32 0.0, %v2059
        %v2061 = vpop.f32.mrb[0].mxu0
        %v2062 = vpop.f32.mrb[0].mxu0
        %v2063 = vadd.f32 0.0, %v2062
        %v2064 = vpop.f32.mrb[0].mxu0
        %2065 = vmatprep.mubr.bf16.mxu0 0
        %2066 = vmatmul.mubr.bf16.gmra.mrb[0].mxu0 %v1956
        %v2067 = vpop.f32.mrb[0].mxu0
        %v2068 = vadd.f32 0.0, %v2067
        %v2069 = vpop.f32.mrb[0].mxu0
        %v2070 = vpop.f32.mrb[0].mxu0
        %v2071 = vadd.f32 0.0, %v2070
        %v2072 = vpop.f32.mrb[0].mxu0
        %2073 = vmatprep.mubr.bf16.mxu0 0
        %2074 = vmatmul.mubr.bf16.gmra.mrb[0].mxu0 %v1959
        %v2075 = vpop.f32.mrb[0].mxu0
        %v2076 = vadd.f32 0.0, %v2075
        %v2077 = vpop.f32.mrb[0].mxu0
        %v2078 = vpop.f32.mrb[0].mxu0
        %v2079 = vadd.f32 0.0, %v2078
        %v2080 = vpop.f32.mrb[0].mxu0
        %2081 = vdwg.mxu0
        %v2083 = vsel %vm1791, %v1391, 0
        %v2086 = vsel %vm1791, %v1392, 0
        %v2089 = vsel %vm1791, %v1393, 0
        %v2092 = vsel %vm1791, %v1394, 0
        %v2095 = vsel %vm1791, %v1395, 0
        %v2098 = vsel %vm1791, %v1396, 0
        %v2101 = vsel %vm1791, %v1397, 0
        %v2104 = vsel %vm1791, %v1398, 0
        %v2107 = vsel %vm1791, %v1583, 0
        %v2110 = vsel %vm1791, %v1584, 0
        %v2113 = vsel %vm1791, %v1585, 0
        %v2116 = vsel %vm1791, %v1586, 0
        %v2119 = vsel %vm1791, %v1587, 0
        %v2122 = vsel %vm1791, %v1588, 0
        %v2125 = vsel %vm1791, %v1589, 0
        %v2128 = vsel %vm1791, %v1590, 0
        %2130 = vmatprep.subr.bf16.mxu0 0
        %2131 = vmatpush1.bf16.xpose.msra.mxu0 %v2107
        %2132 = vmatprep.subr.bf16.mxu0 0
        %2133 = vmatpush1.bf16.xpose.msra.mxu0 %v2110
        %2134 = vmatprep.subr.bf16.mxu0 0
        %2135 = vmatpush1.bf16.xpose.msra.mxu0 %v2113
        %2136 = vmatprep.subr.bf16.mxu0 0
        %2137 = vmatpush1.bf16.xpose.msra.mxu0 %v2116
        %2138 = vmatprep.subr.bf16.mxu0 0
        %2139 = vmatpush1.bf16.xpose.msra.mxu0 %v2119
        %2140 = vmatprep.subr.bf16.mxu0 0
        %2141 = vmatpush1.bf16.xpose.msra.mxu0 %v2122
        %2142 = vmatprep.subr.bf16.mxu0 0
        %2143 = vmatpush1.bf16.xpose.msra.mxu0 %v2125
        %2144 = vmatprep.subr.bf16.mxu0 0
        %2145 = vmatpush1.bf16.xpose.msra.mxu0 %v2128
        %2146 = vmatprep.subr.bf16.mxu0 0
        %2147 = vmatpush1.bf16.xpose.msra.mxu0 0
        %2148 = vmatprep.subr.bf16.mxu0 0
        %2149 = vmatpush1.bf16.xpose.msra.mxu0 0
        %2150 = vmatprep.subr.bf16.mxu0 0
        %2151 = vmatpush1.bf16.xpose.msra.mxu0 0
        %2152 = vmatprep.subr.bf16.mxu0 0
        %2153 = vmatpush1.bf16.xpose.msra.mxu0 0
        %2154 = vmatprep.subr.bf16.mxu0 0
        %2155 = vmatpush1.bf16.xpose.msra.mxu0 0
        %2156 = vmatprep.subr.bf16.mxu0 0
        %2157 = vmatpush1.bf16.xpose.msra.mxu0 0
        %2158 = vmatprep.subr.bf16.mxu0 0
        %2159 = vmatpush1.bf16.xpose.msra.mxu0 0
        %2160 = vmatprep.subr.bf16.mxu0 0
        %2161 = vmatpush1.bf16.xpose.msra.mxu0 0
        %2162 = vmatprep.mubr.bf16.mxu0 0
        %2163 = vmatmul.mubr.bf16.gmra.mrb[0].mxu0 %v2083
        %v2164 = vpop.f32.mrb[0].mxu0
        %v2165 = vadd.f32 0.0, %v2164
        %v2166 = vpop.f32.mrb[0].mxu0
        %v2167 = vpop.f32.mrb[0].mxu0
        %v2168 = vadd.f32 0.0, %v2167
        %v2169 = vpop.f32.mrb[0].mxu0
        %2170 = vmatprep.mubr.bf16.mxu0 0
        %2171 = vmatmul.mubr.bf16.gmra.mrb[0].mxu0 %v2086
        %v2172 = vpop.f32.mrb[0].mxu0
        %v2173 = vadd.f32 0.0, %v2172
        %v2174 = vpop.f32.mrb[0].mxu0
        %v2175 = vpop.f32.mrb[0].mxu0
        %v2176 = vadd.f32 0.0, %v2175
        %v2177 = vpop.f32.mrb[0].mxu0
        %2178 = vmatprep.mubr.bf16.mxu0 0
        %2179 = vmatmul.mubr.bf16.gmra.mrb[0].mxu0 %v2089
        %v2180 = vpop.f32.mrb[0].mxu0
        %v2181 = vadd.f32 0.0, %v2180
        %v2182 = vpop.f32.mrb[0].mxu0
        %v2183 = vpop.f32.mrb[0].mxu0
        %v2184 = vadd.f32 0.0, %v2183
        %v2185 = vpop.f32.mrb[0].mxu0
        %2186 = vmatprep.mubr.bf16.mxu0 0
        %2187 = vmatmul.mubr.bf16.gmra.mrb[0].mxu0 %v2092
        %v2188 = vpop.f32.mrb[0].mxu0
        %v2189 = vadd.f32 0.0, %v2188
        %v2190 = vpop.f32.mrb[0].mxu0
        %v2191 = vpop.f32.mrb[0].mxu0
        %v2192 = vadd.f32 0.0, %v2191
        %v2193 = vpop.f32.mrb[0].mxu0
        %2194 = vmatprep.mubr.bf16.mxu0 0
        %2195 = vmatmul.mubr.bf16.gmra.mrb[0].mxu0 %v2095
        %v2196 = vpop.f32.mrb[0].mxu0
        %v2197 = vadd.f32 0.0, %v2196
        %v2198 = vpop.f32.mrb[0].mxu0
        %v2199 = vpop.f32.mrb[0].mxu0
        %v2200 = vadd.f32 0.0, %v2199
        %v2201 = vpop.f32.mrb[0].mxu0
        %2202 = vmatprep.mubr.bf16.mxu0 0
        %2203 = vmatmul.mubr.bf16.gmra.mrb[0].mxu0 %v2098
        %v2204 = vpop.f32.mrb[0].mxu0
        %v2205 = vadd.f32 0.0, %v2204
        %v2206 = vpop.f32.mrb[0].mxu0
        %v2207 = vpop.f32.mrb[0].mxu0
        %v2208 = vadd.f32 0.0, %v2207
        %v2209 = vpop.f32.mrb[0].mxu0
        %2210 = vmatprep.mubr.bf16.mxu0 0
        %2211 = vmatmul.mubr.bf16.gmra.mrb[0].mxu0 %v2101
        %v2212 = vpop.f32.mrb[0].mxu0
        %v2213 = vadd.f32 0.0, %v2212
        %v2214 = vpop.f32.mrb[0].mxu0
        %v2215 = vpop.f32.mrb[0].mxu0
        %v2216 = vadd.f32 0.0, %v2215
        %v2217 = vpop.f32.mrb[0].mxu0
        %2218 = vmatprep.mubr.bf16.mxu0 0
        %2219 = vmatmul.mubr.bf16.gmra.mrb[0].mxu0 %v2104
        %v2220 = vpop.f32.mrb[0].mxu0
        %v2221 = vadd.f32 0.0, %v2220
        %v2222 = vpop.f32.mrb[0].mxu0
        %v2223 = vpop.f32.mrb[0].mxu0
        %v2224 = vadd.f32 0.0, %v2223
        %v2225 = vpop.f32.mrb[0].mxu0
        %2226 = vdwg.mxu0
        %v2228 = vsel %vm1791, %v1399, 0
        %v2231 = vsel %vm1791, %v1400, 0
        %v2234 = vsel %vm1791, %v1401, 0
        %v2237 = vsel %vm1791, %v1402, 0
        %v2240 = vsel %vm1791, %v1403, 0
        %v2243 = vsel %vm1791, %v1404, 0
        %v2246 = vsel %vm1791, %v1405, 0
        %v2249 = vsel %vm1791, %v1406, 0
        %v2252 = vsel %vm1791, %v1591, 0
        %v2255 = vsel %vm1791, %v1592, 0
        %v2258 = vsel %vm1791, %v1593, 0
        %v2261 = vsel %vm1791, %v1594, 0
        %v2264 = vsel %vm1791, %v1595, 0
        %v2267 = vsel %vm1791, %v1596, 0
        %v2270 = vsel %vm1791, %v1597, 0
        %v2273 = vsel %vm1791, %v1598, 0
        %2275 = vmatprep.subr.bf16.mxu0 0
        %2276 = vmatpush1.bf16.xpose.msra.mxu0 %v2252
        %2277 = vmatprep.subr.bf16.mxu0 0
        %2278 = vmatpush1.bf16.xpose.msra.mxu0 %v2255
        %2279 = vmatprep.subr.bf16.mxu0 0
        %2280 = vmatpush1.bf16.xpose.msra.mxu0 %v2258
        %2281 = vmatprep.subr.bf16.mxu0 0
        %2282 = vmatpush1.bf16.xpose.msra.mxu0 %v2261
        %2283 = vmatprep.subr.bf16.mxu0 0
        %2284 = vmatpush1.bf16.xpose.msra.mxu0 %v2264
        %2285 = vmatprep.subr.bf16.mxu0 0
        %2286 = vmatpush1.bf16.xpose.msra.mxu0 %v2267
        %2287 = vmatprep.subr.bf16.mxu0 0
        %2288 = vmatpush1.bf16.xpose.msra.mxu0 %v2270
        %2289 = vmatprep.subr.bf16.mxu0 0
        %2290 = vmatpush1.bf16.xpose.msra.mxu0 %v2273
        %2291 = vmatprep.subr.bf16.mxu0 0
        %2292 = vmatpush1.bf16.xpose.msra.mxu0 0
        %2293 = vmatprep.subr.bf16.mxu0 0
        %2294 = vmatpush1.bf16.xpose.msra.mxu0 0
        %2295 = vmatprep.subr.bf16.mxu0 0
        %2296 = vmatpush1.bf16.xpose.msra.mxu0 0
        %2297 = vmatprep.subr.bf16.mxu0 0
        %2298 = vmatpush1.bf16.xpose.msra.mxu0 0
        %2299 = vmatprep.subr.bf16.mxu0 0
        %2300 = vmatpush1.bf16.xpose.msra.mxu0 0
        %2301 = vmatprep.subr.bf16.mxu0 0
        %2302 = vmatpush1.bf16.xpose.msra.mxu0 0
        %2303 = vmatprep.subr.bf16.mxu0 0
        %2304 = vmatpush1.bf16.xpose.msra.mxu0 0
        %2305 = vmatprep.subr.bf16.mxu0 0
        %2306 = vmatpush1.bf16.xpose.msra.mxu0 0
        %2307 = vmatprep.mubr.bf16.mxu0 0
        %2308 = vmatmul.mubr.bf16.gmra.mrb[0].mxu0 %v2228
        %v2309 = vpop.f32.mrb[0].mxu0
        %v2310 = vadd.f32 0.0, %v2309
        %v2311 = vpop.f32.mrb[0].mxu0
        %v2312 = vpop.f32.mrb[0].mxu0
        %v2313 = vadd.f32 0.0, %v2312
        %v2314 = vpop.f32.mrb[0].mxu0
        %2315 = vmatprep.mubr.bf16.mxu0 0
        %2316 = vmatmul.mubr.bf16.gmra.mrb[0].mxu0 %v2231
        %v2317 = vpop.f32.mrb[0].mxu0
        %v2318 = vadd.f32 0.0, %v2317
        %v2319 = vpop.f32.mrb[0].mxu0
        %v2320 = vpop.f32.mrb[0].mxu0
        %v2321 = vadd.f32 0.0, %v2320
        %v2322 = vpop.f32.mrb[0].mxu0
        %2323 = vmatprep.mubr.bf16.mxu0 0
        %2324 = vmatmul.mubr.bf16.gmra.mrb[0].mxu0 %v2234
        %v2325 = vpop.f32.mrb[0].mxu0
        %v2326 = vadd.f32 0.0, %v2325
        %v2327 = vpop.f32.mrb[0].mxu0
        %v2328 = vpop.f32.mrb[0].mxu0
        %v2329 = vadd.f32 0.0, %v2328
        %v2330 = vpop.f32.mrb[0].mxu0
        %2331 = vmatprep.mubr.bf16.mxu0 0
        %2332 = vmatmul.mubr.bf16.gmra.mrb[0].mxu0 %v2237
        %v2333 = vpop.f32.mrb[0].mxu0
        %v2334 = vadd.f32 0.0, %v2333
        %v2335 = vpop.f32.mrb[0].mxu0
        %v2336 = vpop.f32.mrb[0].mxu0
        %v2337 = vadd.f32 0.0, %v2336
        %v2338 = vpop.f32.mrb[0].mxu0
        %2339 = vmatprep.mubr.bf16.mxu0 0
        %2340 = vmatmul.mubr.bf16.gmra.mrb[0].mxu0 %v2240
        %v2341 = vpop.f32.mrb[0].mxu0
        %v2342 = vadd.f32 0.0, %v2341
        %v2343 = vpop.f32.mrb[0].mxu0
        %v2344 = vpop.f32.mrb[0].mxu0
        %v2345 = vadd.f32 0.0, %v2344
        %v2346 = vpop.f32.mrb[0].mxu0
        %2347 = vmatprep.mubr.bf16.mxu0 0
        %2348 = vmatmul.mubr.bf16.gmra.mrb[0].mxu0 %v2243
        %v2349 = vpop.f32.mrb[0].mxu0
        %v2350 = vadd.f32 0.0, %v2349
        %v2351 = vpop.f32.mrb[0].mxu0
        %v2352 = vpop.f32.mrb[0].mxu0
        %v2353 = vadd.f32 0.0, %v2352
        %v2354 = vpop.f32.mrb[0].mxu0
        %2355 = vmatprep.mubr.bf16.mxu0 0
        %2356 = vmatmul.mubr.bf16.gmra.mrb[0].mxu0 %v2246
        %v2357 = vpop.f32.mrb[0].mxu0
        %v2358 = vadd.f32 0.0, %v2357
        %v2359 = vpop.f32.mrb[0].mxu0
        %v2360 = vpop.f32.mrb[0].mxu0
        %v2361 = vadd.f32 0.0, %v2360
        %v2362 = vpop.f32.mrb[0].mxu0
        %2363 = vmatprep.mubr.bf16.mxu0 0
        %2364 = vmatmul.mubr.bf16.gmra.mrb[0].mxu0 %v2249
        %v2365 = vpop.f32.mrb[0].mxu0
        %v2366 = vadd.f32 0.0, %v2365
        %v2367 = vpop.f32.mrb[0].mxu0
        %v2368 = vpop.f32.mrb[0].mxu0
        %v2369 = vadd.f32 0.0, %v2368
        %v2370 = vpop.f32.mrb[0].mxu0
        %2371 = vdwg.mxu0
        %v2372 = vmul.f32 %v1875, 0.17677669
        %v2373 = vmul.f32 %v1878, 0.17677669
        %v2374 = vmul.f32 %v1883, 0.17677669
        %v2375 = vmul.f32 %v1886, 0.17677669
        %v2376 = vmul.f32 %v1891, 0.17677669
        %v2377 = vmul.f32 %v1894, 0.17677669
        %v2378 = vmul.f32 %v1899, 0.17677669
        %v2379 = vmul.f32 %v1902, 0.17677669
        %v2380 = vmul.f32 %v1907, 0.17677669
        %v2381 = vmul.f32 %v1910, 0.17677669
        %v2382 = vmul.f32 %v1915, 0.17677669
        %v2383 = vmul.f32 %v1918, 0.17677669
        %v2384 = vmul.f32 %v1923, 0.17677669
        %v2385 = vmul.f32 %v1926, 0.17677669
        %v2386 = vmul.f32 %v1931, 0.17677669
        %v2387 = vmul.f32 %v1934, 0.17677669
        %v2388 = vmul.f32 %v2020, 0.17677669
        %v2389 = vmul.f32 %v2023, 0.17677669
        %v2390 = vmul.f32 %v2028, 0.17677669
        %v2391 = vmul.f32 %v2031, 0.17677669
        %v2392 = vmul.f32 %v2036, 0.17677669
        %v2393 = vmul.f32 %v2039, 0.17677669
        %v2394 = vmul.f32 %v2044, 0.17677669
        %v2395 = vmul.f32 %v2047, 0.17677669
        %v2396 = vmul.f32 %v2052, 0.17677669
        %v2397 = vmul.f32 %v2055, 0.17677669
        %v2398 = vmul.f32 %v2060, 0.17677669
        %v2399 = vmul.f32 %v2063, 0.17677669
        %v2400 = vmul.f32 %v2068, 0.17677669
        %v2401 = vmul.f32 %v2071, 0.17677669
        %v2402 = vmul.f32 %v2076, 0.17677669
        %v2403 = vmul.f32 %v2079, 0.17677669
        %v2404 = vmul.f32 %v2165, 0.17677669
        %v2405 = vmul.f32 %v2168, 0.17677669
        %v2406 = vmul.f32 %v2173, 0.17677669
        %v2407 = vmul.f32 %v2176, 0.17677669
        %v2408 = vmul.f32 %v2181, 0.17677669
        %v2409 = vmul.f32 %v2184, 0.17677669
        %v2410 = vmul.f32 %v2189, 0.17677669
        %v2411 = vmul.f32 %v2192, 0.17677669
        %v2412 = vmul.f32 %v2197, 0.17677669
        %v2413 = vmul.f32 %v2200, 0.17677669
        %v2414 = vmul.f32 %v2205, 0.17677669
        %v2415 = vmul.f32 %v2208, 0.17677669
        %v2416 = vmul.f32 %v2213, 0.17677669
        %v2417 = vmul.f32 %v2216, 0.17677669
        %v2418 = vmul.f32 %v2221, 0.17677669
        %v2419 = vmul.f32 %v2224, 0.17677669
        %v2420 = vmul.f32 %v2310, 0.17677669
        %v2421 = vmul.f32 %v2313, 0.17677669
        %v2422 = vmul.f32 %v2318, 0.17677669
        %v2423 = vmul.f32 %v2321, 0.17677669
        %v2424 = vmul.f32 %v2326, 0.17677669
        %v2425 = vmul.f32 %v2329, 0.17677669
        %v2426 = vmul.f32 %v2334, 0.17677669
        %v2427 = vmul.f32 %v2337, 0.17677669
        %v2428 = vmul.f32 %v2342, 0.17677669
        %v2429 = vmul.f32 %v2345, 0.17677669
        %v2430 = vmul.f32 %v2350, 0.17677669
        %v2431 = vmul.f32 %v2353, 0.17677669
        %v2432 = vmul.f32 %v2358, 0.17677669
        %v2433 = vmul.f32 %v2361, 0.17677669
        %v2434 = vmul.f32 %v2366, 0.17677669
        %v2435 = vmul.f32 %v2369, 0.17677669
        %v2436 = vlaneseq
        %v2437 = vshrl.u32 %v2436, 7
        %v2438 = vadd.s32 %v2437, 8
        %v2439 = vadd.s32 %v2437, 16
        %v2440 = vadd.s32 %v2437, 24
        %v2441 = vadd.s32 %v2437, 32
        %v2442 = vadd.s32 %v2437, 40
        %v2443 = vadd.s32 %v2437, 48
        %v2444 = vadd.s32 %v2437, 56
        %v2445 = vadd.s32 %v2437, 64
        %v2446 = vadd.s32 %v2437, 72
        %v2447 = vadd.s32 %v2437, 80
        %v2448 = vadd.s32 %v2437, 88
        %v2449 = vadd.s32 %v2437, 96
        %v2450 = vadd.s32 %v2437, 104
        %v2451 = vadd.s32 %v2437, 112
        %v2452 = vadd.s32 %v2437, 120
        %v2453 = vlaneseq
        %v2454 = vand.u32 %v2453, 127
        %vm2455 = vcmp.ge.s32.totalorder %v2437, %v2454
        %vm2456 = vcmp.ge.s32.totalorder %v2438, %v2454
        %vm2457 = vcmp.ge.s32.totalorder %v2439, %v2454
        %vm2458 = vcmp.ge.s32.totalorder %v2440, %v2454
        %vm2459 = vcmp.ge.s32.totalorder %v2441, %v2454
        %vm2460 = vcmp.ge.s32.totalorder %v2442, %v2454
        %vm2461 = vcmp.ge.s32.totalorder %v2443, %v2454
        %vm2462 = vcmp.ge.s32.totalorder %v2444, %v2454
        %vm2463 = vcmp.ge.s32.totalorder %v2445, %v2454
        %vm2464 = vcmp.ge.s32.totalorder %v2446, %v2454
        %vm2465 = vcmp.ge.s32.totalorder %v2447, %v2454
        %vm2466 = vcmp.ge.s32.totalorder %v2448, %v2454
        %vm2467 = vcmp.ge.s32.totalorder %v2449, %v2454
        %vm2468 = vcmp.ge.s32.totalorder %v2450, %v2454
        %vm2469 = vcmp.ge.s32.totalorder %v2451, %v2454
        %vm2470 = vcmp.ge.s32.totalorder %v2452, %v2454
        %v2471 = vsel %vm2455, 1, 0
        %v2472 = vsel %vm2456, 1, 0
        %v2473 = vsel %vm2457, 1, 0
        %v2474 = vsel %vm2458, 1, 0
        %v2475 = vsel %vm2459, 1, 0
        %v2476 = vsel %vm2460, 1, 0
        %v2477 = vsel %vm2461, 1, 0
        %v2478 = vsel %vm2462, 1, 0
        %v2479 = vsel %vm2463, 1, 0
        %v2480 = vsel %vm2464, 1, 0
        %v2481 = vsel %vm2465, 1, 0
        %v2482 = vsel %vm2466, 1, 0
        %v2483 = vsel %vm2467, 1, 0
        %v2484 = vsel %vm2468, 1, 0
        %v2485 = vsel %vm2469, 1, 0
        %v2486 = vsel %vm2470, 1, 0
        %vm2487 = vcmp.eq.s32.totalorder %v2471, 1
        %vm2488 = vcmp.eq.s32.totalorder %v2472, 1
        %vm2489 = vcmp.eq.s32.totalorder %v2473, 1
        %vm2490 = vcmp.eq.s32.totalorder %v2474, 1
        %vm2491 = vcmp.eq.s32.totalorder %v2475, 1
        %vm2492 = vcmp.eq.s32.totalorder %v2476, 1
        %vm2493 = vcmp.eq.s32.totalorder %v2477, 1
        %vm2494 = vcmp.eq.s32.totalorder %v2478, 1
        %vm2495 = vcmp.eq.s32.totalorder %v2479, 1
        %vm2496 = vcmp.eq.s32.totalorder %v2480, 1
        %vm2497 = vcmp.eq.s32.totalorder %v2481, 1
        %vm2498 = vcmp.eq.s32.totalorder %v2482, 1
        %vm2499 = vcmp.eq.s32.totalorder %v2483, 1
        %vm2500 = vcmp.eq.s32.totalorder %v2484, 1
        %vm2501 = vcmp.eq.s32.totalorder %v2485, 1
        %vm2502 = vcmp.eq.s32.totalorder %v2486, 1
        %v2503 = vsel %vm2487, %v2372, -1e+10
        %v2504 = vsel %vm2488, %v2373, -1e+10
        %v2505 = vsel %vm2489, %v2374, -1e+10
        %v2506 = vsel %vm2490, %v2375, -1e+10
        %v2507 = vsel %vm2491, %v2376, -1e+10
        %v2508 = vsel %vm2492, %v2377, -1e+10
        %v2509 = vsel %vm2493, %v2378, -1e+10
        %v2510 = vsel %vm2494, %v2379, -1e+10
        %v2511 = vsel %vm2495, %v2380, -1e+10
        %v2512 = vsel %vm2496, %v2381, -1e+10
        %v2513 = vsel %vm2497, %v2382, -1e+10
        %v2514 = vsel %vm2498, %v2383, -1e+10
        %v2515 = vsel %vm2499, %v2384, -1e+10
        %v2516 = vsel %vm2500, %v2385, -1e+10
        %v2517 = vsel %vm2501, %v2386, -1e+10
        %v2518 = vsel %vm2502, %v2387, -1e+10
        %v2519 = vsel %vm2487, %v2388, -1e+10
        %v2520 = vsel %vm2488, %v2389, -1e+10
        %v2521 = vsel %vm2489, %v2390, -1e+10
        %v2522 = vsel %vm2490, %v2391, -1e+10
        %v2523 = vsel %vm2491, %v2392, -1e+10
        %v2524 = vsel %vm2492, %v2393, -1e+10
        %v2525 = vsel %vm2493, %v2394, -1e+10
        %v2526 = vsel %vm2494, %v2395, -1e+10
        %v2527 = vsel %vm2495, %v2396, -1e+10
        %v2528 = vsel %vm2496, %v2397, -1e+10
        %v2529 = vsel %vm2497, %v2398, -1e+10
        %v2530 = vsel %vm2498, %v2399, -1e+10
        %v2531 = vsel %vm2499, %v2400, -1e+10
        %v2532 = vsel %vm2500, %v2401, -1e+10
        %v2533 = vsel %vm2501, %v2402, -1e+10
        %v2534 = vsel %vm2502, %v2403, -1e+10
        %v2535 = vsel %vm2487, %v2404, -1e+10
        %v2536 = vsel %vm2488, %v2405, -1e+10
        %v2537 = vsel %vm2489, %v2406, -1e+10
        %v2538 = vsel %vm2490, %v2407, -1e+10
        %v2539 = vsel %vm2491, %v2408, -1e+10
        %v2540 = vsel %vm2492, %v2409, -1e+10
        %v2541 = vsel %vm2493, %v2410, -1e+10
        %v2542 = vsel %vm2494, %v2411, -1e+10
        %v2543 = vsel %vm2495, %v2412, -1e+10
        %v2544 = vsel %vm2496, %v2413, -1e+10
        %v2545 = vsel %vm2497, %v2414, -1e+10
        %v2546 = vsel %vm2498, %v2415, -1e+10
        %v2547 = vsel %vm2499, %v2416, -1e+10
        %v2548 = vsel %vm2500, %v2417, -1e+10
        %v2549 = vsel %vm2501, %v2418, -1e+10
        %v2550 = vsel %vm2502, %v2419, -1e+10
        %v2551 = vsel %vm2487, %v2420, -1e+10
        %v2552 = vsel %vm2488, %v2421, -1e+10
        %v2553 = vsel %vm2489, %v2422, -1e+10
        %v2554 = vsel %vm2490, %v2423, -1e+10
        %v2555 = vsel %vm2491, %v2424, -1e+10
        %v2556 = vsel %vm2492, %v2425, -1e+10
        %v2557 = vsel %vm2493, %v2426, -1e+10
        %v2558 = vsel %vm2494, %v2427, -1e+10
        %v2559 = vsel %vm2495, %v2428, -1e+10
        %v2560 = vsel %vm2496, %v2429, -1e+10
        %v2561 = vsel %vm2497, %v2430, -1e+10
        %v2562 = vsel %vm2498, %v2431, -1e+10
        %v2563 = vsel %vm2499, %v2432, -1e+10
        %v2564 = vsel %vm2500, %v2433, -1e+10
        %v2565 = vsel %vm2501, %v2434, -1e+10
        %v2566 = vsel %vm2502, %v2435, -1e+10
        %2567 = vmax.xlane.f32.xlu0 %v2503
        %v2568 = vpop.xlane.xlu0 %2567
        %2569 = vmax.xlane.f32.xlu0 %v2504
        %v2570 = vpop.xlane.xlu0 %2569
        %2571 = vmax.xlane.f32.xlu0 %v2505
        %v2572 = vpop.xlane.xlu0 %2571
        %2573 = vmax.xlane.f32.xlu0 %v2506
        %v2574 = vpop.xlane.xlu0 %2573
        %2575 = vmax.xlane.f32.xlu0 %v2507
        %v2576 = vpop.xlane.xlu0 %2575
        %2577 = vmax.xlane.f32.xlu0 %v2508
        %v2578 = vpop.xlane.xlu0 %2577
        %2579 = vmax.xlane.f32.xlu0 %v2509
        %v2580 = vpop.xlane.xlu0 %2579
        %2581 = vmax.xlane.f32.xlu0 %v2510
        %v2582 = vpop.xlane.xlu0 %2581
        %2583 = vmax.xlane.f32.xlu0 %v2511
        %v2584 = vpop.xlane.xlu0 %2583
        %2585 = vmax.xlane.f32.xlu0 %v2512
        %v2586 = vpop.xlane.xlu0 %2585
        %2587 = vmax.xlane.f32.xlu0 %v2513
        %v2588 = vpop.xlane.xlu0 %2587
        %2589 = vmax.xlane.f32.xlu0 %v2514
        %v2590 = vpop.xlane.xlu0 %2589
        %2591 = vmax.xlane.f32.xlu0 %v2515
        %v2592 = vpop.xlane.xlu0 %2591
        %2593 = vmax.xlane.f32.xlu0 %v2516
        %v2594 = vpop.xlane.xlu0 %2593
        %2595 = vmax.xlane.f32.xlu0 %v2517
        %v2596 = vpop.xlane.xlu0 %2595
        %2597 = vmax.xlane.f32.xlu0 %v2518
        %v2598 = vpop.xlane.xlu0 %2597
        %2599 = vmax.xlane.f32.xlu0 %v2519
        %v2600 = vpop.xlane.xlu0 %2599
        %2601 = vmax.xlane.f32.xlu0 %v2520
        %v2602 = vpop.xlane.xlu0 %2601
        %2603 = vmax.xlane.f32.xlu0 %v2521
        %v2604 = vpop.xlane.xlu0 %2603
        %2605 = vmax.xlane.f32.xlu0 %v2522
        %v2606 = vpop.xlane.xlu0 %2605
        %2607 = vmax.xlane.f32.xlu0 %v2523
        %v2608 = vpop.xlane.xlu0 %2607
        %2609 = vmax.xlane.f32.xlu0 %v2524
        %v2610 = vpop.xlane.xlu0 %2609
        %2611 = vmax.xlane.f32.xlu0 %v2525
        %v2612 = vpop.xlane.xlu0 %2611
        %2613 = vmax.xlane.f32.xlu0 %v2526
        %v2614 = vpop.xlane.xlu0 %2613
        %2615 = vmax.xlane.f32.xlu0 %v2527
        %v2616 = vpop.xlane.xlu0 %2615
        %2617 = vmax.xlane.f32.xlu0 %v2528
        %v2618 = vpop.xlane.xlu0 %2617
        %2619 = vmax.xlane.f32.xlu0 %v2529
        %v2620 = vpop.xlane.xlu0 %2619
        %2621 = vmax.xlane.f32.xlu0 %v2530
        %v2622 = vpop.xlane.xlu0 %2621
        %2623 = vmax.xlane.f32.xlu0 %v2531
        %v2624 = vpop.xlane.xlu0 %2623
        %2625 = vmax.xlane.f32.xlu0 %v2532
        %v2626 = vpop.xlane.xlu0 %2625
        %2627 = vmax.xlane.f32.xlu0 %v2533
        %v2628 = vpop.xlane.xlu0 %2627
        %2629 = vmax.xlane.f32.xlu0 %v2534
        %v2630 = vpop.xlane.xlu0 %2629
        %2631 = vmax.xlane.f32.xlu0 %v2535
        %v2632 = vpop.xlane.xlu0 %2631
        %2633 = vmax.xlane.f32.xlu0 %v2536
        %v2634 = vpop.xlane.xlu0 %2633
        %2635 = vmax.xlane.f32.xlu0 %v2537
        %v2636 = vpop.xlane.xlu0 %2635
        %2637 = vmax.xlane.f32.xlu0 %v2538
        %v2638 = vpop.xlane.xlu0 %2637
        %2639 = vmax.xlane.f32.xlu0 %v2539
        %v2640 = vpop.xlane.xlu0 %2639
        %2641 = vmax.xlane.f32.xlu0 %v2540
        %v2642 = vpop.xlane.xlu0 %2641
        %2643 = vmax.xlane.f32.xlu0 %v2541
        %v2644 = vpop.xlane.xlu0 %2643
        %2645 = vmax.xlane.f32.xlu0 %v2542
        %v2646 = vpop.xlane.xlu0 %2645
        %2647 = vmax.xlane.f32.xlu0 %v2543
        %v2648 = vpop.xlane.xlu0 %2647
        %2649 = vmax.xlane.f32.xlu0 %v2544
        %v2650 = vpop.xlane.xlu0 %2649
        %2651 = vmax.xlane.f32.xlu0 %v2545
        %v2652 = vpop.xlane.xlu0 %2651
        %2653 = vmax.xlane.f32.xlu0 %v2546
        %v2654 = vpop.xlane.xlu0 %2653
        %2655 = vmax.xlane.f32.xlu0 %v2547
        %v2656 = vpop.xlane.xlu0 %2655
        %2657 = vmax.xlane.f32.xlu0 %v2548
        %v2658 = vpop.xlane.xlu0 %2657
        %2659 = vmax.xlane.f32.xlu0 %v2549
        %v2660 = vpop.xlane.xlu0 %2659
        %2661 = vmax.xlane.f32.xlu0 %v2550
        %v2662 = vpop.xlane.xlu0 %2661
        %2663 = vmax.xlane.f32.xlu0 %v2551
        %v2664 = vpop.xlane.xlu0 %2663
        %2665 = vmax.xlane.f32.xlu0 %v2552
        %v2666 = vpop.xlane.xlu0 %2665
        %2667 = vmax.xlane.f32.xlu0 %v2553
        %v2668 = vpop.xlane.xlu0 %2667
        %2669 = vmax.xlane.f32.xlu0 %v2554
        %v2670 = vpop.xlane.xlu0 %2669
        %2671 = vmax.xlane.f32.xlu0 %v2555
        %v2672 = vpop.xlane.xlu0 %2671
        %2673 = vmax.xlane.f32.xlu0 %v2556
        %v2674 = vpop.xlane.xlu0 %2673
        %2675 = vmax.xlane.f32.xlu0 %v2557
        %v2676 = vpop.xlane.xlu0 %2675
        %2677 = vmax.xlane.f32.xlu0 %v2558
        %v2678 = vpop.xlane.xlu0 %2677
        %2679 = vmax.xlane.f32.xlu0 %v2559
        %v2680 = vpop.xlane.xlu0 %2679
        %2681 = vmax.xlane.f32.xlu0 %v2560
        %v2682 = vpop.xlane.xlu0 %2681
        %2683 = vmax.xlane.f32.xlu0 %v2561
        %v2684 = vpop.xlane.xlu0 %2683
        %2685 = vmax.xlane.f32.xlu0 %v2562
        %v2686 = vpop.xlane.xlu0 %2685
        %2687 = vmax.xlane.f32.xlu0 %v2563
        %v2688 = vpop.xlane.xlu0 %2687
        %2689 = vmax.xlane.f32.xlu0 %v2564
        %v2690 = vpop.xlane.xlu0 %2689
        %2691 = vmax.xlane.f32.xlu0 %v2565
        %v2692 = vpop.xlane.xlu0 %2691
        %2693 = vmax.xlane.f32.xlu0 %v2566
        %v2694 = vpop.xlane.xlu0 %2693
        %v2695 = vsub.f32 %v2503, %v2568
        %v2696 = vsub.f32 %v2504, %v2570
        %v2697 = vsub.f32 %v2505, %v2572
        %v2698 = vsub.f32 %v2506, %v2574
        %v2699 = vsub.f32 %v2507, %v2576
        %v2700 = vsub.f32 %v2508, %v2578
        %v2701 = vsub.f32 %v2509, %v2580
        %v2702 = vsub.f32 %v2510, %v2582
        %v2703 = vsub.f32 %v2511, %v2584
        %v2704 = vsub.f32 %v2512, %v2586
        %v2705 = vsub.f32 %v2513, %v2588
        %v2706 = vsub.f32 %v2514, %v2590
        %v2707 = vsub.f32 %v2515, %v2592
        %v2708 = vsub.f32 %v2516, %v2594
        %v2709 = vsub.f32 %v2517, %v2596
        %v2710 = vsub.f32 %v2518, %v2598
        %v2711 = vsub.f32 %v2519, %v2600
        %v2712 = vsub.f32 %v2520, %v2602
        %v2713 = vsub.f32 %v2521, %v2604
        %v2714 = vsub.f32 %v2522, %v2606
        %v2715 = vsub.f32 %v2523, %v2608
        %v2716 = vsub.f32 %v2524, %v2610
        %v2717 = vsub.f32 %v2525, %v2612
        %v2718 = vsub.f32 %v2526, %v2614
        %v2719 = vsub.f32 %v2527, %v2616
        %v2720 = vsub.f32 %v2528, %v2618
        %v2721 = vsub.f32 %v2529, %v2620
        %v2722 = vsub.f32 %v2530, %v2622
        %v2723 = vsub.f32 %v2531, %v2624
        %v2724 = vsub.f32 %v2532, %v2626
        %v2725 = vsub.f32 %v2533, %v2628
        %v2726 = vsub.f32 %v2534, %v2630
        %v2727 = vsub.f32 %v2535, %v2632
        %v2728 = vsub.f32 %v2536, %v2634
        %v2729 = vsub.f32 %v2537, %v2636
        %v2730 = vsub.f32 %v2538, %v2638
        %v2731 = vsub.f32 %v2539, %v2640
        %v2732 = vsub.f32 %v2540, %v2642
        %v2733 = vsub.f32 %v2541, %v2644
        %v2734 = vsub.f32 %v2542, %v2646
        %v2735 = vsub.f32 %v2543, %v2648
        %v2736 = vsub.f32 %v2544, %v2650
        %v2737 = vsub.f32 %v2545, %v2652
        %v2738 = vsub.f32 %v2546, %v2654
        %v2739 = vsub.f32 %v2547, %v2656
        %v2740 = vsub.f32 %v2548, %v2658
        %v2741 = vsub.f32 %v2549, %v2660
        %v2742 = vsub.f32 %v2550, %v2662
        %v2743 = vsub.f32 %v2551, %v2664
        %v2744 = vsub.f32 %v2552, %v2666
        %v2745 = vsub.f32 %v2553, %v2668
        %v2746 = vsub.f32 %v2554, %v2670
        %v2747 = vsub.f32 %v2555, %v2672
        %v2748 = vsub.f32 %v2556, %v2674
        %v2749 = vsub.f32 %v2557, %v2676
        %v2750 = vsub.f32 %v2558, %v2678
        %v2751 = vsub.f32 %v2559, %v2680
        %v2752 = vsub.f32 %v2560, %v2682
        %v2753 = vsub.f32 %v2561, %v2684
        %v2754 = vsub.f32 %v2562, %v2686
        %v2755 = vsub.f32 %v2563, %v2688
        %v2756 = vsub.f32 %v2564, %v2690
        %v2757 = vsub.f32 %v2565, %v2692
        %v2758 = vsub.f32 %v2566, %v2694
        %v2759 = vmul.f32 %v2695, 1.442695
        %v2760 = vpow.pop %v2759
        %v2761 = vmul.f32 %v2696, 1.442695
        %v2762 = vpow.pop %v2761
        %v2763 = vmul.f32 %v2697, 1.442695
        %v2764 = vpow.pop %v2763
        %v2765 = vmul.f32 %v2698, 1.442695
        %v2766 = vpow.pop %v2765
        %v2767 = vmul.f32 %v2699, 1.442695
        %v2768 = vpow.pop %v2767
        %v2769 = vmul.f32 %v2700, 1.442695
        %v2770 = vpow.pop %v2769
        %v2771 = vmul.f32 %v2701, 1.442695
        %v2772 = vpow.pop %v2771
        %v2773 = vmul.f32 %v2702, 1.442695
        %v2774 = vpow.pop %v2773
        %v2775 = vmul.f32 %v2703, 1.442695
        %v2776 = vpow.pop %v2775
        %v2777 = vmul.f32 %v2704, 1.442695
        %v2778 = vpow.pop %v2777
        %v2779 = vmul.f32 %v2705, 1.442695
        %v2780 = vpow.pop %v2779
        %v2781 = vmul.f32 %v2706, 1.442695
        %v2782 = vpow.pop %v2781
        %v2783 = vmul.f32 %v2707, 1.442695
        %v2784 = vpow.pop %v2783
        %v2785 = vmul.f32 %v2708, 1.442695
        %v2786 = vpow.pop %v2785
        %v2787 = vmul.f32 %v2709, 1.442695
        %v2788 = vpow.pop %v2787
        %v2789 = vmul.f32 %v2710, 1.442695
        %v2790 = vpow.pop %v2789
        %v2791 = vmul.f32 %v2711, 1.442695
        %v2792 = vpow.pop %v2791
        %v2793 = vmul.f32 %v2712, 1.442695
        %v2794 = vpow.pop %v2793
        %v2795 = vmul.f32 %v2713, 1.442695
        %v2796 = vpow.pop %v2795
        %v2797 = vmul.f32 %v2714, 1.442695
        %v2798 = vpow.pop %v2797
        %v2799 = vmul.f32 %v2715, 1.442695
        %v2800 = vpow.pop %v2799
        %v2801 = vmul.f32 %v2716, 1.442695
        %v2802 = vpow.pop %v2801
        %v2803 = vmul.f32 %v2717, 1.442695
        %v2804 = vpow.pop %v2803
        %v2805 = vmul.f32 %v2718, 1.442695
        %v2806 = vpow.pop %v2805
        %v2807 = vmul.f32 %v2719, 1.442695
        %v2808 = vpow.pop %v2807
        %v2809 = vmul.f32 %v2720, 1.442695
        %v2810 = vpow.pop %v2809
        %v2811 = vmul.f32 %v2721, 1.442695
        %v2812 = vpow.pop %v2811
        %v2813 = vmul.f32 %v2722, 1.442695
        %v2814 = vpow.pop %v2813
        %v2815 = vmul.f32 %v2723, 1.442695
        %v2816 = vpow.pop %v2815
        %v2817 = vmul.f32 %v2724, 1.442695
        %v2818 = vpow.pop %v2817
        %v2819 = vmul.f32 %v2725, 1.442695
        %v2820 = vpow.pop %v2819
        %v2821 = vmul.f32 %v2726, 1.442695
        %v2822 = vpow.pop %v2821
        %v2823 = vmul.f32 %v2727, 1.442695
        %v2824 = vpow.pop %v2823
        %v2825 = vmul.f32 %v2728, 1.442695
        %v2826 = vpow.pop %v2825
        %v2827 = vmul.f32 %v2729, 1.442695
        %v2828 = vpow.pop %v2827
        %v2829 = vmul.f32 %v2730, 1.442695
        %v2830 = vpow.pop %v2829
        %v2831 = vmul.f32 %v2731, 1.442695
        %v2832 = vpow.pop %v2831
        %v2833 = vmul.f32 %v2732, 1.442695
        %v2834 = vpow.pop %v2833
        %v2835 = vmul.f32 %v2733, 1.442695
        %v2836 = vpow.pop %v2835
        %v2837 = vmul.f32 %v2734, 1.442695
        %v2838 = vpow.pop %v2837
        %v2839 = vmul.f32 %v2735, 1.442695
        %v2840 = vpow.pop %v2839
        %v2841 = vmul.f32 %v2736, 1.442695
        %v2842 = vpow.pop %v2841
        %v2843 = vmul.f32 %v2737, 1.442695
        %v2844 = vpow.pop %v2843
        %v2845 = vmul.f32 %v2738, 1.442695
        %v2846 = vpow.pop %v2845
        %v2847 = vmul.f32 %v2739, 1.442695
        %v2848 = vpow.pop %v2847
        %v2849 = vmul.f32 %v2740, 1.442695
        %v2850 = vpow.pop %v2849
        %v2851 = vmul.f32 %v2741, 1.442695
        %v2852 = vpow.pop %v2851
        %v2853 = vmul.f32 %v2742, 1.442695
        %v2854 = vpow.pop %v2853
        %v2855 = vmul.f32 %v2743, 1.442695
        %v2856 = vpow.pop %v2855
        %v2857 = vmul.f32 %v2744, 1.442695
        %v2858 = vpow.pop %v2857
        %v2859 = vmul.f32 %v2745, 1.442695
        %v2860 = vpow.pop %v2859
        %v2861 = vmul.f32 %v2746, 1.442695
        %v2862 = vpow.pop %v2861
        %v2863 = vmul.f32 %v2747, 1.442695
        %v2864 = vpow.pop %v2863
        %v2865 = vmul.f32 %v2748, 1.442695
        %v2866 = vpow.pop %v2865
        %v2867 = vmul.f32 %v2749, 1.442695
        %v2868 = vpow.pop %v2867
        %v2869 = vmul.f32 %v2750, 1.442695
        %v2870 = vpow.pop %v2869
        %v2871 = vmul.f32 %v2751, 1.442695
        %v2872 = vpow.pop %v2871
        %v2873 = vmul.f32 %v2752, 1.442695
        %v2874 = vpow.pop %v2873
        %v2875 = vmul.f32 %v2753, 1.442695
        %v2876 = vpow.pop %v2875
        %v2877 = vmul.f32 %v2754, 1.442695
        %v2878 = vpow.pop %v2877
        %v2879 = vmul.f32 %v2755, 1.442695
        %v2880 = vpow.pop %v2879
        %v2881 = vmul.f32 %v2756, 1.442695
        %v2882 = vpow.pop %v2881
        %v2883 = vmul.f32 %v2757, 1.442695
        %v2884 = vpow.pop %v2883
        %v2885 = vmul.f32 %v2758, 1.442695
        %v2886 = vpow.pop %v2885
        %2887 = vadd.xlane.f32.xlu0 %v2760
        %v2888 = vpop.xlane.xlu0 %2887
        %2889 = vadd.xlane.f32.xlu0 %v2762
        %v2890 = vpop.xlane.xlu0 %2889
        %2891 = vadd.xlane.f32.xlu0 %v2764
        %v2892 = vpop.xlane.xlu0 %2891
        %2893 = vadd.xlane.f32.xlu0 %v2766
        %v2894 = vpop.xlane.xlu0 %2893
        %2895 = vadd.xlane.f32.xlu0 %v2768
        %v2896 = vpop.xlane.xlu0 %2895
        %2897 = vadd.xlane.f32.xlu0 %v2770
        %v2898 = vpop.xlane.xlu0 %2897
        %2899 = vadd.xlane.f32.xlu0 %v2772
        %v2900 = vpop.xlane.xlu0 %2899
        %2901 = vadd.xlane.f32.xlu0 %v2774
        %v2902 = vpop.xlane.xlu0 %2901
        %2903 = vadd.xlane.f32.xlu0 %v2776
        %v2904 = vpop.xlane.xlu0 %2903
        %2905 = vadd.xlane.f32.xlu0 %v2778
        %v2906 = vpop.xlane.xlu0 %2905
        %2907 = vadd.xlane.f32.xlu0 %v2780
        %v2908 = vpop.xlane.xlu0 %2907
        %2909 = vadd.xlane.f32.xlu0 %v2782
        %v2910 = vpop.xlane.xlu0 %2909
        %2911 = vadd.xlane.f32.xlu0 %v2784
        %v2912 = vpop.xlane.xlu0 %2911
        %2913 = vadd.xlane.f32.xlu0 %v2786
        %v2914 = vpop.xlane.xlu0 %2913
        %2915 = vadd.xlane.f32.xlu0 %v2788
        %v2916 = vpop.xlane.xlu0 %2915
        %2917 = vadd.xlane.f32.xlu0 %v2790
        %v2918 = vpop.xlane.xlu0 %2917
        %2919 = vadd.xlane.f32.xlu0 %v2792
        %v2920 = vpop.xlane.xlu0 %2919
        %2921 = vadd.xlane.f32.xlu0 %v2794
        %v2922 = vpop.xlane.xlu0 %2921
        %2923 = vadd.xlane.f32.xlu0 %v2796
        %v2924 = vpop.xlane.xlu0 %2923
        %2925 = vadd.xlane.f32.xlu0 %v2798
        %v2926 = vpop.xlane.xlu0 %2925
        %2927 = vadd.xlane.f32.xlu0 %v2800
        %v2928 = vpop.xlane.xlu0 %2927
        %2929 = vadd.xlane.f32.xlu0 %v2802
        %v2930 = vpop.xlane.xlu0 %2929
        %2931 = vadd.xlane.f32.xlu0 %v2804
        %v2932 = vpop.xlane.xlu0 %2931
        %2933 = vadd.xlane.f32.xlu0 %v2806
        %v2934 = vpop.xlane.xlu0 %2933
        %2935 = vadd.xlane.f32.xlu0 %v2808
        %v2936 = vpop.xlane.xlu0 %2935
        %2937 = vadd.xlane.f32.xlu0 %v2810
        %v2938 = vpop.xlane.xlu0 %2937
        %2939 = vadd.xlane.f32.xlu0 %v2812
        %v2940 = vpop.xlane.xlu0 %2939
        %2941 = vadd.xlane.f32.xlu0 %v2814
        %v2942 = vpop.xlane.xlu0 %2941
        %2943 = vadd.xlane.f32.xlu0 %v2816
        %v2944 = vpop.xlane.xlu0 %2943
        %2945 = vadd.xlane.f32.xlu0 %v2818
        %v2946 = vpop.xlane.xlu0 %2945
        %2947 = vadd.xlane.f32.xlu0 %v2820
        %v2948 = vpop.xlane.xlu0 %2947
        %2949 = vadd.xlane.f32.xlu0 %v2822
        %v2950 = vpop.xlane.xlu0 %2949
        %2951 = vadd.xlane.f32.xlu0 %v2824
        %v2952 = vpop.xlane.xlu0 %2951
        %2953 = vadd.xlane.f32.xlu0 %v2826
        %v2954 = vpop.xlane.xlu0 %2953
        %2955 = vadd.xlane.f32.xlu0 %v2828
        %v2956 = vpop.xlane.xlu0 %2955
        %2957 = vadd.xlane.f32.xlu0 %v2830
        %v2958 = vpop.xlane.xlu0 %2957
        %2959 = vadd.xlane.f32.xlu0 %v2832
        %v2960 = vpop.xlane.xlu0 %2959
        %2961 = vadd.xlane.f32.xlu0 %v2834
        %v2962 = vpop.xlane.xlu0 %2961
        %2963 = vadd.xlane.f32.xlu0 %v2836
        %v2964 = vpop.xlane.xlu0 %2963
        %2965 = vadd.xlane.f32.xlu0 %v2838
        %v2966 = vpop.xlane.xlu0 %2965
        %2967 = vadd.xlane.f32.xlu0 %v2840
        %v2968 = vpop.xlane.xlu0 %2967
        %2969 = vadd.xlane.f32.xlu0 %v2842
        %v2970 = vpop.xlane.xlu0 %2969
        %2971 = vadd.xlane.f32.xlu0 %v2844
        %v2972 = vpop.xlane.xlu0 %2971
        %2973 = vadd.xlane.f32.xlu0 %v2846
        %v2974 = vpop.xlane.xlu0 %2973
        %2975 = vadd.xlane.f32.xlu0 %v2848
        %v2976 = vpop.xlane.xlu0 %2975
        %2977 = vadd.xlane.f32.xlu0 %v2850
        %v2978 = vpop.xlane.xlu0 %2977
        %2979 = vadd.xlane.f32.xlu0 %v2852
        %v2980 = vpop.xlane.xlu0 %2979
        %2981 = vadd.xlane.f32.xlu0 %v2854
        %v2982 = vpop.xlane.xlu0 %2981
        %2983 = vadd.xlane.f32.xlu0 %v2856
        %v2984 = vpop.xlane.xlu0 %2983
        %2985 = vadd.xlane.f32.xlu0 %v2858
        %v2986 = vpop.xlane.xlu0 %2985
        %2987 = vadd.xlane.f32.xlu0 %v2860
        %v2988 = vpop.xlane.xlu0 %2987
        %2989 = vadd.xlane.f32.xlu0 %v2862
        %v2990 = vpop.xlane.xlu0 %2989
        %2991 = vadd.xlane.f32.xlu0 %v2864
        %v2992 = vpop.xlane.xlu0 %2991
        %2993 = vadd.xlane.f32.xlu0 %v2866
        %v2994 = vpop.xlane.xlu0 %2993
        %2995 = vadd.xlane.f32.xlu0 %v2868
        %v2996 = vpop.xlane.xlu0 %2995
        %2997 = vadd.xlane.f32.xlu0 %v2870
        %v2998 = vpop.xlane.xlu0 %2997
        %2999 = vadd.xlane.f32.xlu0 %v2872
        %v3000 = vpop.xlane.xlu0 %2999
        %3001 = vadd.xlane.f32.xlu0 %v2874
        %v3002 = vpop.xlane.xlu0 %3001
        %3003 = vadd.xlane.f32.xlu0 %v2876
        %v3004 = vpop.xlane.xlu0 %3003
        %3005 = vadd.xlane.f32.xlu0 %v2878
        %v3006 = vpop.xlane.xlu0 %3005
        %3007 = vadd.xlane.f32.xlu0 %v2880
        %v3008 = vpop.xlane.xlu0 %3007
        %3009 = vadd.xlane.f32.xlu0 %v2882
        %v3010 = vpop.xlane.xlu0 %3009
        %3011 = vadd.xlane.f32.xlu0 %v2884
        %v3012 = vpop.xlane.xlu0 %3011
        %3013 = vadd.xlane.f32.xlu0 %v2886
        %v3014 = vpop.xlane.xlu0 %3013
        %v3015 = vrcp.pop %v2888
        %v3016 = vrcp.pop %v2890
        %v3017 = vrcp.pop %v2892
        %v3018 = vrcp.pop %v2894
        %v3019 = vrcp.pop %v2896
        %v3020 = vrcp.pop %v2898
        %v3021 = vrcp.pop %v2900
        %v3022 = vrcp.pop %v2902
        %v3023 = vrcp.pop %v2904
        %v3024 = vrcp.pop %v2906
        %v3025 = vrcp.pop %v2908
        %v3026 = vrcp.pop %v2910
        %v3027 = vrcp.pop %v2912
        %v3028 = vrcp.pop %v2914
        %v3029 = vrcp.pop %v2916
        %v3030 = vrcp.pop %v2918
        %v3031 = vrcp.pop %v2920
        %v3032 = vrcp.pop %v2922
        %v3033 = vrcp.pop %v2924
        %v3034 = vrcp.pop %v2926
        %v3035 = vrcp.pop %v2928
        %v3036 = vrcp.pop %v2930
        %v3037 = vrcp.pop %v2932
        %v3038 = vrcp.pop %v2934
        %v3039 = vrcp.pop %v2936
        %v3040 = vrcp.pop %v2938
        %v3041 = vrcp.pop %v2940
        %v3042 = vrcp.pop %v2942
        %v3043 = vrcp.pop %v2944
        %v3044 = vrcp.pop %v2946
        %v3045 = vrcp.pop %v2948
        %v3046 = vrcp.pop %v2950
        %v3047 = vrcp.pop %v2952
        %v3048 = vrcp.pop %v2954
        %v3049 = vrcp.pop %v2956
        %v3050 = vrcp.pop %v2958
        %v3051 = vrcp.pop %v2960
        %v3052 = vrcp.pop %v2962
        %v3053 = vrcp.pop %v2964
        %v3054 = vrcp.pop %v2966
        %v3055 = vrcp.pop %v2968
        %v3056 = vrcp.pop %v2970
        %v3057 = vrcp.pop %v2972
        %v3058 = vrcp.pop %v2974
        %v3059 = vrcp.pop %v2976
        %v3060 = vrcp.pop %v2978
        %v3061 = vrcp.pop %v2980
        %v3062 = vrcp.pop %v2982
        %v3063 = vrcp.pop %v2984
        %v3064 = vrcp.pop %v2986
        %v3065 = vrcp.pop %v2988
        %v3066 = vrcp.pop %v2990
        %v3067 = vrcp.pop %v2992
        %v3068 = vrcp.pop %v2994
        %v3069 = vrcp.pop %v2996
        %v3070 = vrcp.pop %v2998
        %v3071 = vrcp.pop %v3000
        %v3072 = vrcp.pop %v3002
        %v3073 = vrcp.pop %v3004
        %v3074 = vrcp.pop %v3006
        %v3075 = vrcp.pop %v3008
        %v3076 = vrcp.pop %v3010
        %v3077 = vrcp.pop %v3012
        %v3078 = vrcp.pop %v3014
        %v3079 = vmul.f32 %v2760, %v3015
        %v3080 = vmul.f32 %v2762, %v3016
        %v3081 = vmul.f32 %v2764, %v3017
        %v3082 = vmul.f32 %v2766, %v3018
        %v3083 = vmul.f32 %v2768, %v3019
        %v3084 = vmul.f32 %v2770, %v3020
        %v3085 = vmul.f32 %v2772, %v3021
        %v3086 = vmul.f32 %v2774, %v3022
        %v3087 = vmul.f32 %v2776, %v3023
        %v3088 = vmul.f32 %v2778, %v3024
        %v3089 = vmul.f32 %v2780, %v3025
        %v3090 = vmul.f32 %v2782, %v3026
        %v3091 = vmul.f32 %v2784, %v3027
        %v3092 = vmul.f32 %v2786, %v3028
        %v3093 = vmul.f32 %v2788, %v3029
        %v3094 = vmul.f32 %v2790, %v3030
        %v3095 = vmul.f32 %v2792, %v3031
        %v3096 = vmul.f32 %v2794, %v3032
        %v3097 = vmul.f32 %v2796, %v3033
        %v3098 = vmul.f32 %v2798, %v3034
        %v3099 = vmul.f32 %v2800, %v3035
        %v3100 = vmul.f32 %v2802, %v3036
        %v3101 = vmul.f32 %v2804, %v3037
        %v3102 = vmul.f32 %v2806, %v3038
        %v3103 = vmul.f32 %v2808, %v3039
        %v3104 = vmul.f32 %v2810, %v3040
        %v3105 = vmul.f32 %v2812, %v3041
        %v3106 = vmul.f32 %v2814, %v3042
        %v3107 = vmul.f32 %v2816, %v3043
        %v3108 = vmul.f32 %v2818, %v3044
        %v3109 = vmul.f32 %v2820, %v3045
        %v3110 = vmul.f32 %v2822, %v3046
        %v3111 = vmul.f32 %v2824, %v3047
        %v3112 = vmul.f32 %v2826, %v3048
        %v3113 = vmul.f32 %v2828, %v3049
        %v3114 = vmul.f32 %v2830, %v3050
        %v3115 = vmul.f32 %v2832, %v3051
        %v3116 = vmul.f32 %v2834, %v3052
        %v3117 = vmul.f32 %v2836, %v3053
        %v3118 = vmul.f32 %v2838, %v3054
        %v3119 = vmul.f32 %v2840, %v3055
        %v3120 = vmul.f32 %v2842, %v3056
        %v3121 = vmul.f32 %v2844, %v3057
        %v3122 = vmul.f32 %v2846, %v3058
        %v3123 = vmul.f32 %v2848, %v3059
        %v3124 = vmul.f32 %v2850, %v3060
        %v3125 = vmul.f32 %v2852, %v3061
        %v3126 = vmul.f32 %v2854, %v3062
        %v3127 = vmul.f32 %v2856, %v3063
        %v3128 = vmul.f32 %v2858, %v3064
        %v3129 = vmul.f32 %v2860, %v3065
        %v3130 = vmul.f32 %v2862, %v3066
        %v3131 = vmul.f32 %v2864, %v3067
        %v3132 = vmul.f32 %v2866, %v3068
        %v3133 = vmul.f32 %v2868, %v3069
        %v3134 = vmul.f32 %v2870, %v3070
        %v3135 = vmul.f32 %v2872, %v3071
        %v3136 = vmul.f32 %v2874, %v3072
        %v3137 = vmul.f32 %v2876, %v3073
        %v3138 = vmul.f32 %v2878, %v3074
        %v3139 = vmul.f32 %v2880, %v3075
        %v3140 = vmul.f32 %v2882, %v3076
        %v3141 = vmul.f32 %v2884, %v3077
        %v3142 = vmul.f32 %v2886, %v3078
        %v3143 = vpack.c.bf16 %v3080, %v3079
        %v3144 = vpack.c.bf16 %v3082, %v3081
        %v3145 = vpack.c.bf16 %v3084, %v3083
        %v3146 = vpack.c.bf16 %v3086, %v3085
        %v3147 = vpack.c.bf16 %v3088, %v3087
        %v3148 = vpack.c.bf16 %v3090, %v3089
        %v3149 = vpack.c.bf16 %v3092, %v3091
        %v3150 = vpack.c.bf16 %v3094, %v3093
        %v3151 = vpack.c.bf16 %v3096, %v3095
        %v3152 = vpack.c.bf16 %v3098, %v3097
        %v3153 = vpack.c.bf16 %v3100, %v3099
        %v3154 = vpack.c.bf16 %v3102, %v3101
        %v3155 = vpack.c.bf16 %v3104, %v3103
        %v3156 = vpack.c.bf16 %v3106, %v3105
        %v3157 = vpack.c.bf16 %v3108, %v3107
        %v3158 = vpack.c.bf16 %v3110, %v3109
        %v3159 = vpack.c.bf16 %v3112, %v3111
        %v3160 = vpack.c.bf16 %v3114, %v3113
        %v3161 = vpack.c.bf16 %v3116, %v3115
        %v3162 = vpack.c.bf16 %v3118, %v3117
        %v3163 = vpack.c.bf16 %v3120, %v3119
        %v3164 = vpack.c.bf16 %v3122, %v3121
        %v3165 = vpack.c.bf16 %v3124, %v3123
        %v3166 = vpack.c.bf16 %v3126, %v3125
        %v3167 = vpack.c.bf16 %v3128, %v3127
        %v3168 = vpack.c.bf16 %v3130, %v3129
        %v3169 = vpack.c.bf16 %v3132, %v3131
        %v3170 = vpack.c.bf16 %v3134, %v3133
        %v3171 = vpack.c.bf16 %v3136, %v3135
        %v3172 = vpack.c.bf16 %v3138, %v3137
        %v3173 = vpack.c.bf16 %v3140, %v3139
        %v3174 = vpack.c.bf16 %v3142, %v3141
        %3175 = vmatprep.subr.bf16.mxu0 0
        %3176 = vmatpush1.bf16.msra.mxu0 %v1759
        %3177 = vmatprep.subr.bf16.mxu0 0
        %3178 = vmatpush1.bf16.msra.mxu0 %v1760
        %3179 = vmatprep.subr.bf16.mxu0 0
        %3180 = vmatpush1.bf16.msra.mxu0 %v1761
        %3181 = vmatprep.subr.bf16.mxu0 0
        %3182 = vmatpush1.bf16.msra.mxu0 %v1762
        %3183 = vmatprep.subr.bf16.mxu0 0
        %3184 = vmatpush1.bf16.msra.mxu0 %v1763
        %3185 = vmatprep.subr.bf16.mxu0 0
        %3186 = vmatpush1.bf16.msra.mxu0 %v1764
        %3187 = vmatprep.subr.bf16.mxu0 0
        %3188 = vmatpush1.bf16.msra.mxu0 %v1765
        %3189 = vmatprep.subr.bf16.mxu0 0
        %3190 = vmatpush1.bf16.msra.mxu0 %v1766
        %3191 = vmatprep.subr.bf16.mxu0 0
        %3192 = vmatpush1.bf16.msra.mxu0 0
        %3193 = vmatprep.subr.bf16.mxu0 0
        %3194 = vmatpush1.bf16.msra.mxu0 0
        %3195 = vmatprep.subr.bf16.mxu0 0
        %3196 = vmatpush1.bf16.msra.mxu0 0
        %3197 = vmatprep.subr.bf16.mxu0 0
        %3198 = vmatpush1.bf16.msra.mxu0 0
        %3199 = vmatprep.subr.bf16.mxu0 0
        %3200 = vmatpush1.bf16.msra.mxu0 0
        %3201 = vmatprep.subr.bf16.mxu0 0
        %3202 = vmatpush1.bf16.msra.mxu0 0
        %3203 = vmatprep.subr.bf16.mxu0 0
        %3204 = vmatpush1.bf16.msra.mxu0 0
        %3205 = vmatprep.subr.bf16.mxu0 0
        %3206 = vmatpush1.bf16.msra.mxu0 0
        %3207 = vmatprep.mubr.bf16.mxu0 0
        %3208 = vmatmul.mubr.bf16.gmra.mrb[0].mxu0 %v3143
        %v3209 = vpop.f32.mrb[0].mxu0
        %v3210 = vadd.f32 0.0, %v3209
        %v3211 = vpop.f32.mrb[0].mxu0
        %v3212 = vpop.f32.mrb[0].mxu0
        %v3213 = vadd.f32 0.0, %v3212
        %v3214 = vpop.f32.mrb[0].mxu0
        %3215 = vmatprep.mubr.bf16.mxu0 0
        %3216 = vmatmul.mubr.bf16.gmra.mrb[0].mxu0 %v3144
        %v3217 = vpop.f32.mrb[0].mxu0
        %v3218 = vadd.f32 0.0, %v3217
        %v3219 = vpop.f32.mrb[0].mxu0
        %v3220 = vpop.f32.mrb[0].mxu0
        %v3221 = vadd.f32 0.0, %v3220
        %v3222 = vpop.f32.mrb[0].mxu0
        %3223 = vmatprep.mubr.bf16.mxu0 0
        %3224 = vmatmul.mubr.bf16.gmra.mrb[0].mxu0 %v3145
        %v3225 = vpop.f32.mrb[0].mxu0
        %v3226 = vadd.f32 0.0, %v3225
        %v3227 = vpop.f32.mrb[0].mxu0
        %v3228 = vpop.f32.mrb[0].mxu0
        %v3229 = vadd.f32 0.0, %v3228
        %v3230 = vpop.f32.mrb[0].mxu0
        %3231 = vmatprep.mubr.bf16.mxu0 0
        %3232 = vmatmul.mubr.bf16.gmra.mrb[0].mxu0 %v3146
        %v3233 = vpop.f32.mrb[0].mxu0
        %v3234 = vadd.f32 0.0, %v3233
        %v3235 = vpop.f32.mrb[0].mxu0
        %v3236 = vpop.f32.mrb[0].mxu0
        %v3237 = vadd.f32 0.0, %v3236
        %v3238 = vpop.f32.mrb[0].mxu0
        %3239 = vmatprep.mubr.bf16.mxu0 0
        %3240 = vmatmul.mubr.bf16.gmra.mrb[0].mxu0 %v3147
        %v3241 = vpop.f32.mrb[0].mxu0
        %v3242 = vadd.f32 0.0, %v3241
        %v3243 = vpop.f32.mrb[0].mxu0
        %v3244 = vpop.f32.mrb[0].mxu0
        %v3245 = vadd.f32 0.0, %v3244
        %v3246 = vpop.f32.mrb[0].mxu0
        %3247 = vmatprep.mubr.bf16.mxu0 0
        %3248 = vmatmul.mubr.bf16.gmra.mrb[0].mxu0 %v3148
        %v3249 = vpop.f32.mrb[0].mxu0
        %v3250 = vadd.f32 0.0, %v3249
        %v3251 = vpop.f32.mrb[0].mxu0
        %v3252 = vpop.f32.mrb[0].mxu0
        %v3253 = vadd.f32 0.0, %v3252
        %v3254 = vpop.f32.mrb[0].mxu0
        %3255 = vmatprep.mubr.bf16.mxu0 0
        %3256 = vmatmul.mubr.bf16.gmra.mrb[0].mxu0 %v3149
        %v3257 = vpop.f32.mrb[0].mxu0
        %v3258 = vadd.f32 0.0, %v3257
        %v3259 = vpop.f32.mrb[0].mxu0
        %v3260 = vpop.f32.mrb[0].mxu0
        %v3261 = vadd.f32 0.0, %v3260
        %v3262 = vpop.f32.mrb[0].mxu0
        %3263 = vmatprep.mubr.bf16.mxu0 0
        %3264 = vmatmul.mubr.bf16.gmra.mrb[0].mxu0 %v3150
        %v3265 = vpop.f32.mrb[0].mxu0
        %v3266 = vadd.f32 0.0, %v3265
        %v3267 = vpop.f32.mrb[0].mxu0
        %v3268 = vpop.f32.mrb[0].mxu0
        %v3269 = vadd.f32 0.0, %v3268
        %v3270 = vpop.f32.mrb[0].mxu0
        %3271 = vdwg.mxu0
        %3272 = vmatprep.subr.bf16.mxu0 0
        %3273 = vmatpush1.bf16.msra.mxu0 %v1767
        %3274 = vmatprep.subr.bf16.mxu0 0
        %3275 = vmatpush1.bf16.msra.mxu0 %v1768
        %3276 = vmatprep.subr.bf16.mxu0 0
        %3277 = vmatpush1.bf16.msra.mxu0 %v1769
        %3278 = vmatprep.subr.bf16.mxu0 0
        %3279 = vmatpush1.bf16.msra.mxu0 %v1770
        %3280 = vmatprep.subr.bf16.mxu0 0
        %3281 = vmatpush1.bf16.msra.mxu0 %v1771
        %3282 = vmatprep.subr.bf16.mxu0 0
        %3283 = vmatpush1.bf16.msra.mxu0 %v1772
        %3284 = vmatprep.subr.bf16.mxu0 0
        %3285 = vmatpush1.bf16.msra.mxu0 %v1773
        %3286 = vmatprep.subr.bf16.mxu0 0
        %3287 = vmatpush1.bf16.msra.mxu0 %v1774
        %3288 = vmatprep.subr.bf16.mxu0 0
        %3289 = vmatpush1.bf16.msra.mxu0 0
        %3290 = vmatprep.subr.bf16.mxu0 0
        %3291 = vmatpush1.bf16.msra.mxu0 0
        %3292 = vmatprep.subr.bf16.mxu0 0
        %3293 = vmatpush1.bf16.msra.mxu0 0
        %3294 = vmatprep.subr.bf16.mxu0 0
        %3295 = vmatpush1.bf16.msra.mxu0 0
        %3296 = vmatprep.subr.bf16.mxu0 0
        %3297 = vmatpush1.bf16.msra.mxu0 0
        %3298 = vmatprep.subr.bf16.mxu0 0
        %3299 = vmatpush1.bf16.msra.mxu0 0
        %3300 = vmatprep.subr.bf16.mxu0 0
        %3301 = vmatpush1.bf16.msra.mxu0 0
        %3302 = vmatprep.subr.bf16.mxu0 0
        %3303 = vmatpush1.bf16.msra.mxu0 0
        %3304 = vmatprep.mubr.bf16.mxu0 0
        %3305 = vmatmul.mubr.bf16.gmra.mrb[0].mxu0 %v3151
        %v3306 = vpop.f32.mrb[0].mxu0
        %v3307 = vadd.f32 0.0, %v3306
        %v3308 = vpop.f32.mrb[0].mxu0
        %v3309 = vpop.f32.mrb[0].mxu0
        %v3310 = vadd.f32 0.0, %v3309
        %v3311 = vpop.f32.mrb[0].mxu0
        %3312 = vmatprep.mubr.bf16.mxu0 0
        %3313 = vmatmul.mubr.bf16.gmra.mrb[0].mxu0 %v3152
        %v3314 = vpop.f32.mrb[0].mxu0
        %v3315 = vadd.f32 0.0, %v3314
        %v3316 = vpop.f32.mrb[0].mxu0
        %v3317 = vpop.f32.mrb[0].mxu0
        %v3318 = vadd.f32 0.0, %v3317
        %v3319 = vpop.f32.mrb[0].mxu0
        %3320 = vmatprep.mubr.bf16.mxu0 0
        %3321 = vmatmul.mubr.bf16.gmra.mrb[0].mxu0 %v3153
        %v3322 = vpop.f32.mrb[0].mxu0
        %v3323 = vadd.f32 0.0, %v3322
        %v3324 = vpop.f32.mrb[0].mxu0
        %v3325 = vpop.f32.mrb[0].mxu0
        %v3326 = vadd.f32 0.0, %v3325
        %v3327 = vpop.f32.mrb[0].mxu0
        %3328 = vmatprep.mubr.bf16.mxu0 0
        %3329 = vmatmul.mubr.bf16.gmra.mrb[0].mxu0 %v3154
        %v3330 = vpop.f32.mrb[0].mxu0
        %v3331 = vadd.f32 0.0, %v3330
        %v3332 = vpop.f32.mrb[0].mxu0
        %v3333 = vpop.f32.mrb[0].mxu0
        %v3334 = vadd.f32 0.0, %v3333
        %v3335 = vpop.f32.mrb[0].mxu0
        %3336 = vmatprep.mubr.bf16.mxu0 0
        %3337 = vmatmul.mubr.bf16.gmra.mrb[0].mxu0 %v3155
        %v3338 = vpop.f32.mrb[0].mxu0
        %v3339 = vadd.f32 0.0, %v3338
        %v3340 = vpop.f32.mrb[0].mxu0
        %v3341 = vpop.f32.mrb[0].mxu0
        %v3342 = vadd.f32 0.0, %v3341
        %v3343 = vpop.f32.mrb[0].mxu0
        %3344 = vmatprep.mubr.bf16.mxu0 0
        %3345 = vmatmul.mubr.bf16.gmra.mrb[0].mxu0 %v3156
        %v3346 = vpop.f32.mrb[0].mxu0
        %v3347 = vadd.f32 0.0, %v3346
        %v3348 = vpop.f32.mrb[0].mxu0
        %v3349 = vpop.f32.mrb[0].mxu0
        %v3350 = vadd.f32 0.0, %v3349
        %v3351 = vpop.f32.mrb[0].mxu0
        %3352 = vmatprep.mubr.bf16.mxu0 0
        %3353 = vmatmul.mubr.bf16.gmra.mrb[0].mxu0 %v3157
        %v3354 = vpop.f32.mrb[0].mxu0
        %v3355 = vadd.f32 0.0, %v3354
        %v3356 = vpop.f32.mrb[0].mxu0
        %v3357 = vpop.f32.mrb[0].mxu0
        %v3358 = vadd.f32 0.0, %v3357
        %v3359 = vpop.f32.mrb[0].mxu0
        %3360 = vmatprep.mubr.bf16.mxu0 0
        %3361 = vmatmul.mubr.bf16.gmra.mrb[0].mxu0 %v3158
        %v3362 = vpop.f32.mrb[0].mxu0
        %v3363 = vadd.f32 0.0, %v3362
        %v3364 = vpop.f32.mrb[0].mxu0
        %v3365 = vpop.f32.mrb[0].mxu0
        %v3366 = vadd.f32 0.0, %v3365
        %v3367 = vpop.f32.mrb[0].mxu0
        %3368 = vdwg.mxu0
        %3369 = vmatprep.subr.bf16.mxu0 0
        %3370 = vmatpush1.bf16.msra.mxu0 %v1775
        %3371 = vmatprep.subr.bf16.mxu0 0
        %3372 = vmatpush1.bf16.msra.mxu0 %v1776
        %3373 = vmatprep.subr.bf16.mxu0 0
        %3374 = vmatpush1.bf16.msra.mxu0 %v1777
        %3375 = vmatprep.subr.bf16.mxu0 0
        %3376 = vmatpush1.bf16.msra.mxu0 %v1778
        %3377 = vmatprep.subr.bf16.mxu0 0
        %3378 = vmatpush1.bf16.msra.mxu0 %v1779
        %3379 = vmatprep.subr.bf16.mxu0 0
        %3380 = vmatpush1.bf16.msra.mxu0 %v1780
        %3381 = vmatprep.subr.bf16.mxu0 0
        %3382 = vmatpush1.bf16.msra.mxu0 %v1781
        %3383 = vmatprep.subr.bf16.mxu0 0
        %3384 = vmatpush1.bf16.msra.mxu0 %v1782
        %3385 = vmatprep.subr.bf16.mxu0 0
        %3386 = vmatpush1.bf16.msra.mxu0 0
        %3387 = vmatprep.subr.bf16.mxu0 0
        %3388 = vmatpush1.bf16.msra.mxu0 0
        %3389 = vmatprep.subr.bf16.mxu0 0
        %3390 = vmatpush1.bf16.msra.mxu0 0
        %3391 = vmatprep.subr.bf16.mxu0 0
        %3392 = vmatpush1.bf16.msra.mxu0 0
        %3393 = vmatprep.subr.bf16.mxu0 0
        %3394 = vmatpush1.bf16.msra.mxu0 0
        %3395 = vmatprep.subr.bf16.mxu0 0
        %3396 = vmatpush1.bf16.msra.mxu0 0
        %3397 = vmatprep.subr.bf16.mxu0 0
        %3398 = vmatpush1.bf16.msra.mxu0 0
        %3399 = vmatprep.subr.bf16.mxu0 0
        %3400 = vmatpush1.bf16.msra.mxu0 0
        %3401 = vmatprep.mubr.bf16.mxu0 0
        %3402 = vmatmul.mubr.bf16.gmra.mrb[0].mxu0 %v3159
        %v3403 = vpop.f32.mrb[0].mxu0
        %v3404 = vadd.f32 0.0, %v3403
        %v3405 = vpop.f32.mrb[0].mxu0
        %v3406 = vpop.f32.mrb[0].mxu0
        %v3407 = vadd.f32 0.0, %v3406
        %v3408 = vpop.f32.mrb[0].mxu0
        %3409 = vmatprep.mubr.bf16.mxu0 0
        %3410 = vmatmul.mubr.bf16.gmra.mrb[0].mxu0 %v3160
        %v3411 = vpop.f32.mrb[0].mxu0
        %v3412 = vadd.f32 0.0, %v3411
        %v3413 = vpop.f32.mrb[0].mxu0
        %v3414 = vpop.f32.mrb[0].mxu0
        %v3415 = vadd.f32 0.0, %v3414
        %v3416 = vpop.f32.mrb[0].mxu0
        %3417 = vmatprep.mubr.bf16.mxu0 0
        %3418 = vmatmul.mubr.bf16.gmra.mrb[0].mxu0 %v3161
        %v3419 = vpop.f32.mrb[0].mxu0
        %v3420 = vadd.f32 0.0, %v3419
        %v3421 = vpop.f32.mrb[0].mxu0
        %v3422 = vpop.f32.mrb[0].mxu0
        %v3423 = vadd.f32 0.0, %v3422
        %v3424 = vpop.f32.mrb[0].mxu0
        %3425 = vmatprep.mubr.bf16.mxu0 0
        %3426 = vmatmul.mubr.bf16.gmra.mrb[0].mxu0 %v3162
        %v3427 = vpop.f32.mrb[0].mxu0
        %v3428 = vadd.f32 0.0, %v3427
        %v3429 = vpop.f32.mrb[0].mxu0
        %v3430 = vpop.f32.mrb[0].mxu0
        %v3431 = vadd.f32 0.0, %v3430
        %v3432 = vpop.f32.mrb[0].mxu0
        %3433 = vmatprep.mubr.bf16.mxu0 0
        %3434 = vmatmul.mubr.bf16.gmra.mrb[0].mxu0 %v3163
        %v3435 = vpop.f32.mrb[0].mxu0
        %v3436 = vadd.f32 0.0, %v3435
        %v3437 = vpop.f32.mrb[0].mxu0
        %v3438 = vpop.f32.mrb[0].mxu0
        %v3439 = vadd.f32 0.0, %v3438
        %v3440 = vpop.f32.mrb[0].mxu0
        %3441 = vmatprep.mubr.bf16.mxu0 0
        %3442 = vmatmul.mubr.bf16.gmra.mrb[0].mxu0 %v3164
        %v3443 = vpop.f32.mrb[0].mxu0
        %v3444 = vadd.f32 0.0, %v3443
        %v3445 = vpop.f32.mrb[0].mxu0
        %v3446 = vpop.f32.mrb[0].mxu0
        %v3447 = vadd.f32 0.0, %v3446
        %v3448 = vpop.f32.mrb[0].mxu0
        %3449 = vmatprep.mubr.bf16.mxu0 0
        %3450 = vmatmul.mubr.bf16.gmra.mrb[0].mxu0 %v3165
        %v3451 = vpop.f32.mrb[0].mxu0
        %v3452 = vadd.f32 0.0, %v3451
        %v3453 = vpop.f32.mrb[0].mxu0
        %v3454 = vpop.f32.mrb[0].mxu0
        %v3455 = vadd.f32 0.0, %v3454
        %v3456 = vpop.f32.mrb[0].mxu0
        %3457 = vmatprep.mubr.bf16.mxu0 0
        %3458 = vmatmul.mubr.bf16.gmra.mrb[0].mxu0 %v3166
        %v3459 = vpop.f32.mrb[0].mxu0
        %v3460 = vadd.f32 0.0, %v3459
        %v3461 = vpop.f32.mrb[0].mxu0
        %v3462 = vpop.f32.mrb[0].mxu0
        %v3463 = vadd.f32 0.0, %v3462
        %v3464 = vpop.f32.mrb[0].mxu0
        %3465 = vdwg.mxu0
        %3466 = vmatprep.subr.bf16.mxu0 0
        %3467 = vmatpush1.bf16.msra.mxu0 %v1783
        %3468 = vmatprep.subr.bf16.mxu0 0
        %3469 = vmatpush1.bf16.msra.mxu0 %v1784
        %3470 = vmatprep.subr.bf16.mxu0 0
        %3471 = vmatpush1.bf16.msra.mxu0 %v1785
        %3472 = vmatprep.subr.bf16.mxu0 0
        %3473 = vmatpush1.bf16.msra.mxu0 %v1786
        %3474 = vmatprep.subr.bf16.mxu0 0
        %3475 = vmatpush1.bf16.msra.mxu0 %v1787
        %3476 = vmatprep.subr.bf16.mxu0 0
        %3477 = vmatpush1.bf16.msra.mxu0 %v1788
        %3478 = vmatprep.subr.bf16.mxu0 0
        %3479 = vmatpush1.bf16.msra.mxu0 %v1789
        %3480 = vmatprep.subr.bf16.mxu0 0
        %3481 = vmatpush1.bf16.msra.mxu0 %v1790
        %3482 = vmatprep.subr.bf16.mxu0 0
        %3483 = vmatpush1.bf16.msra.mxu0 0
        %3484 = vmatprep.subr.bf16.mxu0 0
        %3485 = vmatpush1.bf16.msra.mxu0 0
        %3486 = vmatprep.subr.bf16.mxu0 0
        %3487 = vmatpush1.bf16.msra.mxu0 0
        %3488 = vmatprep.subr.bf16.mxu0 0
        %3489 = vmatpush1.bf16.msra.mxu0 0
        %3490 = vmatprep.subr.bf16.mxu0 0
        %3491 = vmatpush1.bf16.msra.mxu0 0
        %3492 = vmatprep.subr.bf16.mxu0 0
        %3493 = vmatpush1.bf16.msra.mxu0 0
        %3494 = vmatprep.subr.bf16.mxu0 0
        %3495 = vmatpush1.bf16.msra.mxu0 0
        %3496 = vmatprep.subr.bf16.mxu0 0
        %3497 = vmatpush1.bf16.msra.mxu0 0
        %3498 = vmatprep.mubr.bf16.mxu0 0
        %3499 = vmatmul.mubr.bf16.gmra.mrb[0].mxu0 %v3167
        %v3500 = vpop.f32.mrb[0].mxu0
        %v3501 = vadd.f32 0.0, %v3500
        %v3502 = vpop.f32.mrb[0].mxu0
        %v3503 = vpop.f32.mrb[0].mxu0
        %v3504 = vadd.f32 0.0, %v3503
        %v3505 = vpop.f32.mrb[0].mxu0
        %3506 = vmatprep.mubr.bf16.mxu0 0
        %3507 = vmatmul.mubr.bf16.gmra.mrb[0].mxu0 %v3168
        %v3508 = vpop.f32.mrb[0].mxu0
        %v3509 = vadd.f32 0.0, %v3508
        %v3510 = vpop.f32.mrb[0].mxu0
        %v3511 = vpop.f32.mrb[0].mxu0
        %v3512 = vadd.f32 0.0, %v3511
        %v3513 = vpop.f32.mrb[0].mxu0
        %3514 = vmatprep.mubr.bf16.mxu0 0
        %3515 = vmatmul.mubr.bf16.gmra.mrb[0].mxu0 %v3169
        %v3516 = vpop.f32.mrb[0].mxu0
        %v3517 = vadd.f32 0.0, %v3516
        %v3518 = vpop.f32.mrb[0].mxu0
        %v3519 = vpop.f32.mrb[0].mxu0
        %v3520 = vadd.f32 0.0, %v3519
        %v3521 = vpop.f32.mrb[0].mxu0
        %3522 = vmatprep.mubr.bf16.mxu0 0
        %3523 = vmatmul.mubr.bf16.gmra.mrb[0].mxu0 %v3170
        %v3524 = vpop.f32.mrb[0].mxu0
        %v3525 = vadd.f32 0.0, %v3524
        %v3526 = vpop.f32.mrb[0].mxu0
        %v3527 = vpop.f32.mrb[0].mxu0
        %v3528 = vadd.f32 0.0, %v3527
        %v3529 = vpop.f32.mrb[0].mxu0
        %3530 = vmatprep.mubr.bf16.mxu0 0
        %3531 = vmatmul.mubr.bf16.gmra.mrb[0].mxu0 %v3171
        %v3532 = vpop.f32.mrb[0].mxu0
        %v3533 = vadd.f32 0.0, %v3532
        %v3534 = vpop.f32.mrb[0].mxu0
        %v3535 = vpop.f32.mrb[0].mxu0
        %v3536 = vadd.f32 0.0, %v3535
        %v3537 = vpop.f32.mrb[0].mxu0
        %3538 = vmatprep.mubr.bf16.mxu0 0
        %3539 = vmatmul.mubr.bf16.gmra.mrb[0].mxu0 %v3172
        %v3540 = vpop.f32.mrb[0].mxu0
        %v3541 = vadd.f32 0.0, %v3540
        %v3542 = vpop.f32.mrb[0].mxu0
        %v3543 = vpop.f32.mrb[0].mxu0
        %v3544 = vadd.f32 0.0, %v3543
        %v3545 = vpop.f32.mrb[0].mxu0
        %3546 = vmatprep.mubr.bf16.mxu0 0
        %3547 = vmatmul.mubr.bf16.gmra.mrb[0].mxu0 %v3173
        %v3548 = vpop.f32.mrb[0].mxu0
        %v3549 = vadd.f32 0.0, %v3548
        %v3550 = vpop.f32.mrb[0].mxu0
        %v3551 = vpop.f32.mrb[0].mxu0
        %v3552 = vadd.f32 0.0, %v3551
        %v3553 = vpop.f32.mrb[0].mxu0
        %3554 = vmatprep.mubr.bf16.mxu0 0
        %3555 = vmatmul.mubr.bf16.gmra.mrb[0].mxu0 %v3174
        %v3556 = vpop.f32.mrb[0].mxu0
        %v3557 = vadd.f32 0.0, %v3556
        %v3558 = vpop.f32.mrb[0].mxu0
        %v3559 = vpop.f32.mrb[0].mxu0
        %v3560 = vadd.f32 0.0, %v3559
        %v3561 = vpop.f32.mrb[0].mxu0
        %3562 = vdwg.mxu0
        %3579 = vrot.lane.b32.xlu0 %v3307, 32
        %v3580 = vpop.permute.xlu0 %3579
        %3581 = vrot.lane.b32.xlu0 %v3310, 32
        %v3582 = vpop.permute.xlu0 %3581
        %3583 = vrot.lane.b32.xlu0 %v3315, 32
        %v3584 = vpop.permute.xlu0 %3583
        %3585 = vrot.lane.b32.xlu0 %v3318, 32
        %v3586 = vpop.permute.xlu0 %3585
        %3587 = vrot.lane.b32.xlu0 %v3323, 32
        %v3588 = vpop.permute.xlu0 %3587
        %3589 = vrot.lane.b32.xlu0 %v3326, 32
        %v3590 = vpop.permute.xlu0 %3589
        %3591 = vrot.lane.b32.xlu0 %v3331, 32
        %v3592 = vpop.permute.xlu0 %3591
        %3593 = vrot.lane.b32.xlu0 %v3334, 32
        %v3594 = vpop.permute.xlu0 %3593
        %3595 = vrot.lane.b32.xlu0 %v3339, 32
        %v3596 = vpop.permute.xlu0 %3595
        %3597 = vrot.lane.b32.xlu0 %v3342, 32
        %v3598 = vpop.permute.xlu0 %3597
        %3599 = vrot.lane.b32.xlu0 %v3347, 32
        %v3600 = vpop.permute.xlu0 %3599
        %3601 = vrot.lane.b32.xlu0 %v3350, 32
        %v3602 = vpop.permute.xlu0 %3601
        %3603 = vrot.lane.b32.xlu0 %v3355, 32
        %v3604 = vpop.permute.xlu0 %3603
        %3605 = vrot.lane.b32.xlu0 %v3358, 32
        %v3606 = vpop.permute.xlu0 %3605
        %3607 = vrot.lane.b32.xlu0 %v3363, 32
        %v3608 = vpop.permute.xlu0 %3607
        %3609 = vrot.lane.b32.xlu0 %v3366, 32
        %v3610 = vpop.permute.xlu0 %3609
        %3643 = vrot.lane.b32.xlu0 %v3404, 64
        %v3644 = vpop.permute.xlu0 %3643
        %3645 = vrot.lane.b32.xlu0 %v3407, 64
        %v3646 = vpop.permute.xlu0 %3645
        %3647 = vrot.lane.b32.xlu0 %v3412, 64
        %v3648 = vpop.permute.xlu0 %3647
        %3649 = vrot.lane.b32.xlu0 %v3415, 64
        %v3650 = vpop.permute.xlu0 %3649
        %3651 = vrot.lane.b32.xlu0 %v3420, 64
        %v3652 = vpop.permute.xlu0 %3651
        %3653 = vrot.lane.b32.xlu0 %v3423, 64
        %v3654 = vpop.permute.xlu0 %3653
        %3655 = vrot.lane.b32.xlu0 %v3428, 64
        %v3656 = vpop.permute.xlu0 %3655
        %3657 = vrot.lane.b32.xlu0 %v3431, 64
        %v3658 = vpop.permute.xlu0 %3657
        %3659 = vrot.lane.b32.xlu0 %v3436, 64
        %v3660 = vpop.permute.xlu0 %3659
        %3661 = vrot.lane.b32.xlu0 %v3439, 64
        %v3662 = vpop.permute.xlu0 %3661
        %3663 = vrot.lane.b32.xlu0 %v3444, 64
        %v3664 = vpop.permute.xlu0 %3663
        %3665 = vrot.lane.b32.xlu0 %v3447, 64
        %v3666 = vpop.permute.xlu0 %3665
        %3667 = vrot.lane.b32.xlu0 %v3452, 64
        %v3668 = vpop.permute.xlu0 %3667
        %3669 = vrot.lane.b32.xlu0 %v3455, 64
        %v3670 = vpop.permute.xlu0 %3669
        %3671 = vrot.lane.b32.xlu0 %v3460, 64
        %v3672 = vpop.permute.xlu0 %3671
        %3673 = vrot.lane.b32.xlu0 %v3463, 64
        %v3674 = vpop.permute.xlu0 %3673
        %3707 = vrot.lane.b32.xlu0 %v3501, 96
        %v3708 = vpop.permute.xlu0 %3707
        %3709 = vrot.lane.b32.xlu0 %v3504, 96
        %v3710 = vpop.permute.xlu0 %3709
        %3711 = vrot.lane.b32.xlu0 %v3509, 96
        %v3712 = vpop.permute.xlu0 %3711
        %3713 = vrot.lane.b32.xlu0 %v3512, 96
        %v3714 = vpop.permute.xlu0 %3713
        %3715 = vrot.lane.b32.xlu0 %v3517, 96
        %v3716 = vpop.permute.xlu0 %3715
        %3717 = vrot.lane.b32.xlu0 %v3520, 96
        %v3718 = vpop.permute.xlu0 %3717
        %3719 = vrot.lane.b32.xlu0 %v3525, 96
        %v3720 = vpop.permute.xlu0 %3719
        %3721 = vrot.lane.b32.xlu0 %v3528, 96
        %v3722 = vpop.permute.xlu0 %3721
        %3723 = vrot.lane.b32.xlu0 %v3533, 96
        %v3724 = vpop.permute.xlu0 %3723
        %3725 = vrot.lane.b32.xlu0 %v3536, 96
        %v3726 = vpop.permute.xlu0 %3725
        %3727 = vrot.lane.b32.xlu0 %v3541, 96
        %v3728 = vpop.permute.xlu0 %3727
        %3729 = vrot.lane.b32.xlu0 %v3544, 96
        %v3730 = vpop.permute.xlu0 %3729
        %3731 = vrot.lane.b32.xlu0 %v3549, 96
        %v3732 = vpop.permute.xlu0 %3731
        %3733 = vrot.lane.b32.xlu0 %v3552, 96
        %v3734 = vpop.permute.xlu0 %3733
        %3735 = vrot.lane.b32.xlu0 %v3557, 96
        %v3736 = vpop.permute.xlu0 %3735
        %3737 = vrot.lane.b32.xlu0 %v3560, 96
        %v3738 = vpop.permute.xlu0 %3737
        %v3755 = vsel %vm1791, %v3210, %v3580
        %v3756 = vsel %vm1791, %v3213, %v3582
        %v3757 = vsel %vm1791, %v3218, %v3584
        %v3758 = vsel %vm1791, %v3221, %v3586
        %v3759 = vsel %vm1791, %v3226, %v3588
        %v3760 = vsel %vm1791, %v3229, %v3590
        %v3761 = vsel %vm1791, %v3234, %v3592
        %v3762 = vsel %vm1791, %v3237, %v3594
        %v3763 = vsel %vm1791, %v3242, %v3596
        %v3764 = vsel %vm1791, %v3245, %v3598
        %v3765 = vsel %vm1791, %v3250, %v3600
        %v3766 = vsel %vm1791, %v3253, %v3602
        %v3767 = vsel %vm1791, %v3258, %v3604
        %v3768 = vsel %vm1791, %v3261, %v3606
        %v3769 = vsel %vm1791, %v3266, %v3608
        %v3770 = vsel %vm1791, %v3269, %v3610
        %vm3771 = vcmask 523264
        %v3772 = vsel %vm3771, %v3755, %v3644
        %v3773 = vsel %vm3771, %v3756, %v3646
        %v3774 = vsel %vm3771, %v3757, %v3648
        %v3775 = vsel %vm3771, %v3758, %v3650
        %v3776 = vsel %vm3771, %v3759, %v3652
        %v3777 = vsel %vm3771, %v3760, %v3654
        %v3778 = vsel %vm3771, %v3761, %v3656
        %v3779 = vsel %vm3771, %v3762, %v3658
        %v3780 = vsel %vm3771, %v3763, %v3660
        %v3781 = vsel %vm3771, %v3764, %v3662
        %v3782 = vsel %vm3771, %v3765, %v3664
        %v3783 = vsel %vm3771, %v3766, %v3666
        %v3784 = vsel %vm3771, %v3767, %v3668
        %v3785 = vsel %vm3771, %v3768, %v3670
        %v3786 = vsel %vm3771, %v3769, %v3672
        %v3787 = vsel %vm3771, %v3770, %v3674
        %vm3788 = vcmask 785408
        %v3789 = vsel %vm3788, %v3772, %v3708
        %v3790 = vsel %vm3788, %v3773, %v3710
        %v3791 = vsel %vm3788, %v3774, %v3712
        %v3792 = vsel %vm3788, %v3775, %v3714
        %v3793 = vsel %vm3788, %v3776, %v3716
        %v3794 = vsel %vm3788, %v3777, %v3718
        %v3795 = vsel %vm3788, %v3778, %v3720
        %v3796 = vsel %vm3788, %v3779, %v3722
        %v3797 = vsel %vm3788, %v3780, %v3724
        %v3798 = vsel %vm3788, %v3781, %v3726
        %v3799 = vsel %vm3788, %v3782, %v3728
        %v3800 = vsel %vm3788, %v3783, %v3730
        %v3801 = vsel %vm3788, %v3784, %v3732
        %v3802 = vsel %vm3788, %v3785, %v3734
        %v3803 = vsel %vm3788, %v3786, %v3736
        %v3804 = vsel %vm3788, %v3787, %v3738
        %v3805 = vpack.c.bf16 %v3790, %v3789
        %v3806 = vpack.c.bf16 %v3792, %v3791
        %v3807 = vpack.c.bf16 %v3794, %v3793
        %v3808 = vpack.c.bf16 %v3796, %v3795
        %v3809 = vpack.c.bf16 %v3798, %v3797
        %v3810 = vpack.c.bf16 %v3800, %v3799
        %v3811 = vpack.c.bf16 %v3802, %v3801
        %v3812 = vpack.c.bf16 %v3804, %v3803
        %v3813 = vld [vmem:[#allocation10] sm:$0xf]
        %v3814 = vld [vmem:[#allocation10 + $0x4] sm:$0xf]
        %v3815 = vld [vmem:[#allocation10 + $0x8] sm:$0xf]
        %v3816 = vld [vmem:[#allocation10 + $0xc] sm:$0xf]
        %v3817 = vld [vmem:[#allocation10 + $0x10] sm:$0xf]
        %v3818 = vld [vmem:[#allocation10 + $0x14] sm:$0xf]
        %v3819 = vld [vmem:[#allocation10 + $0x18] sm:$0xf]
        %v3820 = vld [vmem:[#allocation10 + $0x1c] sm:$0xf]
        %v3821 = vld [vmem:[#allocation10 + $0x20] sm:$0xf]
        %v3822 = vld [vmem:[#allocation10 + $0x24] sm:$0xf]
        %v3823 = vld [vmem:[#allocation10 + $0x28] sm:$0xf]
        %v3824 = vld [vmem:[#allocation10 + $0x2c] sm:$0xf]
        %v3825 = vld [vmem:[#allocation10 + $0x30] sm:$0xf]
        %v3826 = vld [vmem:[#allocation10 + $0x34] sm:$0xf]
        %v3827 = vld [vmem:[#allocation10 + $0x38] sm:$0xf]
        %v3828 = vld [vmem:[#allocation10 + $0x3c] sm:$0xf]
        %v3829 = vld [vmem:[%s10] sm:$0x1]
        %v3831 = vlaneseq
        %v3832 = vshrl.u32 %v3831, 7
        %v3833 = vsub.s32 0, %v3832
        %v3834 = vrot.slane %v3829, %v3833
        %v3852 = vunpack.c.l.b16 %v3813
        %v3853 = vunpack.c.l.b16 %v3814
        %v3854 = vunpack.c.l.b16 %v3815
        %v3855 = vunpack.c.l.b16 %v3816
        %v3856 = vunpack.c.l.b16 %v3817
        %v3857 = vunpack.c.l.b16 %v3818
        %v3858 = vunpack.c.l.b16 %v3819
        %v3859 = vunpack.c.l.b16 %v3820
        %v3860 = vunpack.c.l.b16 %v3821
        %v3861 = vunpack.c.l.b16 %v3822
        %v3862 = vunpack.c.l.b16 %v3823
        %v3863 = vunpack.c.l.b16 %v3824
        %v3864 = vunpack.c.l.b16 %v3825
        %v3865 = vunpack.c.l.b16 %v3826
        %v3866 = vunpack.c.l.b16 %v3827
        %v3867 = vunpack.c.l.b16 %v3828
        %v3868 = vpack.c.b16 %v3853, %v3852
        %v3869 = vpack.c.b16 %v3855, %v3854
        %v3870 = vpack.c.b16 %v3857, %v3856
        %v3871 = vpack.c.b16 %v3859, %v3858
        %v3872 = vpack.c.b16 %v3861, %v3860
        %v3873 = vpack.c.b16 %v3863, %v3862
        %v3874 = vpack.c.b16 %v3865, %v3864
        %v3875 = vpack.c.b16 %v3867, %v3866
        %3884 = vmatprep.subr.bf16.mxu0 0
        %3885 = vmatpush1.bf16.msra.mxu0 %v3868
        %3886 = vmatprep.subr.bf16.mxu0 0
        %3887 = vmatpush1.bf16.msra.mxu0 %v3869
        %3888 = vmatprep.subr.bf16.mxu0 0
        %3889 = vmatpush1.bf16.msra.mxu0 %v3870
        %3890 = vmatprep.subr.bf16.mxu0 0
        %3891 = vmatpush1.bf16.msra.mxu0 %v3871
        %3892 = vmatprep.subr.bf16.mxu0 0
        %3893 = vmatpush1.bf16.msra.mxu0 %v3872
        %3894 = vmatprep.subr.bf16.mxu0 0
        %3895 = vmatpush1.bf16.msra.mxu0 %v3873
        %3896 = vmatprep.subr.bf16.mxu0 0
        %3897 = vmatpush1.bf16.msra.mxu0 %v3874
        %3898 = vmatprep.subr.bf16.mxu0 0
        %3899 = vmatpush1.bf16.msra.mxu0 %v3875
        %3900 = vmatprep.subr.bf16.mxu0 0
        %3901 = vmatpush1.bf16.msra.mxu0 0
        %3902 = vmatprep.subr.bf16.mxu0 0
        %3903 = vmatpush1.bf16.msra.mxu0 0
        %3904 = vmatprep.subr.bf16.mxu0 0
        %3905 = vmatpush1.bf16.msra.mxu0 0
        %3906 = vmatprep.subr.bf16.mxu0 0
        %3907 = vmatpush1.bf16.msra.mxu0 0
        %3908 = vmatprep.subr.bf16.mxu0 0
        %3909 = vmatpush1.bf16.msra.mxu0 0
        %3910 = vmatprep.subr.bf16.mxu0 0
        %3911 = vmatpush1.bf16.msra.mxu0 0
        %3912 = vmatprep.subr.bf16.mxu0 0
        %3913 = vmatpush1.bf16.msra.mxu0 0
        %3914 = vmatprep.subr.bf16.mxu0 0
        %3915 = vmatpush1.bf16.msra.mxu0 0
        %3916 = vmatprep.mubr.bf16.mxu0 0
        %3917 = vmatmul.mubr.bf16.gmra.mrb[0].mxu0 %v3805
        %v3918 = vpop.f32.mrb[0].mxu0
        %v3919 = vadd.f32 %v3834, %v3918
        %v3920 = vpop.f32.mrb[0].mxu0
        %v3921 = vpop.f32.mrb[0].mxu0
        %v3922 = vadd.f32 %v3834, %v3921
        %v3923 = vpop.f32.mrb[0].mxu0
        %3924 = vmatprep.mubr.bf16.mxu0 0
        %3925 = vmatmul.mubr.bf16.gmra.mrb[0].mxu0 %v3806
        %v3926 = vpop.f32.mrb[0].mxu0
        %v3927 = vadd.f32 %v3834, %v3926
        %v3928 = vpop.f32.mrb[0].mxu0
        %v3929 = vpop.f32.mrb[0].mxu0
        %v3930 = vadd.f32 %v3834, %v3929
        %v3931 = vpop.f32.mrb[0].mxu0
        %3932 = vmatprep.mubr.bf16.mxu0 0
        %3933 = vmatmul.mubr.bf16.gmra.mrb[0].mxu0 %v3807
        %v3934 = vpop.f32.mrb[0].mxu0
        %v3935 = vadd.f32 %v3834, %v3934
        %v3936 = vpop.f32.mrb[0].mxu0
        %v3937 = vpop.f32.mrb[0].mxu0
        %v3938 = vadd.f32 %v3834, %v3937
        %v3939 = vpop.f32.mrb[0].mxu0
        %3940 = vmatprep.mubr.bf16.mxu0 0
        %3941 = vmatmul.mubr.bf16.gmra.mrb[0].mxu0 %v3808
        %v3942 = vpop.f32.mrb[0].mxu0
        %v3943 = vadd.f32 %v3834, %v3942
        %v3944 = vpop.f32.mrb[0].mxu0
        %v3945 = vpop.f32.mrb[0].mxu0
        %v3946 = vadd.f32 %v3834, %v3945
        %v3947 = vpop.f32.mrb[0].mxu0
        %3948 = vmatprep.mubr.bf16.mxu0 0
        %3949 = vmatmul.mubr.bf16.gmra.mrb[0].mxu0 %v3809
        %v3950 = vpop.f32.mrb[0].mxu0
        %v3951 = vadd.f32 %v3834, %v3950
        %v3952 = vpop.f32.mrb[0].mxu0
        %v3953 = vpop.f32.mrb[0].mxu0
        %v3954 = vadd.f32 %v3834, %v3953
        %v3955 = vpop.f32.mrb[0].mxu0
        %3956 = vmatprep.mubr.bf16.mxu0 0
        %3957 = vmatmul.mubr.bf16.gmra.mrb[0].mxu0 %v3810
        %v3958 = vpop.f32.mrb[0].mxu0
        %v3959 = vadd.f32 %v3834, %v3958
        %v3960 = vpop.f32.mrb[0].mxu0
        %v3961 = vpop.f32.mrb[0].mxu0
        %v3962 = vadd.f32 %v3834, %v3961
        %v3963 = vpop.f32.mrb[0].mxu0
        %3964 = vmatprep.mubr.bf16.mxu0 0
        %3965 = vmatmul.mubr.bf16.gmra.mrb[0].mxu0 %v3811
        %v3966 = vpop.f32.mrb[0].mxu0
        %v3967 = vadd.f32 %v3834, %v3966
        %v3968 = vpop.f32.mrb[0].mxu0
        %v3969 = vpop.f32.mrb[0].mxu0
        %v3970 = vadd.f32 %v3834, %v3969
        %v3971 = vpop.f32.mrb[0].mxu0
        %3972 = vmatprep.mubr.bf16.mxu0 0
        %3973 = vmatmul.mubr.bf16.gmra.mrb[0].mxu0 %v3812
        %v3974 = vpop.f32.mrb[0].mxu0
        %v3975 = vadd.f32 %v3834, %v3974
        %v3976 = vpop.f32.mrb[0].mxu0
        %v3977 = vpop.f32.mrb[0].mxu0
        %v3978 = vadd.f32 %v3834, %v3977
        %v3979 = vpop.f32.mrb[0].mxu0
        %3980 = vdwg.mxu0
        %v3981 = vadd.f32 %v464, %v3919
        %v3982 = vadd.f32 %v465, %v3922
        %v3983 = vadd.f32 %v466, %v3927
        %v3984 = vadd.f32 %v467, %v3930
        %v3985 = vadd.f32 %v468, %v3935
        %v3986 = vadd.f32 %v469, %v3938
        %v3987 = vadd.f32 %v470, %v3943
        %v3988 = vadd.f32 %v471, %v3946
        %v3989 = vadd.f32 %v472, %v3951
        %v3990 = vadd.f32 %v473, %v3954
        %v3991 = vadd.f32 %v474, %v3959
        %v3992 = vadd.f32 %v475, %v3962
        %v3993 = vadd.f32 %v476, %v3967
        %v3994 = vadd.f32 %v477, %v3970
        %v3995 = vadd.f32 %v478, %v3975
        %v3996 = vadd.f32 %v479, %v3978
        %3997 = vst [vmem:[%s462] sm:$0xff] %v3981
        %3998 = vst [vmem:[%s462 + $0x8] sm:$0xff] %v3982
        %3999 = vst [vmem:[%s462 + $0x10] sm:$0xff] %v3983
        %4000 = vst [vmem:[%s462 + $0x18] sm:$0xff] %v3984
        %4001 = vst [vmem:[%s462 + $0x20] sm:$0xff] %v3985
        %4002 = vst [vmem:[%s462 + $0x28] sm:$0xff] %v3986
        %4003 = vst [vmem:[%s462 + $0x30] sm:$0xff] %v3987
        %4004 = vst [vmem:[%s462 + $0x38] sm:$0xff] %v3988
        %4005 = vst [vmem:[%s462 + $0x40] sm:$0xff] %v3989
        %4006 = vst [vmem:[%s462 + $0x48] sm:$0xff] %v3990
        %4007 = vst [vmem:[%s462 + $0x50] sm:$0xff] %v3991
        %4008 = vst [vmem:[%s462 + $0x58] sm:$0xff] %v3992
        %4009 = vst [vmem:[%s462 + $0x60] sm:$0xff] %v3993
        %4010 = vst [vmem:[%s462 + $0x68] sm:$0xff] %v3994
        %4011 = vst [vmem:[%s462 + $0x70] sm:$0xff] %v3995
        %4012 = vst [vmem:[%s462 + $0x78] sm:$0xff] %v3996
        %s4013 = sand.u32 %s274, 1
        %s4014 = scalar_lea.sflag [#allocation4], %s4013
        %s4015 = sand.u32 %s274, 1
        %s4016 = smul.addr %s4015, 128
        %s4017 = scalar_lea.vmem [#allocation11], %s4016
        // Predicated region
        $region85: #{tpu_custom_call.1} parent=63 // pred_check
          %p4018 = pneg %p284
        $region86: #{tpu_custom_call.1} parent=63 // pred_check_branch
          %4020 = sbr.rel (%p4018) target = $region88
        $region87: #{tpu_custom_call.1} parent=63 // pred_region
          %s4022 = ssub.s32 2048, 2048
          %4023 = vsyncadd %s4014, %s4022
          %s4024 = smul.addr %s30, 16
          %s4025 = smul.addr %s4024, 128
          %s4026 = scalar_lea.hbm %s11, %s4025
          %s4027 = sshll.u32 %s4017, 4
          %s4028 = int_to_ptr.vmem [resolvable:$true] %s4027
          %4033 = dma.vmem_to_hbm [thread:$0]  %s4028, 2048, %s4026, %s4014, 128, 128, 8
        $region88: #{tpu_custom_call.1} parent=63 // pred_fallthru
          _
      $region64: #{tpu_custom_call.1} parent=5 // pred_fallthru
        _
      %p4034 = scmp.le.s32.totalorder 2, %s25
      // Predicated region
      $region89: #{tpu_custom_call.1} parent=5 // pred_check
        %p4035 = pneg %p4034
      $region90: #{tpu_custom_call.1} parent=5 // pred_check_branch
        %4037 = sbr.rel (%p4035) target = $region92
      $region91: #{tpu_custom_call.1} parent=5 // pred_region
        %s4038 = ssub.s32 %s25, 2
        // Predicated region
        $region93: #{tpu_custom_call.1} parent=91 // pred_check
          %p4039 = pneg %p290
        $region94: #{tpu_custom_call.1} parent=91 // pred_check_branch
          %4041 = sbr.rel (%p4039) target = $region96
        $region95: #{tpu_custom_call.1} parent=91 // pred_region
          %s4042 = sand.u32 %s275, 1
          %s4043 = scalar_lea.sflag [#allocation4], %s4042
          %s4044 = sand.u32 %s275, 1
          %s4045 = smul.addr %s4044, 128
          %s4046 = scalar_lea.vmem [#allocation11], %s4045
          %4047 = dma.done %s4043, 2048
        $region96: #{tpu_custom_call.1} parent=91 // pred_fallthru
          _
      $region92: #{tpu_custom_call.1} parent=5 // pred_fallthru
        _
    $region6: #{tpu_custom_call.1} parent=1 // loop_footer
      %s29 = sadd.s32 1, %s25
    $region7: #{tpu_custom_call.1} parent=1 // loop_footer_branch
      %24 = sbr.rel target = $region3
    $region8: #{tpu_custom_call.1} parent=1 // loop_exit
      _
    %4048 = vsyncpa [#allocation3], 1
    %s4049 = scalar_lea.sflag [#allocation3], 1
    %4050 = vsyncpa %s4049, 1
    %4051 = vsyncpa [#allocation6], 1
    %4052 = vsyncpa [#allocation9], 1
    %4053 = vsyncpa [#allocation4], 1
    %s4054 = scalar_lea.sflag [#allocation4], 1
    %4055 = vsyncpa %s4054, 1

</llo_original>
